<compile_context>
chip_gen: v7x
topology: tpu7x:2x2x1
jax: 0.10.0
libtpu: 0.0.40
codegen_flags: <defaults>
</compile_context>

<pallas_src>
import functools
import math

import jax
import jax.numpy as jnp
from jax import lax
from jax.experimental import pallas as pl
from jax.experimental.pallas import tpu as pltpu


def _round_up(n, m):
    return ((n + m - 1) // m) * m


def _largest_divisor_leq(n, cap):
    d = max(1, min(n, cap))
    while n % d:
        d -= 1
    return d


# ----------------------------------------------------------------------------- kernel


def _lstm_net_kernel(x_ref, w_ih0_ref, b0_ref, w_ih_r_ref, b_r_ref,
                     w_hh_ref, w_fc_ref, b_fc_ref, out_ref,
                     hseq_scr, gx_scr, h_scr, c_scr, *, num_layers):
    """Fused multi-layer LSTM forward + FC, chunked over time.

    x_ref:      (Tc, Bp, Ip) f32     time-major, zero-padded input chunk
    w_ih0_ref:  (Ip, 4*Hp)   bf16    layer-0 input weights (transposed, gate-padded)
    b0_ref:     (1, 4*Hp)    f32     layer-0 bias (b_ih + b_hh)
    w_ih_r_ref: (max(L-1,1), Hp, 4*Hp) bf16
    b_r_ref:    (max(L-1,1), 1, 4*Hp)  f32
    w_hh_ref:   (L, Hp, 4*Hp) bf16
    w_fc_ref:   (Hp, Op)      bf16
    b_fc_ref:   (1, Op)       f32
    out_ref:    (Bp, Op)      f32
    scratch: hseq (Tc,Bp,Hp) f32, gx (Tc,Bp,4Hp) f32, h (L,Bp,Hp) f32, c (L,Bp,Hp) f32
    """
    chunk = pl.program_id(0)
    Tc, Bp, Ip = x_ref.shape
    Hp = h_scr.shape[2]

    # h/c carried across T-chunks in VMEM scratch; zero once at the first chunk.
    @pl.when(chunk == 0)
    def _():
        h_scr[...] = jnp.zeros_like(h_scr)
        c_scr[...] = jnp.zeros_like(c_scr)

    unroll = min(Tc, 8)

    for layer in range(num_layers):  # static unroll over layers (L is small)
        # ---- Phase 1: hoisted input projection — one big bf16 MXU matmul per chunk ----
        if layer == 0:
            x_flat = x_ref[...].reshape(Tc * Bp, Ip).astype(jnp.bfloat16)
            w_in = w_ih0_ref[...]                       # (Ip, 4Hp) bf16
            bias = b0_ref[...]                          # (1, 4Hp) f32
        else:
            x_flat = hseq_scr[...].reshape(Tc * Bp, Hp).astype(jnp.bfloat16)
            w_in = w_ih_r_ref[layer - 1]                # (Hp, 4Hp) bf16, static index
            bias = b_r_ref[layer - 1]                   # (1, 4Hp) f32
        gx = jnp.dot(x_flat, w_in, preferred_element_type=jnp.float32) + bias
        gx_scr[...] = gx.reshape(Tc, Bp, 4 * Hp)

        last_layer = (layer + 1 == num_layers)

        # ---- Phase 2: serial recurrence — only h @ W_hh on the critical path ----
        # w_hh_ref[layer] is read inside step() on purpose: do NOT hoist the materialized
        # weight value out of the unrolled loop (it would pin ~32 vregs live -> spills).
        def step(t, carry):
            h_prev = h_scr[layer]                       # (Bp, Hp) f32
            gates = gx_scr[t] + jnp.dot(
                h_prev.astype(jnp.bfloat16), w_hh_ref[layer],
                preferred_element_type=jnp.float32)      # (Bp, 4Hp) f32
            # 128-aligned lane slices (each gate block is padded to Hp lanes).
            i_g = jax.nn.sigmoid(gates[:, 0 * Hp:1 * Hp])
            f_g = jax.nn.sigmoid(gates[:, 1 * Hp:2 * Hp])
            g_g = jnp.tanh(gates[:, 2 * Hp:3 * Hp])
            o_g = jax.nn.sigmoid(gates[:, 3 * Hp:4 * Hp])
            c_new = f_g * c_scr[layer] + i_g * g_g
            h_new = o_g * jnp.tanh(c_new)
            c_scr[layer] = c_new
            h_scr[layer] = h_new
            if not last_layer:                           # next layer needs the sequence
                hseq_scr[t] = h_new
            return carry

        lax.fori_loop(0, Tc, step, 0, unroll=unroll)

    # ---- Fused final FC on the last layer's h after the final chunk ----
    @pl.when(chunk == pl.num_programs(0) - 1)
    def _():
        out_ref[...] = (
            jnp.dot(h_scr[num_layers - 1].astype(jnp.bfloat16), w_fc_ref[...],
                    preferred_element_type=jnp.float32)
            + b_fc_ref[...]
        ).astype(out_ref.dtype)


# ----------------------------------------------------------------------------- wrapper


@functools.partial(jax.jit, static_argnames=("output_size", "time_chunk"))
def lstm_forward(packed, x_btf, *, output_size, time_chunk=None):
    """x_btf: (B, T, input_size) batch_first. Returns (B, output_size)."""
    B, T, I = x_btf.shape
    Ip = packed["w_ih0"].shape[0]
    Hp = packed["w_ih0"].shape[1] // 4
    Op = packed["w_fc"].shape[1]
    L = packed["w_hh"].shape[0]
    Bp = _round_up(max(B, 1), 8)

    # Time-chunk size: must divide T; keeps per-chunk scratch O(Tc).
    if time_chunk is None:
        time_chunk = _largest_divisor_leq(T, 64)
    Tc = int(time_chunk)
    assert T % Tc == 0, "time_chunk must divide the sequence length"
    num_chunks = T // Tc

    # TODO(synk): for large x, fold this transpose+pad into the per-chunk DMA instead of a
    # separate full HBM pass.
    x = jnp.transpose(x_btf, (1, 0, 2)).astype(jnp.float32)          # (T, B, I)
    x = jnp.pad(x, ((0, 0), (0, Bp - B), (0, Ip - I)))               # (T, Bp, Ip)

    hseq_shape = (Tc, Bp, Hp) if L > 1 else (1, Bp, Hp)

    # Explicit VMEM budget (double-buffered inputs/outputs + scratches), generous headroom.
    weight_bytes = sum(int(packed[k].size) * packed[k].dtype.itemsize
                       for k in ("w_ih0", "b0", "w_ih_r", "b_r", "w_hh", "w_fc", "b_fc"))
    io_bytes = Tc * Bp * Ip * 4 + Bp * Op * 4
    scratch_bytes = (math.prod(hseq_shape) + Tc * Bp * 4 * Hp + 2 * L * Bp * Hp) * 4
    footprint = 2 * (weight_bytes + io_bytes) + scratch_bytes
    vmem_limit = int(min(max(3 * footprint, 16 << 20), 64 << 20))

    out_p = pl.pallas_call(
        functools.partial(_lstm_net_kernel, num_layers=L),
        out_shape=jax.ShapeDtypeStruct((Bp, Op), jnp.float32),
        grid_spec=pltpu.PrefetchScalarGridSpec(
            num_scalar_prefetch=0,
            grid=(num_chunks,),
            in_specs=[
                pl.BlockSpec((Tc, Bp, Ip), lambda c: (c, 0, 0)),
                pl.BlockSpec(packed["w_ih0"].shape, lambda c: (0, 0)),
                pl.BlockSpec(packed["b0"].shape, lambda c: (0, 0)),
                pl.BlockSpec(packed["w_ih_r"].shape, lambda c: (0, 0, 0)),
                pl.BlockSpec(packed["b_r"].shape, lambda c: (0, 0, 0)),
                pl.BlockSpec(packed["w_hh"].shape, lambda c: (0, 0, 0)),
                pl.BlockSpec(packed["w_fc"].shape, lambda c: (0, 0)),
                pl.BlockSpec(packed["b_fc"].shape, lambda c: (0, 0)),
            ],
            out_specs=pl.BlockSpec((Bp, Op), lambda c: (0, 0)),
            scratch_shapes=[
                pltpu.VMEM(hseq_shape, jnp.float32),           # inter-layer hidden chunk
                pltpu.VMEM((Tc, Bp, 4 * Hp), jnp.float32),     # hoisted input-projection gates
                pltpu.VMEM((L, Bp, Hp), jnp.float32),          # h state (per layer, carried)
                pltpu.VMEM((L, Bp, Hp), jnp.float32),          # c state (per layer, carried)
            ],
        ),
        compiler_params=pltpu.CompilerParams(
            dimension_semantics=("arbitrary",),
            vmem_limit_bytes=vmem_limit,
        ),
    )(x, packed["w_ih0"], packed["b0"], packed["w_ih_r"], packed["b_r"],
      packed["w_hh"], packed["w_fc"], packed["b_fc"])

    return out_p[:B, :output_size]


# ----------------------------------------------------------------------------- params


def init_lstm_params(key, input_size, hidden_size, num_layers, output_size):
    """Raw nn.LSTM/Linear-layout params, U[-1/sqrt(H), 1/sqrt(H)] like PyTorch defaults."""
    params = {"layers": []}
    bound = 1.0 / float(hidden_size) ** 0.5
    for l in range(num_layers):
        in_sz = input_size if l == 0 else hidden_size
        key, k1, k2, k3, k4 = jax.random.split(key, 5)
        params["layers"].append({
            "w_ih": jax.random.uniform(k1, (4 * hidden_size, in_sz), jnp.float32, -bound, bound),
            "w_hh": jax.random.uniform(k2, (4 * hidden_size, hidden_size), jnp.float32, -bound, bound),
            "b_ih": jax.random.uniform(k3, (4 * hidden_size,), jnp.float32, -bound, bound),
            "b_hh": jax.random.uniform(k4, (4 * hidden_size,), jnp.float32, -bound, bound),
        })
    key, kf1, kf2 = jax.random.split(key, 3)
    params["w_fc"] = jax.random.uniform(kf1, (output_size, hidden_size), jnp.float32, -bound, bound)
    params["b_fc"] = jax.random.uniform(kf2, (output_size,), jnp.float32, -bound, bound)
    return params


def pack_params(raw, input_size, hidden_size, num_layers, output_size):
    """Transpose, gate-pad (each of i/f/g/o to Hp lanes), cast weights to bf16, stack."""
    H = hidden_size
    Hp = _round_up(H, 128)
    Ip = _round_up(input_size, 128)
    Op = _round_up(output_size, 128)

    def pad_gate_cols(w_t):                     # (in, 4H) -> (in, 4Hp), gate g at g*Hp
        parts = [jnp.pad(w_t[:, g * H:(g + 1) * H], ((0, 0), (0, Hp - H))) for g in range(4)]
        return jnp.concatenate(parts, axis=1)

    def pad_gate_vec(b):                        # (4H,) -> (1, 4Hp)
        parts = [jnp.pad(b[g * H:(g + 1) * H], (0, Hp - H)) for g in range(4)]
        return jnp.concatenate(parts).reshape(1, -1)

    l0 = raw["layers"][0]
    w_ih0 = jnp.pad(pad_gate_cols(l0["w_ih"].T),
                    ((0, Ip - input_size), (0, 0))).astype(jnp.bfloat16)            # (Ip, 4Hp)
    b0 = pad_gate_vec(l0["b_ih"] + l0["b_hh"])                                      # (1, 4Hp) f32

    w_ih_rest, b_rest = [], []
    for l in range(1, num_layers):
        lr = raw["layers"][l]
        w_ih_rest.append(jnp.pad(pad_gate_cols(lr["w_ih"].T), ((0, Hp - H), (0, 0))))
        b_rest.append(pad_gate_vec(lr["b_ih"] + lr["b_hh"]))
    if not w_ih_rest:  # keep the kernel signature stable when num_layers == 1
        w_ih_rest.append(jnp.zeros((Hp, 4 * Hp), jnp.float32))
        b_rest.append(jnp.zeros((1, 4 * Hp), jnp.float32))
    w_ih_r = jnp.stack(w_ih_rest).astype(jnp.bfloat16)   # (max(L-1,1), Hp, 4Hp)
    b_r = jnp.stack(b_rest)                              # (max(L-1,1), 1, 4Hp) f32

    w_hh = jnp.stack([
        jnp.pad(pad_gate_cols(raw["layers"][l]["w_hh"].T), ((0, Hp - H), (0, 0)))
        for l in range(num_layers)
    ]).astype(jnp.bfloat16)                              # (L, Hp, 4Hp)

    w_fc = jnp.pad(raw["w_fc"].T,
                   ((0, Hp - H), (0, Op - output_size))).astype(jnp.bfloat16)       # (Hp, Op)
    b_fc = jnp.pad(raw["b_fc"], (0, Op - output_size)).reshape(1, -1)               # (1, Op) f32

    return {"w_ih0": w_ih0, "b0": b0, "w_ih_r": w_ih_r, "b_r": b_r,
            "w_hh": w_hh, "w_fc": w_fc, "b_fc": b_fc}


# ----------------------------------------------------------------------------- reference


def lstm_reference(raw, x_btf):
    """Pure-JAX f32 reference on the raw (unpadded) params."""
    x = jnp.transpose(x_btf, (1, 0, 2)).astype(jnp.float32)   # (T, B, I)
    T, B, _ = x.shape
    h_seq = x
    for layer in raw["layers"]:
        H = layer["w_hh"].shape[1]
        w_ih_t, w_hh_t = layer["w_ih"].T, layer["w_hh"].T
        bias = (layer["b_ih"] + layer["b_hh"]).reshape(1, -1)
        h = jnp.zeros((B, H), jnp.float32)
        c = jnp.zeros((B, H), jnp.float32)
        outs = []
        for t in range(T):
            gates = h_seq[t] @ w_ih_t + h @ w_hh_t + bias
            i_g = jax.nn.sigmoid(gates[:, 0 * H:1 * H])
            f_g = jax.nn.sigmoid(gates[:, 1 * H:2 * H])
            g_g = jnp.tanh(gates[:, 2 * H:3 * H])
            o_g = jax.nn.sigmoid(gates[:, 3 * H:4 * H])
            c = f_g * c + i_g * g_g
            h = o_g * jnp.tanh(c)
            outs.append(h)
        h_seq = jnp.stack(outs, axis=0)
    return h_seq[-1] @ raw["w_fc"].T + raw["b_fc"].reshape(1, -1)


# ----------------------------------------------------------------------------- main


if __name__ == "__main__":
    batch, seq, input_size, hidden_size, num_layers, output_size = 2, 8, 16, 32, 2, 4

    key = jax.random.PRNGKey(0)
    key_x, key_p = jax.random.split(key)
    x = jax.random.normal(key_x, (batch, seq, input_size), jnp.float32)

    raw_params = init_lstm_params(key_p, input_size, hidden_size, num_layers, output_size)
    packed = pack_params(raw_params, input_size, hidden_size, num_layers, output_size)

    # time_chunk=4 -> grid=(2,): exercises the chunked-recurrence / carried-state path.
    out = lstm_forward(packed, x, output_size=output_size, time_chunk=4)
    out = jax.block_until_ready(out)

    ref = lstm_reference(raw_params, x)
    assert out.shape == (batch, output_size)
    max_err = float(jnp.max(jnp.abs(out - ref)))
    # bf16 MXU operands (f32 accumulation / f32 state) -> loosened tolerance vs f32 ref.
    assert max_err < 3e-2, f"mismatch vs reference: max abs err {max_err}"

    print("KERNEL_OK")
</pallas_src>

<mosaic_0001>
module attributes {stable_mosaic.version = 11 : i64} {
  func.func @_lstm_net_kernel(%arg0: i32, %arg1: memref<4x8x128xf32, #tpu.memory_space<vmem>>, %arg2: memref<128x512xbf16, #tpu.memory_space<vmem>>, %arg3: memref<1x512xf32, #tpu.memory_space<vmem>>, %arg4: memref<1x128x512xbf16, #tpu.memory_space<vmem>>, %arg5: memref<1x1x512xf32, #tpu.memory_space<vmem>>, %arg6: memref<2x128x512xbf16, #tpu.memory_space<vmem>>, %arg7: memref<128x128xbf16, #tpu.memory_space<vmem>>, %arg8: memref<1x128xf32, #tpu.memory_space<vmem>>, %arg9: memref<8x128xf32, #tpu.memory_space<vmem>>, %arg10: memref<4x8x128xf32, #tpu.memory_space<vmem>>, %arg11: memref<4x8x512xf32, #tpu.memory_space<vmem>>, %arg12: memref<2x8x128xf32, #tpu.memory_space<vmem>>, %arg13: memref<2x8x128xf32, #tpu.memory_space<vmem>>) attributes {dimension_semantics = [#tpu.dimension_semantics<arbitrary>], iteration_bounds = array<i64: 2>, scalar_prefetch = 0 : i64, scratch_operands = 4 : i64, tpu.core_type = #tpu.core_type<tc>, window_params = [{transform_indices = @transform_0, window_bounds = array<i64: 4, 8, 128>}, {pipeline_mode = #tpu.pipeline_mode<synchronous>, transform_indices = @transform_1, window_bounds = array<i64: 128, 512>}, {pipeline_mode = #tpu.pipeline_mode<synchronous>, transform_indices = @transform_2, window_bounds = array<i64: 1, 512>}, {pipeline_mode = #tpu.pipeline_mode<synchronous>, transform_indices = @transform_3, window_bounds = array<i64: 1, 128, 512>}, {pipeline_mode = #tpu.pipeline_mode<synchronous>, transform_indices = @transform_4, window_bounds = array<i64: 1, 1, 512>}, {pipeline_mode = #tpu.pipeline_mode<synchronous>, transform_indices = @transform_5, window_bounds = array<i64: 2, 128, 512>}, {pipeline_mode = #tpu.pipeline_mode<synchronous>, transform_indices = @transform_6, window_bounds = array<i64: 128, 128>}, {pipeline_mode = #tpu.pipeline_mode<synchronous>, transform_indices = @transform_7, window_bounds = array<i64: 1, 128>}, {pipeline_mode = #tpu.pipeline_mode<synchronous>, transform_indices = @transform_8, window_bounds = array<i64: 8, 128>}]} {
    %c0_i32 = arith.constant 0 : i32
    %0 = arith.cmpi eq, %arg0, %c0_i32 : i32
    %1 = arith.extui %0 : i1 to i32
    %c0_i32_0 = arith.constant 0 : i32
    %2 = arith.cmpi ne, %1, %c0_i32_0 : i32
    scf.if %2 {
      %cst_206 = arith.constant 0.000000e+00 : f32
      %388 = vector.broadcast %cst_206 : f32 to vector<2x8x128xf32>
      %c0_207 = arith.constant 0 : index
      %c0_208 = arith.constant 0 : index
      %c0_209 = arith.constant 0 : index
      %389 = vector.load %arg12[%c0_207, %c0_208, %c0_209] : memref<2x8x128xf32, #tpu.memory_space<vmem>>, vector<2x8x128xf32>
      tpu.vector_store %arg12[%c0_207, %c0_208, %c0_209], %388 {strides = array<i32>} : memref<2x8x128xf32, #tpu.memory_space<vmem>>, vector<2x8x128xf32>,
      %cst_210 = arith.constant 0.000000e+00 : f32
      %390 = vector.broadcast %cst_210 : f32 to vector<2x8x128xf32>
      %c0_211 = arith.constant 0 : index
      %c0_212 = arith.constant 0 : index
      %c0_213 = arith.constant 0 : index
      %391 = vector.load %arg13[%c0_211, %c0_212, %c0_213] : memref<2x8x128xf32, #tpu.memory_space<vmem>>, vector<2x8x128xf32>
      tpu.vector_store %arg13[%c0_211, %c0_212, %c0_213], %390 {strides = array<i32>} : memref<2x8x128xf32, #tpu.memory_space<vmem>>, vector<2x8x128xf32>,
    } else {
    }
    %c0 = arith.constant 0 : index
    %c0_1 = arith.constant 0 : index
    %c0_2 = arith.constant 0 : index
    %3 = vector.load %arg1[%c0, %c0_1, %c0_2] : memref<4x8x128xf32, #tpu.memory_space<vmem>>, vector<4x8x128xf32>
    %4 = vector.shape_cast %3 : vector<4x8x128xf32> to vector<32x128xf32>
    %5 = arith.truncf %4 : vector<32x128xf32> to vector<32x128xbf16>
    %c0_3 = arith.constant 0 : index
    %c0_4 = arith.constant 0 : index
    %6 = vector.load %arg2[%c0_3, %c0_4] : memref<128x512xbf16, #tpu.memory_space<vmem>>, vector<128x512xbf16>
    %c0_5 = arith.constant 0 : index
    %c0_6 = arith.constant 0 : index
    %7 = vector.load %arg3[%c0_5, %c0_6] : memref<1x512xf32, #tpu.memory_space<vmem>>, vector<1x512xf32>
    %cst = arith.constant dense<0.000000e+00> : vector<32x512xf32>
    %8 = tpu.matmul %5, %6, %cst {dimension_numbers = #tpu.dot_dimension_numbers<[1], [0], [0], [1], [0, 0, 1, 1], [], []>} : vector<32x128xbf16>, vector<128x512xbf16>, vector<32x512xf32> -> vector<32x512xf32>
    %9 = vector.broadcast %7 : vector<1x512xf32> to vector<32x512xf32>
    %10 = arith.addf %8, %9 : vector<32x512xf32>
    %11 = vector.shape_cast %10 : vector<32x512xf32> to vector<4x8x512xf32>
    %c0_7 = arith.constant 0 : index
    %c0_8 = arith.constant 0 : index
    %c0_9 = arith.constant 0 : index
    %12 = vector.load %arg11[%c0_7, %c0_8, %c0_9] : memref<4x8x512xf32, #tpu.memory_space<vmem>>, vector<4x8x512xf32>
    tpu.vector_store %arg11[%c0_7, %c0_8, %c0_9], %11 {strides = array<i32>} : memref<4x8x512xf32, #tpu.memory_space<vmem>>, vector<4x8x512xf32>,
    %c0_i32_10 = arith.constant 0 : i32
    %c0_11 = arith.constant 0 : index
    %c0_12 = arith.constant 0 : index
    %c0_13 = arith.constant 0 : index
    %13 = vector.load %arg12[%c0_11, %c0_12, %c0_13] : memref<2x8x128xf32, #tpu.memory_space<vmem>>, vector<1x8x128xf32>
    %14 = vector.shape_cast %13 : vector<1x8x128xf32> to vector<8x128xf32>
    %15 = arith.index_cast %c0_i32_10 : i32 to index
    %c0_14 = arith.constant 0 : index
    %c0_15 = arith.constant 0 : index
    %16 = vector.load %arg11[%15, %c0_14, %c0_15] : memref<4x8x512xf32, #tpu.memory_space<vmem>>, vector<1x8x512xf32>
    %17 = vector.shape_cast %16 : vector<1x8x512xf32> to vector<8x512xf32>
    %18 = arith.truncf %14 : vector<8x128xf32> to vector<8x128xbf16>
    %c0_16 = arith.constant 0 : index
    %c0_17 = arith.constant 0 : index
    %c0_18 = arith.constant 0 : index
    %19 = vector.load %arg6[%c0_16, %c0_17, %c0_18] : memref<2x128x512xbf16, #tpu.memory_space<vmem>>, vector<1x128x512xbf16>
    %20 = vector.shape_cast %19 : vector<1x128x512xbf16> to vector<128x512xbf16>
    %cst_19 = arith.constant dense<0.000000e+00> : vector<8x512xf32>
    %21 = tpu.matmul %18, %20, %cst_19 {dimension_numbers = #tpu.dot_dimension_numbers<[1], [0], [0], [1], [0, 0, 1, 1], [], []>} : vector<8x128xbf16>, vector<128x512xbf16>, vector<8x512xf32> -> vector<8x512xf32>
    %22 = arith.addf %17, %21 : vector<8x512xf32>
    %23 = vector.extract_strided_slice %22 {offsets = [0, 0], sizes = [8, 128], strides = [1, 1]} : vector<8x512xf32> to vector<8x128xf32>
    %24 = arith.negf %23 : vector<8x128xf32>
    %25 = math.exp %24 : vector<8x128xf32>
    %cst_20 = arith.constant 1.000000e+00 : f32
    %26 = vector.broadcast %cst_20 : f32 to vector<8x128xf32>
    %27 = arith.addf %26, %25 : vector<8x128xf32>
    %28 = arith.divf %26, %27 : vector<8x128xf32>
    %29 = vector.extract_strided_slice %22 {offsets = [0, 128], sizes = [8, 128], strides = [1, 1]} : vector<8x512xf32> to vector<8x128xf32>
    %30 = arith.negf %29 : vector<8x128xf32>
    %31 = math.exp %30 : vector<8x128xf32>
    %cst_21 = arith.constant 1.000000e+00 : f32
    %32 = vector.broadcast %cst_21 : f32 to vector<8x128xf32>
    %33 = arith.addf %32, %31 : vector<8x128xf32>
    %34 = arith.divf %32, %33 : vector<8x128xf32>
    %35 = vector.extract_strided_slice %22 {offsets = [0, 256], sizes = [8, 128], strides = [1, 1]} : vector<8x512xf32> to vector<8x128xf32>
    %36 = math.tanh %35 : vector<8x128xf32>
    %37 = vector.extract_strided_slice %22 {offsets = [0, 384], sizes = [8, 128], strides = [1, 1]} : vector<8x512xf32> to vector<8x128xf32>
    %38 = arith.negf %37 : vector<8x128xf32>
    %39 = math.exp %38 : vector<8x128xf32>
    %cst_22 = arith.constant 1.000000e+00 : f32
    %40 = vector.broadcast %cst_22 : f32 to vector<8x128xf32>
    %41 = arith.addf %40, %39 : vector<8x128xf32>
    %42 = arith.divf %40, %41 : vector<8x128xf32>
    %c0_23 = arith.constant 0 : index
    %c0_24 = arith.constant 0 : index
    %c0_25 = arith.constant 0 : index
    %43 = vector.load %arg13[%c0_23, %c0_24, %c0_25] : memref<2x8x128xf32, #tpu.memory_space<vmem>>, vector<1x8x128xf32>
    %44 = vector.shape_cast %43 : vector<1x8x128xf32> to vector<8x128xf32>
    %45 = arith.mulf %34, %44 : vector<8x128xf32>
    %46 = arith.mulf %28, %36 : vector<8x128xf32>
    %47 = arith.addf %45, %46 : vector<8x128xf32>
    %48 = math.tanh %47 : vector<8x128xf32>
    %49 = arith.mulf %42, %48 : vector<8x128xf32>
    %c0_26 = arith.constant 0 : index
    %c0_27 = arith.constant 0 : index
    %c0_28 = arith.constant 0 : index
    %50 = vector.load %arg13[%c0_26, %c0_27, %c0_28] : memref<2x8x128xf32, #tpu.memory_space<vmem>>, vector<1x8x128xf32>
    %51 = vector.shape_cast %50 : vector<1x8x128xf32> to vector<8x128xf32>
    %52 = vector.shape_cast %47 : vector<8x128xf32> to vector<1x8x128xf32>
    tpu.vector_store %arg13[%c0_26, %c0_27, %c0_28], %52 {strides = array<i32>} : memref<2x8x128xf32, #tpu.memory_space<vmem>>, vector<1x8x128xf32>,
    %c0_29 = arith.constant 0 : index
    %c0_30 = arith.constant 0 : index
    %c0_31 = arith.constant 0 : index
    %53 = vector.load %arg12[%c0_29, %c0_30, %c0_31] : memref<2x8x128xf32, #tpu.memory_space<vmem>>, vector<1x8x128xf32>
    %54 = vector.shape_cast %53 : vector<1x8x128xf32> to vector<8x128xf32>
    %55 = vector.shape_cast %49 : vector<8x128xf32> to vector<1x8x128xf32>
    tpu.vector_store %arg12[%c0_29, %c0_30, %c0_31], %55 {strides = array<i32>} : memref<2x8x128xf32, #tpu.memory_space<vmem>>, vector<1x8x128xf32>,
    %56 = arith.index_cast %c0_i32_10 : i32 to index
    %c0_32 = arith.constant 0 : index
    %c0_33 = arith.constant 0 : index
    %57 = vector.load %arg10[%56, %c0_32, %c0_33] : memref<4x8x128xf32, #tpu.memory_space<vmem>>, vector<1x8x128xf32>
    %58 = vector.shape_cast %57 : vector<1x8x128xf32> to vector<8x128xf32>
    %59 = vector.shape_cast %49 : vector<8x128xf32> to vector<1x8x128xf32>
    tpu.vector_store %arg10[%56, %c0_32, %c0_33], %59 {strides = array<i32>} : memref<4x8x128xf32, #tpu.memory_space<vmem>>, vector<1x8x128xf32>,
    %c1_i32 = arith.constant 1 : i32
    %c0_34 = arith.constant 0 : index
    %c0_35 = arith.constant 0 : index
    %c0_36 = arith.constant 0 : index
    %60 = vector.load %arg12[%c0_34, %c0_35, %c0_36] : memref<2x8x128xf32, #tpu.memory_space<vmem>>, vector<1x8x128xf32>
    %61 = vector.shape_cast %60 : vector<1x8x128xf32> to vector<8x128xf32>
    %62 = arith.index_cast %c1_i32 : i32 to index
    %c0_37 = arith.constant 0 : index
    %c0_38 = arith.constant 0 : index
    %63 = vector.load %arg11[%62, %c0_37, %c0_38] : memref<4x8x512xf32, #tpu.memory_space<vmem>>, vector<1x8x512xf32>
    %64 = vector.shape_cast %63 : vector<1x8x512xf32> to vector<8x512xf32>
    %65 = arith.truncf %61 : vector<8x128xf32> to vector<8x128xbf16>
    %c0_39 = arith.constant 0 : index
    %c0_40 = arith.constant 0 : index
    %c0_41 = arith.constant 0 : index
    %66 = vector.load %arg6[%c0_39, %c0_40, %c0_41] : memref<2x128x512xbf16, #tpu.memory_space<vmem>>, vector<1x128x512xbf16>
    %67 = vector.shape_cast %66 : vector<1x128x512xbf16> to vector<128x512xbf16>
    %cst_42 = arith.constant dense<0.000000e+00> : vector<8x512xf32>
    %68 = tpu.matmul %65, %67, %cst_42 {dimension_numbers = #tpu.dot_dimension_numbers<[1], [0], [0], [1], [0, 0, 1, 1], [], []>} : vector<8x128xbf16>, vector<128x512xbf16>, vector<8x512xf32> -> vector<8x512xf32>
    %69 = arith.addf %64, %68 : vector<8x512xf32>
    %70 = vector.extract_strided_slice %69 {offsets = [0, 0], sizes = [8, 128], strides = [1, 1]} : vector<8x512xf32> to vector<8x128xf32>
    %71 = arith.negf %70 : vector<8x128xf32>
    %72 = math.exp %71 : vector<8x128xf32>
    %cst_43 = arith.constant 1.000000e+00 : f32
    %73 = vector.broadcast %cst_43 : f32 to vector<8x128xf32>
    %74 = arith.addf %73, %72 : vector<8x128xf32>
    %75 = arith.divf %73, %74 : vector<8x128xf32>
    %76 = vector.extract_strided_slice %69 {offsets = [0, 128], sizes = [8, 128], strides = [1, 1]} : vector<8x512xf32> to vector<8x128xf32>
    %77 = arith.negf %76 : vector<8x128xf32>
    %78 = math.exp %77 : vector<8x128xf32>
    %cst_44 = arith.constant 1.000000e+00 : f32
    %79 = vector.broadcast %cst_44 : f32 to vector<8x128xf32>
    %80 = arith.addf %79, %78 : vector<8x128xf32>
    %81 = arith.divf %79, %80 : vector<8x128xf32>
    %82 = vector.extract_strided_slice %69 {offsets = [0, 256], sizes = [8, 128], strides = [1, 1]} : vector<8x512xf32> to vector<8x128xf32>
    %83 = math.tanh %82 : vector<8x128xf32>
    %84 = vector.extract_strided_slice %69 {offsets = [0, 384], sizes = [8, 128], strides = [1, 1]} : vector<8x512xf32> to vector<8x128xf32>
    %85 = arith.negf %84 : vector<8x128xf32>
    %86 = math.exp %85 : vector<8x128xf32>
    %cst_45 = arith.constant 1.000000e+00 : f32
    %87 = vector.broadcast %cst_45 : f32 to vector<8x128xf32>
    %88 = arith.addf %87, %86 : vector<8x128xf32>
    %89 = arith.divf %87, %88 : vector<8x128xf32>
    %c0_46 = arith.constant 0 : index
    %c0_47 = arith.constant 0 : index
    %c0_48 = arith.constant 0 : index
    %90 = vector.load %arg13[%c0_46, %c0_47, %c0_48] : memref<2x8x128xf32, #tpu.memory_space<vmem>>, vector<1x8x128xf32>
    %91 = vector.shape_cast %90 : vector<1x8x128xf32> to vector<8x128xf32>
    %92 = arith.mulf %81, %91 : vector<8x128xf32>
    %93 = arith.mulf %75, %83 : vector<8x128xf32>
    %94 = arith.addf %92, %93 : vector<8x128xf32>
    %95 = math.tanh %94 : vector<8x128xf32>
    %96 = arith.mulf %89, %95 : vector<8x128xf32>
    %c0_49 = arith.constant 0 : index
    %c0_50 = arith.constant 0 : index
    %c0_51 = arith.constant 0 : index
    %97 = vector.load %arg13[%c0_49, %c0_50, %c0_51] : memref<2x8x128xf32, #tpu.memory_space<vmem>>, vector<1x8x128xf32>
    %98 = vector.shape_cast %97 : vector<1x8x128xf32> to vector<8x128xf32>
    %99 = vector.shape_cast %94 : vector<8x128xf32> to vector<1x8x128xf32>
    tpu.vector_store %arg13[%c0_49, %c0_50, %c0_51], %99 {strides = array<i32>} : memref<2x8x128xf32, #tpu.memory_space<vmem>>, vector<1x8x128xf32>,
    %c0_52 = arith.constant 0 : index
    %c0_53 = arith.constant 0 : index
    %c0_54 = arith.constant 0 : index
    %100 = vector.load %arg12[%c0_52, %c0_53, %c0_54] : memref<2x8x128xf32, #tpu.memory_space<vmem>>, vector<1x8x128xf32>
    %101 = vector.shape_cast %100 : vector<1x8x128xf32> to vector<8x128xf32>
    %102 = vector.shape_cast %96 : vector<8x128xf32> to vector<1x8x128xf32>
    tpu.vector_store %arg12[%c0_52, %c0_53, %c0_54], %102 {strides = array<i32>} : memref<2x8x128xf32, #tpu.memory_space<vmem>>, vector<1x8x128xf32>,
    %103 = arith.index_cast %c1_i32 : i32 to index
    %c0_55 = arith.constant 0 : index
    %c0_56 = arith.constant 0 : index
    %104 = vector.load %arg10[%103, %c0_55, %c0_56] : memref<4x8x128xf32, #tpu.memory_space<vmem>>, vector<1x8x128xf32>
    %105 = vector.shape_cast %104 : vector<1x8x128xf32> to vector<8x128xf32>
    %106 = vector.shape_cast %96 : vector<8x128xf32> to vector<1x8x128xf32>
    tpu.vector_store %arg10[%103, %c0_55, %c0_56], %106 {strides = array<i32>} : memref<4x8x128xf32, #tpu.memory_space<vmem>>, vector<1x8x128xf32>,
    %c2_i32 = arith.constant 2 : i32
    %c0_57 = arith.constant 0 : index
    %c0_58 = arith.constant 0 : index
    %c0_59 = arith.constant 0 : index
    %107 = vector.load %arg12[%c0_57, %c0_58, %c0_59] : memref<2x8x128xf32, #tpu.memory_space<vmem>>, vector<1x8x128xf32>
    %108 = vector.shape_cast %107 : vector<1x8x128xf32> to vector<8x128xf32>
    %109 = arith.index_cast %c2_i32 : i32 to index
    %c0_60 = arith.constant 0 : index
    %c0_61 = arith.constant 0 : index
    %110 = vector.load %arg11[%109, %c0_60, %c0_61] : memref<4x8x512xf32, #tpu.memory_space<vmem>>, vector<1x8x512xf32>
    %111 = vector.shape_cast %110 : vector<1x8x512xf32> to vector<8x512xf32>
    %112 = arith.truncf %108 : vector<8x128xf32> to vector<8x128xbf16>
    %c0_62 = arith.constant 0 : index
    %c0_63 = arith.constant 0 : index
    %c0_64 = arith.constant 0 : index
    %113 = vector.load %arg6[%c0_62, %c0_63, %c0_64] : memref<2x128x512xbf16, #tpu.memory_space<vmem>>, vector<1x128x512xbf16>
    %114 = vector.shape_cast %113 : vector<1x128x512xbf16> to vector<128x512xbf16>
    %cst_65 = arith.constant dense<0.000000e+00> : vector<8x512xf32>
    %115 = tpu.matmul %112, %114, %cst_65 {dimension_numbers = #tpu.dot_dimension_numbers<[1], [0], [0], [1], [0, 0, 1, 1], [], []>} : vector<8x128xbf16>, vector<128x512xbf16>, vector<8x512xf32> -> vector<8x512xf32>
    %116 = arith.addf %111, %115 : vector<8x512xf32>
    %117 = vector.extract_strided_slice %116 {offsets = [0, 0], sizes = [8, 128], strides = [1, 1]} : vector<8x512xf32> to vector<8x128xf32>
    %118 = arith.negf %117 : vector<8x128xf32>
    %119 = math.exp %118 : vector<8x128xf32>
    %cst_66 = arith.constant 1.000000e+00 : f32
    %120 = vector.broadcast %cst_66 : f32 to vector<8x128xf32>
    %121 = arith.addf %120, %119 : vector<8x128xf32>
    %122 = arith.divf %120, %121 : vector<8x128xf32>
    %123 = vector.extract_strided_slice %116 {offsets = [0, 128], sizes = [8, 128], strides = [1, 1]} : vector<8x512xf32> to vector<8x128xf32>
    %124 = arith.negf %123 : vector<8x128xf32>
    %125 = math.exp %124 : vector<8x128xf32>
    %cst_67 = arith.constant 1.000000e+00 : f32
    %126 = vector.broadcast %cst_67 : f32 to vector<8x128xf32>
    %127 = arith.addf %126, %125 : vector<8x128xf32>
    %128 = arith.divf %126, %127 : vector<8x128xf32>
    %129 = vector.extract_strided_slice %116 {offsets = [0, 256], sizes = [8, 128], strides = [1, 1]} : vector<8x512xf32> to vector<8x128xf32>
    %130 = math.tanh %129 : vector<8x128xf32>
    %131 = vector.extract_strided_slice %116 {offsets = [0, 384], sizes = [8, 128], strides = [1, 1]} : vector<8x512xf32> to vector<8x128xf32>
    %132 = arith.negf %131 : vector<8x128xf32>
    %133 = math.exp %132 : vector<8x128xf32>
    %cst_68 = arith.constant 1.000000e+00 : f32
    %134 = vector.broadcast %cst_68 : f32 to vector<8x128xf32>
    %135 = arith.addf %134, %133 : vector<8x128xf32>
    %136 = arith.divf %134, %135 : vector<8x128xf32>
    %c0_69 = arith.constant 0 : index
    %c0_70 = arith.constant 0 : index
    %c0_71 = arith.constant 0 : index
    %137 = vector.load %arg13[%c0_69, %c0_70, %c0_71] : memref<2x8x128xf32, #tpu.memory_space<vmem>>, vector<1x8x128xf32>
    %138 = vector.shape_cast %137 : vector<1x8x128xf32> to vector<8x128xf32>
    %139 = arith.mulf %128, %138 : vector<8x128xf32>
    %140 = arith.mulf %122, %130 : vector<8x128xf32>
    %141 = arith.addf %139, %140 : vector<8x128xf32>
    %142 = math.tanh %141 : vector<8x128xf32>
    %143 = arith.mulf %136, %142 : vector<8x128xf32>
    %c0_72 = arith.constant 0 : index
    %c0_73 = arith.constant 0 : index
    %c0_74 = arith.constant 0 : index
    %144 = vector.load %arg13[%c0_72, %c0_73, %c0_74] : memref<2x8x128xf32, #tpu.memory_space<vmem>>, vector<1x8x128xf32>
    %145 = vector.shape_cast %144 : vector<1x8x128xf32> to vector<8x128xf32>
    %146 = vector.shape_cast %141 : vector<8x128xf32> to vector<1x8x128xf32>
    tpu.vector_store %arg13[%c0_72, %c0_73, %c0_74], %146 {strides = array<i32>} : memref<2x8x128xf32, #tpu.memory_space<vmem>>, vector<1x8x128xf32>,
    %c0_75 = arith.constant 0 : index
    %c0_76 = arith.constant 0 : index
    %c0_77 = arith.constant 0 : index
    %147 = vector.load %arg12[%c0_75, %c0_76, %c0_77] : memref<2x8x128xf32, #tpu.memory_space<vmem>>, vector<1x8x128xf32>
    %148 = vector.shape_cast %147 : vector<1x8x128xf32> to vector<8x128xf32>
    %149 = vector.shape_cast %143 : vector<8x128xf32> to vector<1x8x128xf32>
    tpu.vector_store %arg12[%c0_75, %c0_76, %c0_77], %149 {strides = array<i32>} : memref<2x8x128xf32, #tpu.memory_space<vmem>>, vector<1x8x128xf32>,
    %150 = arith.index_cast %c2_i32 : i32 to index
    %c0_78 = arith.constant 0 : index
    %c0_79 = arith.constant 0 : index
    %151 = vector.load %arg10[%150, %c0_78, %c0_79] : memref<4x8x128xf32, #tpu.memory_space<vmem>>, vector<1x8x128xf32>
    %152 = vector.shape_cast %151 : vector<1x8x128xf32> to vector<8x128xf32>
    %153 = vector.shape_cast %143 : vector<8x128xf32> to vector<1x8x128xf32>
    tpu.vector_store %arg10[%150, %c0_78, %c0_79], %153 {strides = array<i32>} : memref<4x8x128xf32, #tpu.memory_space<vmem>>, vector<1x8x128xf32>,
    %c3_i32 = arith.constant 3 : i32
    %c0_80 = arith.constant 0 : index
    %c0_81 = arith.constant 0 : index
    %c0_82 = arith.constant 0 : index
    %154 = vector.load %arg12[%c0_80, %c0_81, %c0_82] : memref<2x8x128xf32, #tpu.memory_space<vmem>>, vector<1x8x128xf32>
    %155 = vector.shape_cast %154 : vector<1x8x128xf32> to vector<8x128xf32>
    %156 = arith.index_cast %c3_i32 : i32 to index
    %c0_83 = arith.constant 0 : index
    %c0_84 = arith.constant 0 : index
    %157 = vector.load %arg11[%156, %c0_83, %c0_84] : memref<4x8x512xf32, #tpu.memory_space<vmem>>, vector<1x8x512xf32>
    %158 = vector.shape_cast %157 : vector<1x8x512xf32> to vector<8x512xf32>
    %159 = arith.truncf %155 : vector<8x128xf32> to vector<8x128xbf16>
    %c0_85 = arith.constant 0 : index
    %c0_86 = arith.constant 0 : index
    %c0_87 = arith.constant 0 : index
    %160 = vector.load %arg6[%c0_85, %c0_86, %c0_87] : memref<2x128x512xbf16, #tpu.memory_space<vmem>>, vector<1x128x512xbf16>
    %161 = vector.shape_cast %160 : vector<1x128x512xbf16> to vector<128x512xbf16>
    %cst_88 = arith.constant dense<0.000000e+00> : vector<8x512xf32>
    %162 = tpu.matmul %159, %161, %cst_88 {dimension_numbers = #tpu.dot_dimension_numbers<[1], [0], [0], [1], [0, 0, 1, 1], [], []>} : vector<8x128xbf16>, vector<128x512xbf16>, vector<8x512xf32> -> vector<8x512xf32>
    %163 = arith.addf %158, %162 : vector<8x512xf32>
    %164 = vector.extract_strided_slice %163 {offsets = [0, 0], sizes = [8, 128], strides = [1, 1]} : vector<8x512xf32> to vector<8x128xf32>
    %165 = arith.negf %164 : vector<8x128xf32>
    %166 = math.exp %165 : vector<8x128xf32>
    %cst_89 = arith.constant 1.000000e+00 : f32
    %167 = vector.broadcast %cst_89 : f32 to vector<8x128xf32>
    %168 = arith.addf %167, %166 : vector<8x128xf32>
    %169 = arith.divf %167, %168 : vector<8x128xf32>
    %170 = vector.extract_strided_slice %163 {offsets = [0, 128], sizes = [8, 128], strides = [1, 1]} : vector<8x512xf32> to vector<8x128xf32>
    %171 = arith.negf %170 : vector<8x128xf32>
    %172 = math.exp %171 : vector<8x128xf32>
    %cst_90 = arith.constant 1.000000e+00 : f32
    %173 = vector.broadcast %cst_90 : f32 to vector<8x128xf32>
    %174 = arith.addf %173, %172 : vector<8x128xf32>
    %175 = arith.divf %173, %174 : vector<8x128xf32>
    %176 = vector.extract_strided_slice %163 {offsets = [0, 256], sizes = [8, 128], strides = [1, 1]} : vector<8x512xf32> to vector<8x128xf32>
    %177 = math.tanh %176 : vector<8x128xf32>
    %178 = vector.extract_strided_slice %163 {offsets = [0, 384], sizes = [8, 128], strides = [1, 1]} : vector<8x512xf32> to vector<8x128xf32>
    %179 = arith.negf %178 : vector<8x128xf32>
    %180 = math.exp %179 : vector<8x128xf32>
    %cst_91 = arith.constant 1.000000e+00 : f32
    %181 = vector.broadcast %cst_91 : f32 to vector<8x128xf32>
    %182 = arith.addf %181, %180 : vector<8x128xf32>
    %183 = arith.divf %181, %182 : vector<8x128xf32>
    %c0_92 = arith.constant 0 : index
    %c0_93 = arith.constant 0 : index
    %c0_94 = arith.constant 0 : index
    %184 = vector.load %arg13[%c0_92, %c0_93, %c0_94] : memref<2x8x128xf32, #tpu.memory_space<vmem>>, vector<1x8x128xf32>
    %185 = vector.shape_cast %184 : vector<1x8x128xf32> to vector<8x128xf32>
    %186 = arith.mulf %175, %185 : vector<8x128xf32>
    %187 = arith.mulf %169, %177 : vector<8x128xf32>
    %188 = arith.addf %186, %187 : vector<8x128xf32>
    %189 = math.tanh %188 : vector<8x128xf32>
    %190 = arith.mulf %183, %189 : vector<8x128xf32>
    %c0_95 = arith.constant 0 : index
    %c0_96 = arith.constant 0 : index
    %c0_97 = arith.constant 0 : index
    %191 = vector.load %arg13[%c0_95, %c0_96, %c0_97] : memref<2x8x128xf32, #tpu.memory_space<vmem>>, vector<1x8x128xf32>
    %192 = vector.shape_cast %191 : vector<1x8x128xf32> to vector<8x128xf32>
    %193 = vector.shape_cast %188 : vector<8x128xf32> to vector<1x8x128xf32>
    tpu.vector_store %arg13[%c0_95, %c0_96, %c0_97], %193 {strides = array<i32>} : memref<2x8x128xf32, #tpu.memory_space<vmem>>, vector<1x8x128xf32>,
    %c0_98 = arith.constant 0 : index
    %c0_99 = arith.constant 0 : index
    %c0_100 = arith.constant 0 : index
    %194 = vector.load %arg12[%c0_98, %c0_99, %c0_100] : memref<2x8x128xf32, #tpu.memory_space<vmem>>, vector<1x8x128xf32>
    %195 = vector.shape_cast %194 : vector<1x8x128xf32> to vector<8x128xf32>
    %196 = vector.shape_cast %190 : vector<8x128xf32> to vector<1x8x128xf32>
    tpu.vector_store %arg12[%c0_98, %c0_99, %c0_100], %196 {strides = array<i32>} : memref<2x8x128xf32, #tpu.memory_space<vmem>>, vector<1x8x128xf32>,
    %197 = arith.index_cast %c3_i32 : i32 to index
    %c0_101 = arith.constant 0 : index
    %c0_102 = arith.constant 0 : index
    %198 = vector.load %arg10[%197, %c0_101, %c0_102] : memref<4x8x128xf32, #tpu.memory_space<vmem>>, vector<1x8x128xf32>
    %199 = vector.shape_cast %198 : vector<1x8x128xf32> to vector<8x128xf32>
    %200 = vector.shape_cast %190 : vector<8x128xf32> to vector<1x8x128xf32>
    tpu.vector_store %arg10[%197, %c0_101, %c0_102], %200 {strides = array<i32>} : memref<4x8x128xf32, #tpu.memory_space<vmem>>, vector<1x8x128xf32>,
    %c4_i32 = arith.constant 4 : i32
    %c0_103 = arith.constant 0 : index
    %c0_104 = arith.constant 0 : index
    %c0_105 = arith.constant 0 : index
    %201 = vector.load %arg10[%c0_103, %c0_104, %c0_105] : memref<4x8x128xf32, #tpu.memory_space<vmem>>, vector<4x8x128xf32>
    %202 = vector.shape_cast %201 : vector<4x8x128xf32> to vector<32x128xf32>
    %203 = arith.truncf %202 : vector<32x128xf32> to vector<32x128xbf16>
    %c0_106 = arith.constant 0 : index
    %c0_107 = arith.constant 0 : index
    %c0_108 = arith.constant 0 : index
    %204 = vector.load %arg4[%c0_106, %c0_107, %c0_108] : memref<1x128x512xbf16, #tpu.memory_space<vmem>>, vector<1x128x512xbf16>
    %205 = vector.shape_cast %204 : vector<1x128x512xbf16> to vector<128x512xbf16>
    %c0_109 = arith.constant 0 : index
    %c0_110 = arith.constant 0 : index
    %c0_111 = arith.constant 0 : index
    %206 = vector.load %arg5[%c0_109, %c0_110, %c0_111] : memref<1x1x512xf32, #tpu.memory_space<vmem>>, vector<1x1x512xf32>
    %207 = vector.shape_cast %206 : vector<1x1x512xf32> to vector<1x512xf32>
    %cst_112 = arith.constant dense<0.000000e+00> : vector<32x512xf32>
    %208 = tpu.matmul %203, %205, %cst_112 {dimension_numbers = #tpu.dot_dimension_numbers<[1], [0], [0], [1], [0, 0, 1, 1], [], []>} : vector<32x128xbf16>, vector<128x512xbf16>, vector<32x512xf32> -> vector<32x512xf32>
    %209 = vector.broadcast %207 : vector<1x512xf32> to vector<32x512xf32>
    %210 = arith.addf %208, %209 : vector<32x512xf32>
    %211 = vector.shape_cast %210 : vector<32x512xf32> to vector<4x8x512xf32>
    %c0_113 = arith.constant 0 : index
    %c0_114 = arith.constant 0 : index
    %c0_115 = arith.constant 0 : index
    %212 = vector.load %arg11[%c0_113, %c0_114, %c0_115] : memref<4x8x512xf32, #tpu.memory_space<vmem>>, vector<4x8x512xf32>
    tpu.vector_store %arg11[%c0_113, %c0_114, %c0_115], %211 {strides = array<i32>} : memref<4x8x512xf32, #tpu.memory_space<vmem>>, vector<4x8x512xf32>,
    %c0_i32_116 = arith.constant 0 : i32
    %c1 = arith.constant 1 : index
    %c0_117 = arith.constant 0 : index
    %c0_118 = arith.constant 0 : index
    %213 = vector.load %arg12[%c1, %c0_117, %c0_118] : memref<2x8x128xf32, #tpu.memory_space<vmem>>, vector<1x8x128xf32>
    %214 = vector.shape_cast %213 : vector<1x8x128xf32> to vector<8x128xf32>
    %215 = arith.index_cast %c0_i32_116 : i32 to index
    %c0_119 = arith.constant 0 : index
    %c0_120 = arith.constant 0 : index
    %216 = vector.load %arg11[%215, %c0_119, %c0_120] : memref<4x8x512xf32, #tpu.memory_space<vmem>>, vector<1x8x512xf32>
    %217 = vector.shape_cast %216 : vector<1x8x512xf32> to vector<8x512xf32>
    %218 = arith.truncf %214 : vector<8x128xf32> to vector<8x128xbf16>
    %c1_121 = arith.constant 1 : index
    %c0_122 = arith.constant 0 : index
    %c0_123 = arith.constant 0 : index
    %219 = vector.load %arg6[%c1_121, %c0_122, %c0_123] : memref<2x128x512xbf16, #tpu.memory_space<vmem>>, vector<1x128x512xbf16>
    %220 = vector.shape_cast %219 : vector<1x128x512xbf16> to vector<128x512xbf16>
    %cst_124 = arith.constant dense<0.000000e+00> : vector<8x512xf32>
    %221 = tpu.matmul %218, %220, %cst_124 {dimension_numbers = #tpu.dot_dimension_numbers<[1], [0], [0], [1], [0, 0, 1, 1], [], []>} : vector<8x128xbf16>, vector<128x512xbf16>, vector<8x512xf32> -> vector<8x512xf32>
    %222 = arith.addf %217, %221 : vector<8x512xf32>
    %223 = vector.extract_strided_slice %222 {offsets = [0, 0], sizes = [8, 128], strides = [1, 1]} : vector<8x512xf32> to vector<8x128xf32>
    %224 = arith.negf %223 : vector<8x128xf32>
    %225 = math.exp %224 : vector<8x128xf32>
    %cst_125 = arith.constant 1.000000e+00 : f32
    %226 = vector.broadcast %cst_125 : f32 to vector<8x128xf32>
    %227 = arith.addf %226, %225 : vector<8x128xf32>
    %228 = arith.divf %226, %227 : vector<8x128xf32>
    %229 = vector.extract_strided_slice %222 {offsets = [0, 128], sizes = [8, 128], strides = [1, 1]} : vector<8x512xf32> to vector<8x128xf32>
    %230 = arith.negf %229 : vector<8x128xf32>
    %231 = math.exp %230 : vector<8x128xf32>
    %cst_126 = arith.constant 1.000000e+00 : f32
    %232 = vector.broadcast %cst_126 : f32 to vector<8x128xf32>
    %233 = arith.addf %232, %231 : vector<8x128xf32>
    %234 = arith.divf %232, %233 : vector<8x128xf32>
    %235 = vector.extract_strided_slice %222 {offsets = [0, 256], sizes = [8, 128], strides = [1, 1]} : vector<8x512xf32> to vector<8x128xf32>
    %236 = math.tanh %235 : vector<8x128xf32>
    %237 = vector.extract_strided_slice %222 {offsets = [0, 384], sizes = [8, 128], strides = [1, 1]} : vector<8x512xf32> to vector<8x128xf32>
    %238 = arith.negf %237 : vector<8x128xf32>
    %239 = math.exp %238 : vector<8x128xf32>
    %cst_127 = arith.constant 1.000000e+00 : f32
    %240 = vector.broadcast %cst_127 : f32 to vector<8x128xf32>
    %241 = arith.addf %240, %239 : vector<8x128xf32>
    %242 = arith.divf %240, %241 : vector<8x128xf32>
    %c1_128 = arith.constant 1 : index
    %c0_129 = arith.constant 0 : index
    %c0_130 = arith.constant 0 : index
    %243 = vector.load %arg13[%c1_128, %c0_129, %c0_130] : memref<2x8x128xf32, #tpu.memory_space<vmem>>, vector<1x8x128xf32>
    %244 = vector.shape_cast %243 : vector<1x8x128xf32> to vector<8x128xf32>
    %245 = arith.mulf %234, %244 : vector<8x128xf32>
    %246 = arith.mulf %228, %236 : vector<8x128xf32>
    %247 = arith.addf %245, %246 : vector<8x128xf32>
    %248 = math.tanh %247 : vector<8x128xf32>
    %249 = arith.mulf %242, %248 : vector<8x128xf32>
    %c1_131 = arith.constant 1 : index
    %c0_132 = arith.constant 0 : index
    %c0_133 = arith.constant 0 : index
    %250 = vector.load %arg13[%c1_131, %c0_132, %c0_133] : memref<2x8x128xf32, #tpu.memory_space<vmem>>, vector<1x8x128xf32>
    %251 = vector.shape_cast %250 : vector<1x8x128xf32> to vector<8x128xf32>
    %252 = vector.shape_cast %247 : vector<8x128xf32> to vector<1x8x128xf32>
    tpu.vector_store %arg13[%c1_131, %c0_132, %c0_133], %252 {strides = array<i32>} : memref<2x8x128xf32, #tpu.memory_space<vmem>>, vector<1x8x128xf32>,
    %c1_134 = arith.constant 1 : index
    %c0_135 = arith.constant 0 : index
    %c0_136 = arith.constant 0 : index
    %253 = vector.load %arg12[%c1_134, %c0_135, %c0_136] : memref<2x8x128xf32, #tpu.memory_space<vmem>>, vector<1x8x128xf32>
    %254 = vector.shape_cast %253 : vector<1x8x128xf32> to vector<8x128xf32>
    %255 = vector.shape_cast %249 : vector<8x128xf32> to vector<1x8x128xf32>
    tpu.vector_store %arg12[%c1_134, %c0_135, %c0_136], %255 {strides = array<i32>} : memref<2x8x128xf32, #tpu.memory_space<vmem>>, vector<1x8x128xf32>,
    %c1_i32_137 = arith.constant 1 : i32
    %c1_138 = arith.constant 1 : index
    %c0_139 = arith.constant 0 : index
    %c0_140 = arith.constant 0 : index
    %256 = vector.load %arg12[%c1_138, %c0_139, %c0_140] : memref<2x8x128xf32, #tpu.memory_space<vmem>>, vector<1x8x128xf32>
    %257 = vector.shape_cast %256 : vector<1x8x128xf32> to vector<8x128xf32>
    %258 = arith.index_cast %c1_i32_137 : i32 to index
    %c0_141 = arith.constant 0 : index
    %c0_142 = arith.constant 0 : index
    %259 = vector.load %arg11[%258, %c0_141, %c0_142] : memref<4x8x512xf32, #tpu.memory_space<vmem>>, vector<1x8x512xf32>
    %260 = vector.shape_cast %259 : vector<1x8x512xf32> to vector<8x512xf32>
    %261 = arith.truncf %257 : vector<8x128xf32> to vector<8x128xbf16>
    %c1_143 = arith.constant 1 : index
    %c0_144 = arith.constant 0 : index
    %c0_145 = arith.constant 0 : index
    %262 = vector.load %arg6[%c1_143, %c0_144, %c0_145] : memref<2x128x512xbf16, #tpu.memory_space<vmem>>, vector<1x128x512xbf16>
    %263 = vector.shape_cast %262 : vector<1x128x512xbf16> to vector<128x512xbf16>
    %cst_146 = arith.constant dense<0.000000e+00> : vector<8x512xf32>
    %264 = tpu.matmul %261, %263, %cst_146 {dimension_numbers = #tpu.dot_dimension_numbers<[1], [0], [0], [1], [0, 0, 1, 1], [], []>} : vector<8x128xbf16>, vector<128x512xbf16>, vector<8x512xf32> -> vector<8x512xf32>
    %265 = arith.addf %260, %264 : vector<8x512xf32>
    %266 = vector.extract_strided_slice %265 {offsets = [0, 0], sizes = [8, 128], strides = [1, 1]} : vector<8x512xf32> to vector<8x128xf32>
    %267 = arith.negf %266 : vector<8x128xf32>
    %268 = math.exp %267 : vector<8x128xf32>
    %cst_147 = arith.constant 1.000000e+00 : f32
    %269 = vector.broadcast %cst_147 : f32 to vector<8x128xf32>
    %270 = arith.addf %269, %268 : vector<8x128xf32>
    %271 = arith.divf %269, %270 : vector<8x128xf32>
    %272 = vector.extract_strided_slice %265 {offsets = [0, 128], sizes = [8, 128], strides = [1, 1]} : vector<8x512xf32> to vector<8x128xf32>
    %273 = arith.negf %272 : vector<8x128xf32>
    %274 = math.exp %273 : vector<8x128xf32>
    %cst_148 = arith.constant 1.000000e+00 : f32
    %275 = vector.broadcast %cst_148 : f32 to vector<8x128xf32>
    %276 = arith.addf %275, %274 : vector<8x128xf32>
    %277 = arith.divf %275, %276 : vector<8x128xf32>
    %278 = vector.extract_strided_slice %265 {offsets = [0, 256], sizes = [8, 128], strides = [1, 1]} : vector<8x512xf32> to vector<8x128xf32>
    %279 = math.tanh %278 : vector<8x128xf32>
    %280 = vector.extract_strided_slice %265 {offsets = [0, 384], sizes = [8, 128], strides = [1, 1]} : vector<8x512xf32> to vector<8x128xf32>
    %281 = arith.negf %280 : vector<8x128xf32>
    %282 = math.exp %281 : vector<8x128xf32>
    %cst_149 = arith.constant 1.000000e+00 : f32
    %283 = vector.broadcast %cst_149 : f32 to vector<8x128xf32>
    %284 = arith.addf %283, %282 : vector<8x128xf32>
    %285 = arith.divf %283, %284 : vector<8x128xf32>
    %c1_150 = arith.constant 1 : index
    %c0_151 = arith.constant 0 : index
    %c0_152 = arith.constant 0 : index
    %286 = vector.load %arg13[%c1_150, %c0_151, %c0_152] : memref<2x8x128xf32, #tpu.memory_space<vmem>>, vector<1x8x128xf32>
    %287 = vector.shape_cast %286 : vector<1x8x128xf32> to vector<8x128xf32>
    %288 = arith.mulf %277, %287 : vector<8x128xf32>
    %289 = arith.mulf %271, %279 : vector<8x128xf32>
    %290 = arith.addf %288, %289 : vector<8x128xf32>
    %291 = math.tanh %290 : vector<8x128xf32>
    %292 = arith.mulf %285, %291 : vector<8x128xf32>
    %c1_153 = arith.constant 1 : index
    %c0_154 = arith.constant 0 : index
    %c0_155 = arith.constant 0 : index
    %293 = vector.load %arg13[%c1_153, %c0_154, %c0_155] : memref<2x8x128xf32, #tpu.memory_space<vmem>>, vector<1x8x128xf32>
    %294 = vector.shape_cast %293 : vector<1x8x128xf32> to vector<8x128xf32>
    %295 = vector.shape_cast %290 : vector<8x128xf32> to vector<1x8x128xf32>
    tpu.vector_store %arg13[%c1_153, %c0_154, %c0_155], %295 {strides = array<i32>} : memref<2x8x128xf32, #tpu.memory_space<vmem>>, vector<1x8x128xf32>,
    %c1_156 = arith.constant 1 : index
    %c0_157 = arith.constant 0 : index
    %c0_158 = arith.constant 0 : index
    %296 = vector.load %arg12[%c1_156, %c0_157, %c0_158] : memref<2x8x128xf32, #tpu.memory_space<vmem>>, vector<1x8x128xf32>
    %297 = vector.shape_cast %296 : vector<1x8x128xf32> to vector<8x128xf32>
    %298 = vector.shape_cast %292 : vector<8x128xf32> to vector<1x8x128xf32>
    tpu.vector_store %arg12[%c1_156, %c0_157, %c0_158], %298 {strides = array<i32>} : memref<2x8x128xf32, #tpu.memory_space<vmem>>, vector<1x8x128xf32>,
    %c2_i32_159 = arith.constant 2 : i32
    %c1_160 = arith.constant 1 : index
    %c0_161 = arith.constant 0 : index
    %c0_162 = arith.constant 0 : index
    %299 = vector.load %arg12[%c1_160, %c0_161, %c0_162] : memref<2x8x128xf32, #tpu.memory_space<vmem>>, vector<1x8x128xf32>
    %300 = vector.shape_cast %299 : vector<1x8x128xf32> to vector<8x128xf32>
    %301 = arith.index_cast %c2_i32_159 : i32 to index
    %c0_163 = arith.constant 0 : index
    %c0_164 = arith.constant 0 : index
    %302 = vector.load %arg11[%301, %c0_163, %c0_164] : memref<4x8x512xf32, #tpu.memory_space<vmem>>, vector<1x8x512xf32>
    %303 = vector.shape_cast %302 : vector<1x8x512xf32> to vector<8x512xf32>
    %304 = arith.truncf %300 : vector<8x128xf32> to vector<8x128xbf16>
    %c1_165 = arith.constant 1 : index
    %c0_166 = arith.constant 0 : index
    %c0_167 = arith.constant 0 : index
    %305 = vector.load %arg6[%c1_165, %c0_166, %c0_167] : memref<2x128x512xbf16, #tpu.memory_space<vmem>>, vector<1x128x512xbf16>
    %306 = vector.shape_cast %305 : vector<1x128x512xbf16> to vector<128x512xbf16>
    %cst_168 = arith.constant dense<0.000000e+00> : vector<8x512xf32>
    %307 = tpu.matmul %304, %306, %cst_168 {dimension_numbers = #tpu.dot_dimension_numbers<[1], [0], [0], [1], [0, 0, 1, 1], [], []>} : vector<8x128xbf16>, vector<128x512xbf16>, vector<8x512xf32> -> vector<8x512xf32>
    %308 = arith.addf %303, %307 : vector<8x512xf32>
    %309 = vector.extract_strided_slice %308 {offsets = [0, 0], sizes = [8, 128], strides = [1, 1]} : vector<8x512xf32> to vector<8x128xf32>
    %310 = arith.negf %309 : vector<8x128xf32>
    %311 = math.exp %310 : vector<8x128xf32>
    %cst_169 = arith.constant 1.000000e+00 : f32
    %312 = vector.broadcast %cst_169 : f32 to vector<8x128xf32>
    %313 = arith.addf %312, %311 : vector<8x128xf32>
    %314 = arith.divf %312, %313 : vector<8x128xf32>
    %315 = vector.extract_strided_slice %308 {offsets = [0, 128], sizes = [8, 128], strides = [1, 1]} : vector<8x512xf32> to vector<8x128xf32>
    %316 = arith.negf %315 : vector<8x128xf32>
    %317 = math.exp %316 : vector<8x128xf32>
    %cst_170 = arith.constant 1.000000e+00 : f32
    %318 = vector.broadcast %cst_170 : f32 to vector<8x128xf32>
    %319 = arith.addf %318, %317 : vector<8x128xf32>
    %320 = arith.divf %318, %319 : vector<8x128xf32>
    %321 = vector.extract_strided_slice %308 {offsets = [0, 256], sizes = [8, 128], strides = [1, 1]} : vector<8x512xf32> to vector<8x128xf32>
    %322 = math.tanh %321 : vector<8x128xf32>
    %323 = vector.extract_strided_slice %308 {offsets = [0, 384], sizes = [8, 128], strides = [1, 1]} : vector<8x512xf32> to vector<8x128xf32>
    %324 = arith.negf %323 : vector<8x128xf32>
    %325 = math.exp %324 : vector<8x128xf32>
    %cst_171 = arith.constant 1.000000e+00 : f32
    %326 = vector.broadcast %cst_171 : f32 to vector<8x128xf32>
    %327 = arith.addf %326, %325 : vector<8x128xf32>
    %328 = arith.divf %326, %327 : vector<8x128xf32>
    %c1_172 = arith.constant 1 : index
    %c0_173 = arith.constant 0 : index
    %c0_174 = arith.constant 0 : index
    %329 = vector.load %arg13[%c1_172, %c0_173, %c0_174] : memref<2x8x128xf32, #tpu.memory_space<vmem>>, vector<1x8x128xf32>
    %330 = vector.shape_cast %329 : vector<1x8x128xf32> to vector<8x128xf32>
    %331 = arith.mulf %320, %330 : vector<8x128xf32>
    %332 = arith.mulf %314, %322 : vector<8x128xf32>
    %333 = arith.addf %331, %332 : vector<8x128xf32>
    %334 = math.tanh %333 : vector<8x128xf32>
    %335 = arith.mulf %328, %334 : vector<8x128xf32>
    %c1_175 = arith.constant 1 : index
    %c0_176 = arith.constant 0 : index
    %c0_177 = arith.constant 0 : index
    %336 = vector.load %arg13[%c1_175, %c0_176, %c0_177] : memref<2x8x128xf32, #tpu.memory_space<vmem>>, vector<1x8x128xf32>
    %337 = vector.shape_cast %336 : vector<1x8x128xf32> to vector<8x128xf32>
    %338 = vector.shape_cast %333 : vector<8x128xf32> to vector<1x8x128xf32>
    tpu.vector_store %arg13[%c1_175, %c0_176, %c0_177], %338 {strides = array<i32>} : memref<2x8x128xf32, #tpu.memory_space<vmem>>, vector<1x8x128xf32>,
    %c1_178 = arith.constant 1 : index
    %c0_179 = arith.constant 0 : index
    %c0_180 = arith.constant 0 : index
    %339 = vector.load %arg12[%c1_178, %c0_179, %c0_180] : memref<2x8x128xf32, #tpu.memory_space<vmem>>, vector<1x8x128xf32>
    %340 = vector.shape_cast %339 : vector<1x8x128xf32> to vector<8x128xf32>
    %341 = vector.shape_cast %335 : vector<8x128xf32> to vector<1x8x128xf32>
    tpu.vector_store %arg12[%c1_178, %c0_179, %c0_180], %341 {strides = array<i32>} : memref<2x8x128xf32, #tpu.memory_space<vmem>>, vector<1x8x128xf32>,
    %c3_i32_181 = arith.constant 3 : i32
    %c1_182 = arith.constant 1 : index
    %c0_183 = arith.constant 0 : index
    %c0_184 = arith.constant 0 : index
    %342 = vector.load %arg12[%c1_182, %c0_183, %c0_184] : memref<2x8x128xf32, #tpu.memory_space<vmem>>, vector<1x8x128xf32>
    %343 = vector.shape_cast %342 : vector<1x8x128xf32> to vector<8x128xf32>
    %344 = arith.index_cast %c3_i32_181 : i32 to index
    %c0_185 = arith.constant 0 : index
    %c0_186 = arith.constant 0 : index
    %345 = vector.load %arg11[%344, %c0_185, %c0_186] : memref<4x8x512xf32, #tpu.memory_space<vmem>>, vector<1x8x512xf32>
    %346 = vector.shape_cast %345 : vector<1x8x512xf32> to vector<8x512xf32>
    %347 = arith.truncf %343 : vector<8x128xf32> to vector<8x128xbf16>
    %c1_187 = arith.constant 1 : index
    %c0_188 = arith.constant 0 : index
    %c0_189 = arith.constant 0 : index
    %348 = vector.load %arg6[%c1_187, %c0_188, %c0_189] : memref<2x128x512xbf16, #tpu.memory_space<vmem>>, vector<1x128x512xbf16>
    %349 = vector.shape_cast %348 : vector<1x128x512xbf16> to vector<128x512xbf16>
    %cst_190 = arith.constant dense<0.000000e+00> : vector<8x512xf32>
    %350 = tpu.matmul %347, %349, %cst_190 {dimension_numbers = #tpu.dot_dimension_numbers<[1], [0], [0], [1], [0, 0, 1, 1], [], []>} : vector<8x128xbf16>, vector<128x512xbf16>, vector<8x512xf32> -> vector<8x512xf32>
    %351 = arith.addf %346, %350 : vector<8x512xf32>
    %352 = vector.extract_strided_slice %351 {offsets = [0, 0], sizes = [8, 128], strides = [1, 1]} : vector<8x512xf32> to vector<8x128xf32>
    %353 = arith.negf %352 : vector<8x128xf32>
    %354 = math.exp %353 : vector<8x128xf32>
    %cst_191 = arith.constant 1.000000e+00 : f32
    %355 = vector.broadcast %cst_191 : f32 to vector<8x128xf32>
    %356 = arith.addf %355, %354 : vector<8x128xf32>
    %357 = arith.divf %355, %356 : vector<8x128xf32>
    %358 = vector.extract_strided_slice %351 {offsets = [0, 128], sizes = [8, 128], strides = [1, 1]} : vector<8x512xf32> to vector<8x128xf32>
    %359 = arith.negf %358 : vector<8x128xf32>
    %360 = math.exp %359 : vector<8x128xf32>
    %cst_192 = arith.constant 1.000000e+00 : f32
    %361 = vector.broadcast %cst_192 : f32 to vector<8x128xf32>
    %362 = arith.addf %361, %360 : vector<8x128xf32>
    %363 = arith.divf %361, %362 : vector<8x128xf32>
    %364 = vector.extract_strided_slice %351 {offsets = [0, 256], sizes = [8, 128], strides = [1, 1]} : vector<8x512xf32> to vector<8x128xf32>
    %365 = math.tanh %364 : vector<8x128xf32>
    %366 = vector.extract_strided_slice %351 {offsets = [0, 384], sizes = [8, 128], strides = [1, 1]} : vector<8x512xf32> to vector<8x128xf32>
    %367 = arith.negf %366 : vector<8x128xf32>
    %368 = math.exp %367 : vector<8x128xf32>
    %cst_193 = arith.constant 1.000000e+00 : f32
    %369 = vector.broadcast %cst_193 : f32 to vector<8x128xf32>
    %370 = arith.addf %369, %368 : vector<8x128xf32>
    %371 = arith.divf %369, %370 : vector<8x128xf32>
    %c1_194 = arith.constant 1 : index
    %c0_195 = arith.constant 0 : index
    %c0_196 = arith.constant 0 : index
    %372 = vector.load %arg13[%c1_194, %c0_195, %c0_196] : memref<2x8x128xf32, #tpu.memory_space<vmem>>, vector<1x8x128xf32>
    %373 = vector.shape_cast %372 : vector<1x8x128xf32> to vector<8x128xf32>
    %374 = arith.mulf %363, %373 : vector<8x128xf32>
    %375 = arith.mulf %357, %365 : vector<8x128xf32>
    %376 = arith.addf %374, %375 : vector<8x128xf32>
    %377 = math.tanh %376 : vector<8x128xf32>
    %378 = arith.mulf %371, %377 : vector<8x128xf32>
    %c1_197 = arith.constant 1 : index
    %c0_198 = arith.constant 0 : index
    %c0_199 = arith.constant 0 : index
    %379 = vector.load %arg13[%c1_197, %c0_198, %c0_199] : memref<2x8x128xf32, #tpu.memory_space<vmem>>, vector<1x8x128xf32>
    %380 = vector.shape_cast %379 : vector<1x8x128xf32> to vector<8x128xf32>
    %381 = vector.shape_cast %376 : vector<8x128xf32> to vector<1x8x128xf32>
    tpu.vector_store %arg13[%c1_197, %c0_198, %c0_199], %381 {strides = array<i32>} : memref<2x8x128xf32, #tpu.memory_space<vmem>>, vector<1x8x128xf32>,
    %c1_200 = arith.constant 1 : index
    %c0_201 = arith.constant 0 : index
    %c0_202 = arith.constant 0 : index
    %382 = vector.load %arg12[%c1_200, %c0_201, %c0_202] : memref<2x8x128xf32, #tpu.memory_space<vmem>>, vector<1x8x128xf32>
    %383 = vector.shape_cast %382 : vector<1x8x128xf32> to vector<8x128xf32>
    %384 = vector.shape_cast %378 : vector<8x128xf32> to vector<1x8x128xf32>
    tpu.vector_store %arg12[%c1_200, %c0_201, %c0_202], %384 {strides = array<i32>} : memref<2x8x128xf32, #tpu.memory_space<vmem>>, vector<1x8x128xf32>,
    %c4_i32_203 = arith.constant 4 : i32
    %c1_i32_204 = arith.constant 1 : i32
    %385 = arith.cmpi eq, %arg0, %c1_i32_204 : i32
    %386 = arith.extui %385 : i1 to i32
    %c0_i32_205 = arith.constant 0 : i32
    %387 = arith.cmpi ne, %386, %c0_i32_205 : i32
    scf.if %387 {
      %c1_206 = arith.constant 1 : index
      %c0_207 = arith.constant 0 : index
      %c0_208 = arith.constant 0 : index
      %388 = vector.load %arg12[%c1_206, %c0_207, %c0_208] : memref<2x8x128xf32, #tpu.memory_space<vmem>>, vector<1x8x128xf32>
      %389 = vector.shape_cast %388 : vector<1x8x128xf32> to vector<8x128xf32>
      %390 = arith.truncf %389 : vector<8x128xf32> to vector<8x128xbf16>
      %c0_209 = arith.constant 0 : index
      %c0_210 = arith.constant 0 : index
      %391 = vector.load %arg7[%c0_209, %c0_210] : memref<128x128xbf16, #tpu.memory_space<vmem>>, vector<128x128xbf16>
      %cst_211 = arith.constant dense<0.000000e+00> : vector<8x128xf32>
      %392 = tpu.matmul %390, %391, %cst_211 {dimension_numbers = #tpu.dot_dimension_numbers<[1], [0], [0], [1], [0, 0, 1, 1], [], []>} : vector<8x128xbf16>, vector<128x128xbf16>, vector<8x128xf32> -> vector<8x128xf32>
      %c0_212 = arith.constant 0 : index
      %c0_213 = arith.constant 0 : index
      %393 = vector.load %arg8[%c0_212, %c0_213] : memref<1x128xf32, #tpu.memory_space<vmem>>, vector<1x128xf32>
      %394 = vector.broadcast %393 : vector<1x128xf32> to vector<8x128xf32>
      %395 = arith.addf %392, %394 : vector<8x128xf32>
      %c0_214 = arith.constant 0 : index
      %c0_215 = arith.constant 0 : index
      %396 = vector.load %arg9[%c0_214, %c0_215] : memref<8x128xf32, #tpu.memory_space<vmem>>, vector<8x128xf32>
      tpu.vector_store %arg9[%c0_214, %c0_215], %395 {strides = array<i32>} : memref<8x128xf32, #tpu.memory_space<vmem>>, vector<8x128xf32>,
    } else {
    }
    return
  }
  func.func @transform_0(%arg0: i32) -> (i32, i32, i32) {
    %c0_i32 = arith.constant 0 : i32
    %c0_i32_0 = arith.constant 0 : i32
    %c0_i32_1 = arith.constant 0 : i32
    return %arg0, %c0_i32, %c0_i32_0 : i32, i32, i32
  }
  func.func @transform_1(%arg0: i32) -> (i32, i32) {
    %c0_i32 = arith.constant 0 : i32
    %c0_i32_0 = arith.constant 0 : i32
    %c0_i32_1 = arith.constant 0 : i32
    return %c0_i32, %c0_i32_0 : i32, i32
  }
  func.func @transform_2(%arg0: i32) -> (i32, i32) {
    %c0_i32 = arith.constant 0 : i32
    %c0_i32_0 = arith.constant 0 : i32
    %c0_i32_1 = arith.constant 0 : i32
    return %c0_i32, %c0_i32_0 : i32, i32
  }
  func.func @transform_3(%arg0: i32) -> (i32, i32, i32) {
    %c0_i32 = arith.constant 0 : i32
    %c0_i32_0 = arith.constant 0 : i32
    %c0_i32_1 = arith.constant 0 : i32
    %c0_i32_2 = arith.constant 0 : i32
    return %c0_i32, %c0_i32_0, %c0_i32_1 : i32, i32, i32
  }
  func.func @transform_4(%arg0: i32) -> (i32, i32, i32) {
    %c0_i32 = arith.constant 0 : i32
    %c0_i32_0 = arith.constant 0 : i32
    %c0_i32_1 = arith.constant 0 : i32
    %c0_i32_2 = arith.constant 0 : i32
    return %c0_i32, %c0_i32_0, %c0_i32_1 : i32, i32, i32
  }
  func.func @transform_5(%arg0: i32) -> (i32, i32, i32) {
    %c0_i32 = arith.constant 0 : i32
    %c0_i32_0 = arith.constant 0 : i32
    %c0_i32_1 = arith.constant 0 : i32
    %c0_i32_2 = arith.constant 0 : i32
    return %c0_i32, %c0_i32_0, %c0_i32_1 : i32, i32, i32
  }
  func.func @transform_6(%arg0: i32) -> (i32, i32) {
    %c0_i32 = arith.constant 0 : i32
    %c0_i32_0 = arith.constant 0 : i32
    %c0_i32_1 = arith.constant 0 : i32
    return %c0_i32, %c0_i32_0 : i32, i32
  }
  func.func @transform_7(%arg0: i32) -> (i32, i32) {
    %c0_i32 = arith.constant 0 : i32
    %c0_i32_0 = arith.constant 0 : i32
    %c0_i32_1 = arith.constant 0 : i32
    return %c0_i32, %c0_i32_0 : i32, i32
  }
  func.func @transform_8(%arg0: i32) -> (i32, i32) {
    %c0_i32 = arith.constant 0 : i32
    %c0_i32_0 = arith.constant 0 : i32
    %c0_i32_1 = arith.constant 0 : i32
    return %c0_i32, %c0_i32_0 : i32, i32
  }
}

</mosaic_0001>

<llo_original>
// kernel: lstm_forward.1
$region0: #{lstm_forward.1}
  #allocation0 [shape = 'u32[]', space=smem, size = 0x4, offset = 0x4, fixed_abs, tag = 'smem constant byte address 0x4 - core index']
  #allocation1 [shape = 'u32[144,128]{1,0:T(1,128)}', space=vmem, size = 0x12000, scoped, tag = 'internal scratch']
  #allocation2 [shape = 'f32[4,8,128]{2,1,0:T(8,128)}', space=vmem, size = 0x4000, scoped, tag = 'scratch operand']
  #allocation3 [shape = 'f32[4,8,512]{2,1,0:T(8,128)}', space=vmem, size = 0x10000, scoped, tag = 'scratch operand']
  #allocation4 [shape = 'f32[2,8,128]{2,1,0:T(8,128)}', space=vmem, size = 0x2000, scoped, tag = 'scratch operand']
  #allocation5 [shape = 'f32[2,8,128]{2,1,0:T(8,128)}', space=vmem, size = 0x2000, scoped, tag = 'scratch operand']
  %s0 = inlined_call_operand.vmem [shape: f32[8,8,128], index: 0, kind: input, shape index: {}]
  %s1 = inlined_call_operand.hbm [shape: bf16[128,512], index: 1, kind: input, shape index: {}]
  %s2 = inlined_call_operand.vmem [shape: f32[1,512], index: 2, kind: input, shape index: {}]
  %s3 = inlined_call_operand.hbm [shape: bf16[1,128,512], index: 3, kind: input, shape index: {}]
  %s4 = inlined_call_operand.vmem [shape: f32[1,1,512], index: 4, kind: input, shape index: {}]
  %s5 = inlined_call_operand.hbm [shape: bf16[2,128,512], index: 5, kind: input, shape index: {}]
  %s6 = inlined_call_operand.vmem [shape: bf16[128,128], index: 6, kind: input, shape index: {}]
  %s7 = inlined_call_operand.vmem [shape: f32[1,128], index: 7, kind: input, shape index: {}]
  %s8 = inlined_call_operand.vmem [shape: f32[8,128], index: 8, kind: output, shape index: {}]
  %s9 = sld [smem:[#allocation0]]
  $region85: #{lstm_forward.1} parent=0
    _
  %s11 = ssub.s32 1, %s9
  %s12 = scalar_select 0, %s11, %s9
  $region1: #{lstm_forward.1} parent=0
    #allocation6 [shape = 'u8[131072]{0}', space=vmem, size = 0x20000, scoped, tag = 'input window, operand 1, single buffered']
    #allocation7 [shape = 's32[2]{0}', space=sflag, size = 0x8, scoped, tag = 'scoped memory for lstm_forward.1']
    #allocation8 [shape = 'u8[131072]{0}', space=vmem, size = 0x20000, scoped, tag = 'input window, operand 3, single buffered']
    #allocation9 [shape = 's32[1]{0}', space=sflag, size = 0x4, scoped, tag = 'scoped memory for lstm_forward.1']
    #allocation10 [shape = 'u8[262144]{0}', space=vmem, size = 0x40000, scoped, tag = 'input window, operand 5, single buffered']
    %13 = vsyncpa [#allocation7], 0
    %14 = vsyncpa [#allocation9], 0
    loop: start=0, step=1, limit=4
    $region2: #{lstm_forward.1} parent=1 // loop_pre_header
      _
    $region3: #{lstm_forward.1} parent=1 // loop_header
      %s16 = sphi 0, %s20
      %p17 = scmp.ge.s32.totalorder %s16, 4
      %s26 = sphi 0, %s28
      %s29 = sphi 0, %s26
      %s30 = sphi 0, %s29
      %s46 = sphi 0, %s30
      %s50 = sphi 0, %s50
      %s52 = sphi 0, %s50
      %s53 = sphi 0, %s52
      %s67 = sphi 0, %s53
      %s71 = sphi 0, %s71
      %s73 = sphi 0, %s71
      %s74 = sphi 0, %s73
      %s88 = sphi 0, %s74
      %s92 = sphi 0, %s92
      %s94 = sphi 0, %s92
      %s95 = sphi 0, %s94
      %s109 = sphi 0, %s95
      %s113 = sphi 0, %s113
      %s115 = sphi 0, %s113
      %s116 = sphi 0, %s115
      %s130 = sphi 0, %s116
      %s134 = sphi 0, %s134
      %s136 = sphi 0, %s134
      %s137 = sphi 0, %s136
      %s151 = sphi 0, %s137
      %s155 = sphi 0, %s155
      %s157 = sphi 0, %s155
      %s158 = sphi 0, %s157
      %s172 = sphi 0, %s158
      %s176 = sphi 0, %s176
      %s178 = sphi 0, %s176
      %s179 = sphi 0, %s178
      %s193 = sphi 0, %s179
      %s197 = sphi 0, %s197
      %s199 = sphi 0, %s197
      %s200 = sphi 0, %s199
      %s214 = sphi 0, %s200
    $region4: #{lstm_forward.1} parent=1 // loop_header_branch
      %19 = sbr.rel (%p17) target = $region8
    $region5: #{lstm_forward.1} parent=1 // loop_body
      %s21 = ssub.s32 %s16, 1
      %s22 = ssub.s32 %s16, 2
      %s23 = sadd.s32 %s16, 1
      %s24 = ssub.s32 %s16, %s23
      %p25 = scmp.eq.s32.totalorder %s24, 0
      %s27 = sadd.s32 %s26, 1
      %s28 = scalar_select %p25, %s26, %s27
      %p31 = pneg %p25
      %p32 = scmp.eq.s32.totalorder %s16, 1
      %p33 = por %p31, %p32
      %p34 = scmp.ne.s32.totalorder %s26, %s29
      %p35 = scmp.eq.s32.totalorder %s16, 0
      %p36 = por %p34, %p35
      %p37 = scmp.ne.s32.totalorder %s26, %s29
      %p38 = scmp.eq.s32.totalorder %s21, 1
      %p39 = por %p37, %p38
      %p40 = scmp.ne.s32.totalorder %s29, %s30
      %p41 = scmp.eq.s32.totalorder %s21, 0
      %p42 = por %p40, %p41
      %p43 = scmp.ne.s32.totalorder %s29, %s30
      %p44 = scmp.eq.s32.totalorder %s22, 1
      %p45 = por %p43, %p44
      %p47 = scmp.ne.s32.totalorder %s30, %s46
      %p48 = scmp.eq.s32.totalorder %s22, 0
      %p49 = por %p47, %p48
      %s51 = sadd.s32 %s50, 1
      %p54 = scmp.eq.s32.totalorder %s16, 1
      %p55 = scmp.ne.s32.totalorder %s50, %s52
      %p56 = scmp.eq.s32.totalorder %s16, 0
      %p57 = por %p55, %p56
      %p58 = scmp.ne.s32.totalorder %s50, %s52
      %p59 = scmp.eq.s32.totalorder %s21, 1
      %p60 = por %p58, %p59
      %p61 = scmp.ne.s32.totalorder %s52, %s53
      %p62 = scmp.eq.s32.totalorder %s21, 0
      %p63 = por %p61, %p62
      %p64 = scmp.ne.s32.totalorder %s52, %s53
      %p65 = scmp.eq.s32.totalorder %s22, 1
      %p66 = por %p64, %p65
      %p68 = scmp.ne.s32.totalorder %s53, %s67
      %p69 = scmp.eq.s32.totalorder %s22, 0
      %p70 = por %p68, %p69
      %s72 = sadd.s32 %s71, 1
      %p75 = scmp.eq.s32.totalorder %s16, 1
      %p76 = scmp.ne.s32.totalorder %s71, %s73
      %p77 = scmp.eq.s32.totalorder %s16, 0
      %p78 = por %p76, %p77
      %p79 = scmp.ne.s32.totalorder %s71, %s73
      %p80 = scmp.eq.s32.totalorder %s21, 1
      %p81 = por %p79, %p80
      %p82 = scmp.ne.s32.totalorder %s73, %s74
      %p83 = scmp.eq.s32.totalorder %s21, 0
      %p84 = por %p82, %p83
      %p85 = scmp.ne.s32.totalorder %s73, %s74
      %p86 = scmp.eq.s32.totalorder %s22, 1
      %p87 = por %p85, %p86
      %p89 = scmp.ne.s32.totalorder %s74, %s88
      %p90 = scmp.eq.s32.totalorder %s22, 0
      %p91 = por %p89, %p90
      %s93 = sadd.s32 %s92, 1
      %p96 = scmp.eq.s32.totalorder %s16, 1
      %p97 = scmp.ne.s32.totalorder %s92, %s94
      %p98 = scmp.eq.s32.totalorder %s16, 0
      %p99 = por %p97, %p98
      %p100 = scmp.ne.s32.totalorder %s92, %s94
      %p101 = scmp.eq.s32.totalorder %s21, 1
      %p102 = por %p100, %p101
      %p103 = scmp.ne.s32.totalorder %s94, %s95
      %p104 = scmp.eq.s32.totalorder %s21, 0
      %p105 = por %p103, %p104
      %p106 = scmp.ne.s32.totalorder %s94, %s95
      %p107 = scmp.eq.s32.totalorder %s22, 1
      %p108 = por %p106, %p107
      %p110 = scmp.ne.s32.totalorder %s95, %s109
      %p111 = scmp.eq.s32.totalorder %s22, 0
      %p112 = por %p110, %p111
      %s114 = sadd.s32 %s113, 1
      %p117 = scmp.eq.s32.totalorder %s16, 1
      %p118 = scmp.ne.s32.totalorder %s113, %s115
      %p119 = scmp.eq.s32.totalorder %s16, 0
      %p120 = por %p118, %p119
      %p121 = scmp.ne.s32.totalorder %s113, %s115
      %p122 = scmp.eq.s32.totalorder %s21, 1
      %p123 = por %p121, %p122
      %p124 = scmp.ne.s32.totalorder %s115, %s116
      %p125 = scmp.eq.s32.totalorder %s21, 0
      %p126 = por %p124, %p125
      %p127 = scmp.ne.s32.totalorder %s115, %s116
      %p128 = scmp.eq.s32.totalorder %s22, 1
      %p129 = por %p127, %p128
      %p131 = scmp.ne.s32.totalorder %s116, %s130
      %p132 = scmp.eq.s32.totalorder %s22, 0
      %p133 = por %p131, %p132
      %s135 = sadd.s32 %s134, 1
      %p138 = scmp.eq.s32.totalorder %s16, 1
      %p139 = scmp.ne.s32.totalorder %s134, %s136
      %p140 = scmp.eq.s32.totalorder %s16, 0
      %p141 = por %p139, %p140
      %p142 = scmp.ne.s32.totalorder %s134, %s136
      %p143 = scmp.eq.s32.totalorder %s21, 1
      %p144 = por %p142, %p143
      %p145 = scmp.ne.s32.totalorder %s136, %s137
      %p146 = scmp.eq.s32.totalorder %s21, 0
      %p147 = por %p145, %p146
      %p148 = scmp.ne.s32.totalorder %s136, %s137
      %p149 = scmp.eq.s32.totalorder %s22, 1
      %p150 = por %p148, %p149
      %p152 = scmp.ne.s32.totalorder %s137, %s151
      %p153 = scmp.eq.s32.totalorder %s22, 0
      %p154 = por %p152, %p153
      %s156 = sadd.s32 %s155, 1
      %p159 = scmp.eq.s32.totalorder %s16, 1
      %p160 = scmp.ne.s32.totalorder %s155, %s157
      %p161 = scmp.eq.s32.totalorder %s16, 0
      %p162 = por %p160, %p161
      %p163 = scmp.ne.s32.totalorder %s155, %s157
      %p164 = scmp.eq.s32.totalorder %s21, 1
      %p165 = por %p163, %p164
      %p166 = scmp.ne.s32.totalorder %s157, %s158
      %p167 = scmp.eq.s32.totalorder %s21, 0
      %p168 = por %p166, %p167
      %p169 = scmp.ne.s32.totalorder %s157, %s158
      %p170 = scmp.eq.s32.totalorder %s22, 1
      %p171 = por %p169, %p170
      %p173 = scmp.ne.s32.totalorder %s158, %s172
      %p174 = scmp.eq.s32.totalorder %s22, 0
      %p175 = por %p173, %p174
      %s177 = sadd.s32 %s176, 1
      %p180 = scmp.eq.s32.totalorder %s16, 1
      %p181 = scmp.ne.s32.totalorder %s176, %s178
      %p182 = scmp.eq.s32.totalorder %s16, 0
      %p183 = por %p181, %p182
      %p184 = scmp.ne.s32.totalorder %s176, %s178
      %p185 = scmp.eq.s32.totalorder %s21, 1
      %p186 = por %p184, %p185
      %p187 = scmp.ne.s32.totalorder %s178, %s179
      %p188 = scmp.eq.s32.totalorder %s21, 0
      %p189 = por %p187, %p188
      %p190 = scmp.ne.s32.totalorder %s178, %s179
      %p191 = scmp.eq.s32.totalorder %s22, 1
      %p192 = por %p190, %p191
      %p194 = scmp.ne.s32.totalorder %s179, %s193
      %p195 = scmp.eq.s32.totalorder %s22, 0
      %p196 = por %p194, %p195
      %s198 = sadd.s32 %s197, 1
      %p201 = scmp.eq.s32.totalorder %s16, 1
      %p202 = scmp.ne.s32.totalorder %s197, %s199
      %p203 = scmp.eq.s32.totalorder %s16, 0
      %p204 = por %p202, %p203
      %p205 = scmp.ne.s32.totalorder %s197, %s199
      %p206 = scmp.eq.s32.totalorder %s21, 1
      %p207 = por %p205, %p206
      %p208 = scmp.ne.s32.totalorder %s199, %s200
      %p209 = scmp.eq.s32.totalorder %s21, 0
      %p210 = por %p208, %p209
      %p211 = scmp.ne.s32.totalorder %s199, %s200
      %p212 = scmp.eq.s32.totalorder %s22, 1
      %p213 = por %p211, %p212
      %p215 = scmp.ne.s32.totalorder %s200, %s214
      %p216 = scmp.eq.s32.totalorder %s22, 0
      %p217 = por %p215, %p216
      %p218 = scmp.le.s32.totalorder 1, %s16
      %p219 = scmp.lt.s32.totalorder %s16, 3
      %p220 = pnand %p218, %p219
      %p221 = pneg %p220
      // Predicated region
      $region9: #{lstm_forward.1} parent=5 // pred_check
        _
      $region10: #{lstm_forward.1} parent=5 // pred_check_branch
        %223 = sbr.rel (%p220) target = $region12
      $region11: #{lstm_forward.1} parent=5 // pred_region
        %s224 = ssub.s32 %s16, 1
        // Predicated region
        $region13: #{lstm_forward.1} parent=11 // pred_check
          %p225 = pneg %p63
        $region14: #{lstm_forward.1} parent=11 // pred_check_branch
          %227 = sbr.rel (%p225) target = $region16
        $region15: #{lstm_forward.1} parent=11 // pred_region
          %s229 = ssub.s32 4096, 4096
          %230 = vsyncadd [#allocation7], %s229
          %s231 = sshll.u32 [#allocation6], 4
          %s232 = int_to_ptr.vmem [resolvable:$true] %s231
          %237 = dma.hbm_to_vmem [thread:$0]  %s1, 4096, %s232, [#allocation7], 256, 256, 16
        $region16: #{lstm_forward.1} parent=11 // pred_fallthru
          _
        // Predicated region
        $region17: #{lstm_forward.1} parent=11 // pred_check
          %p238 = pneg %p84
        $region18: #{lstm_forward.1} parent=11 // pred_check_branch
          %240 = sbr.rel (%p238) target = $region20
        $region19: #{lstm_forward.1} parent=11 // pred_region
          _
        $region20: #{lstm_forward.1} parent=11 // pred_fallthru
          _
        // Predicated region
        $region21: #{lstm_forward.1} parent=11 // pred_check
          %p241 = pneg %p105
        $region22: #{lstm_forward.1} parent=11 // pred_check_branch
          %243 = sbr.rel (%p241) target = $region24
        $region23: #{lstm_forward.1} parent=11 // pred_region
          %s245 = ssub.s32 4096, 4096
          %246 = vsyncadd [#allocation9], %s245
          %s247 = sshll.u32 [#allocation8], 4
          %s248 = int_to_ptr.vmem [resolvable:$true] %s247
          %253 = dma.hbm_to_vmem [thread:$0]  %s3, 4096, %s248, [#allocation9], 256, 256, 16
        $region24: #{lstm_forward.1} parent=11 // pred_fallthru
          _
        // Predicated region
        $region25: #{lstm_forward.1} parent=11 // pred_check
          %p254 = pneg %p126
        $region26: #{lstm_forward.1} parent=11 // pred_check_branch
          %256 = sbr.rel (%p254) target = $region28
        $region27: #{lstm_forward.1} parent=11 // pred_region
          _
        $region28: #{lstm_forward.1} parent=11 // pred_fallthru
          _
        // Predicated region
        $region29: #{lstm_forward.1} parent=11 // pred_check
          %p257 = pneg %p147
        $region30: #{lstm_forward.1} parent=11 // pred_check_branch
          %259 = sbr.rel (%p257) target = $region32
        $region31: #{lstm_forward.1} parent=11 // pred_region
          %s261 = ssub.s32 8192, 8192
          %262 = vsyncadd [#allocation9], %s261
          %s263 = sshll.u32 [#allocation10], 4
          %s264 = int_to_ptr.vmem [resolvable:$true] %s263
          %269 = dma.hbm_to_vmem [thread:$0]  %s5, 8192, %s264, [#allocation9], 256, 256, 16
        $region32: #{lstm_forward.1} parent=11 // pred_fallthru
          _
        // Predicated region
        $region33: #{lstm_forward.1} parent=11 // pred_check
          %p270 = pneg %p168
        $region34: #{lstm_forward.1} parent=11 // pred_check_branch
          %272 = sbr.rel (%p270) target = $region36
        $region35: #{lstm_forward.1} parent=11 // pred_region
          _
        $region36: #{lstm_forward.1} parent=11 // pred_fallthru
          _
        // Predicated region
        $region37: #{lstm_forward.1} parent=11 // pred_check
          %p273 = pneg %p189
        $region38: #{lstm_forward.1} parent=11 // pred_check_branch
          %275 = sbr.rel (%p273) target = $region40
        $region39: #{lstm_forward.1} parent=11 // pred_region
          _
        $region40: #{lstm_forward.1} parent=11 // pred_fallthru
          _
      $region12: #{lstm_forward.1} parent=5 // pred_fallthru
        _
      %p276 = scmp.lt.s32.totalorder %s16, 2
      // Predicated region
      $region41: #{lstm_forward.1} parent=5 // pred_check
        %p277 = pneg %p276
      $region42: #{lstm_forward.1} parent=5 // pred_check_branch
        %279 = sbr.rel (%p277) target = $region44
      $region43: #{lstm_forward.1} parent=5 // pred_region
        // Predicated region
        $region45: #{lstm_forward.1} parent=43 // pred_check
          %p280 = pneg %p36
        $region46: #{lstm_forward.1} parent=43 // pred_check_branch
          %282 = sbr.rel (%p280) target = $region48
        $region47: #{lstm_forward.1} parent=43 // pred_region
          %s283 = smul.u32 4, %s16
          %p284 = scmp.lt.s32.totalorder %s283, 7
          %s285 = scalar_select %p284, %s283, 7
          %s286 = smul.addr %s285, 8
          %s287 = scalar_lea.vmem %s0, %s286
          %s288 = smul.u32 4, %s16
        $region48: #{lstm_forward.1} parent=43 // pred_fallthru
          _
      $region44: #{lstm_forward.1} parent=5 // pred_fallthru
        _
      %p289 = scmp.le.s32.totalorder 1, %s16
      %p290 = scmp.lt.s32.totalorder %s16, 3
      %p291 = pnand %p289, %p290
      %p292 = pneg %p291
      // Predicated region
      $region49: #{lstm_forward.1} parent=5 // pred_check
        _
      $region50: #{lstm_forward.1} parent=5 // pred_check_branch
        %294 = sbr.rel (%p291) target = $region52
      $region51: #{lstm_forward.1} parent=5 // pred_region
        %s295 = ssub.s32 %s16, 1
        // Predicated region
        $region53: #{lstm_forward.1} parent=51 // pred_check
          %p296 = pneg %p63
        $region54: #{lstm_forward.1} parent=51 // pred_check_branch
          %298 = sbr.rel (%p296) target = $region56
        $region55: #{lstm_forward.1} parent=51 // pred_region
          %299 = dma.done [#allocation7], 4096
        $region56: #{lstm_forward.1} parent=51 // pred_fallthru
          _
        // Predicated region
        $region57: #{lstm_forward.1} parent=51 // pred_check
          %p300 = pneg %p105
        $region58: #{lstm_forward.1} parent=51 // pred_check_branch
          %302 = sbr.rel (%p300) target = $region60
        $region59: #{lstm_forward.1} parent=51 // pred_region
          %303 = dma.done [#allocation9], 4096
        $region60: #{lstm_forward.1} parent=51 // pred_fallthru
          _
        // Predicated region
        $region61: #{lstm_forward.1} parent=51 // pred_check
          %p304 = pneg %p147
        $region62: #{lstm_forward.1} parent=51 // pred_check_branch
          %306 = sbr.rel (%p304) target = $region64
        $region63: #{lstm_forward.1} parent=51 // pred_region
          %307 = dma.done [#allocation9], 8192
        $region64: #{lstm_forward.1} parent=51 // pred_fallthru
          _
        %s308 = smul.u32 4, %s21
        %p309 = scmp.lt.s32.totalorder %s308, 7
        %s310 = scalar_select %p309, %s308, 7
        %s311 = smul.addr %s310, 8
        %s312 = scalar_lea.vmem %s0, %s311
        %p313 = pneg %p42
        %p314 = pneg %p39
        %p315 = pneg %p63
        %p316 = pneg %p60
        %p317 = pneg %p84
        %p318 = pneg %p81
        %p319 = pneg %p105
        %p320 = pneg %p102
        %p321 = pneg %p126
        %p322 = pneg %p123
        %p323 = pneg %p147
        %p324 = pneg %p144
        %p325 = pneg %p168
        %p326 = pneg %p165
        %p327 = pneg %p189
        %p328 = pneg %p186
        %p329 = pneg %p210
        %p330 = pneg %p207
        %s331 = smul.u32 4, %s21
        %p332 = scmp.lt.s32.totalorder %s331, 7
        %s333 = scalar_select %p332, %s331, 7
        %s334 = smul.addr %s333, 8
        %s335 = scalar_lea.vmem %s0, %s334
        %s336 = smul.u32 4, %s21
        %p338 = scmp.eq.s32.totalorder %s21, 0
        // Predicated region
        $region65: #{lstm_forward.1} parent=51 // pred_check
          %p339 = pneg %p338
        $region66: #{lstm_forward.1} parent=51 // pred_check_branch
          %341 = sbr.rel (%p339) target = $region68
        $region67: #{lstm_forward.1} parent=51 // pred_region
          %342 = vst [vmem:[#allocation4] sm:$0xff] 0.0
          %343 = vst [vmem:[#allocation4 + $0x8] sm:$0xff] 0.0
          %344 = vst [vmem:[#allocation5] sm:$0xff] 0.0
          %345 = vst [vmem:[#allocation5 + $0x8] sm:$0xff] 0.0
        $region68: #{lstm_forward.1} parent=51 // pred_fallthru
          _
        %v346 = vld [vmem:[%s335] sm:$0xff]
        %v347 = vld [vmem:[%s335 + $0x8] sm:$0xff]
        %v348 = vld [vmem:[%s335 + $0x10] sm:$0xff]
        %v349 = vld [vmem:[%s335 + $0x18] sm:$0xff]
        %v350 = vpack.c.bf16 %v347, %v346
        %v351 = vpack.c.bf16 %v349, %v348
        %v352 = vld [vmem:[#allocation6] sm:$0xff]
        %v353 = vld [vmem:[#allocation6 + $0x8] sm:$0xff]
        %v354 = vld [vmem:[#allocation6 + $0x10] sm:$0xff]
        %v355 = vld [vmem:[#allocation6 + $0x18] sm:$0xff]
        %v356 = vld [vmem:[#allocation6 + $0x20] sm:$0xff]
        %v357 = vld [vmem:[#allocation6 + $0x28] sm:$0xff]
        %v358 = vld [vmem:[#allocation6 + $0x30] sm:$0xff]
        %v359 = vld [vmem:[#allocation6 + $0x38] sm:$0xff]
        %v360 = vld [vmem:[#allocation6 + $0x40] sm:$0xff]
        %v361 = vld [vmem:[#allocation6 + $0x48] sm:$0xff]
        %v362 = vld [vmem:[#allocation6 + $0x50] sm:$0xff]
        %v363 = vld [vmem:[#allocation6 + $0x58] sm:$0xff]
        %v364 = vld [vmem:[#allocation6 + $0x60] sm:$0xff]
        %v365 = vld [vmem:[#allocation6 + $0x68] sm:$0xff]
        %v366 = vld [vmem:[#allocation6 + $0x70] sm:$0xff]
        %v367 = vld [vmem:[#allocation6 + $0x78] sm:$0xff]
        %v368 = vld [vmem:[#allocation6 + $0x80] sm:$0xff]
        %v369 = vld [vmem:[#allocation6 + $0x88] sm:$0xff]
        %v370 = vld [vmem:[#allocation6 + $0x90] sm:$0xff]
        %v371 = vld [vmem:[#allocation6 + $0x98] sm:$0xff]
        %v372 = vld [vmem:[#allocation6 + $0xa0] sm:$0xff]
        %v373 = vld [vmem:[#allocation6 + $0xa8] sm:$0xff]
        %v374 = vld [vmem:[#allocation6 + $0xb0] sm:$0xff]
        %v375 = vld [vmem:[#allocation6 + $0xb8] sm:$0xff]
        %v376 = vld [vmem:[#allocation6 + $0xc0] sm:$0xff]
        %v377 = vld [vmem:[#allocation6 + $0xc8] sm:$0xff]
        %v378 = vld [vmem:[#allocation6 + $0xd0] sm:$0xff]
        %v379 = vld [vmem:[#allocation6 + $0xd8] sm:$0xff]
        %v380 = vld [vmem:[#allocation6 + $0xe0] sm:$0xff]
        %v381 = vld [vmem:[#allocation6 + $0xe8] sm:$0xff]
        %v382 = vld [vmem:[#allocation6 + $0xf0] sm:$0xff]
        %v383 = vld [vmem:[#allocation6 + $0xf8] sm:$0xff]
        %v384 = vld [vmem:[%s2] sm:$0xf]
        %v386 = vlaneseq
        %v387 = vshrl.u32 %v386, 7
        %v388 = vsub.s32 0, %v387
        %v389 = vrot.slane %v384, %v388
        %v390 = vlaneseq
        %v391 = vshrl.u32 %v390, 7
        %v392 = vsub.s32 1, %v391
        %v393 = vrot.slane %v384, %v392
        %v394 = vlaneseq
        %v395 = vshrl.u32 %v394, 7
        %v396 = vsub.s32 2, %v395
        %v397 = vrot.slane %v384, %v396
        %v398 = vlaneseq
        %v399 = vshrl.u32 %v398, 7
        %v400 = vsub.s32 3, %v399
        %v401 = vrot.slane %v384, %v400
        %v438 = vunpack.c.l.b16 %v352
        %v439 = vunpack.c.h.b16 %v352
        %v440 = vunpack.c.l.b16 %v353
        %v441 = vunpack.c.h.b16 %v353
        %v442 = vunpack.c.l.b16 %v354
        %v443 = vunpack.c.h.b16 %v354
        %v444 = vunpack.c.l.b16 %v355
        %v445 = vunpack.c.h.b16 %v355
        %v446 = vunpack.c.l.b16 %v356
        %v447 = vunpack.c.h.b16 %v356
        %v448 = vunpack.c.l.b16 %v357
        %v449 = vunpack.c.h.b16 %v357
        %v450 = vunpack.c.l.b16 %v358
        %v451 = vunpack.c.h.b16 %v358
        %v452 = vunpack.c.l.b16 %v359
        %v453 = vunpack.c.h.b16 %v359
        %v454 = vunpack.c.l.b16 %v360
        %v455 = vunpack.c.h.b16 %v360
        %v456 = vunpack.c.l.b16 %v361
        %v457 = vunpack.c.h.b16 %v361
        %v458 = vunpack.c.l.b16 %v362
        %v459 = vunpack.c.h.b16 %v362
        %v460 = vunpack.c.l.b16 %v363
        %v461 = vunpack.c.h.b16 %v363
        %v462 = vunpack.c.l.b16 %v364
        %v463 = vunpack.c.h.b16 %v364
        %v464 = vunpack.c.l.b16 %v365
        %v465 = vunpack.c.h.b16 %v365
        %v466 = vunpack.c.l.b16 %v366
        %v467 = vunpack.c.h.b16 %v366
        %v468 = vunpack.c.l.b16 %v367
        %v469 = vunpack.c.h.b16 %v367
        %v470 = vunpack.c.l.b16 %v368
        %v471 = vunpack.c.h.b16 %v368
        %v472 = vunpack.c.l.b16 %v369
        %v473 = vunpack.c.h.b16 %v369
        %v474 = vunpack.c.l.b16 %v370
        %v475 = vunpack.c.h.b16 %v370
        %v476 = vunpack.c.l.b16 %v371
        %v477 = vunpack.c.h.b16 %v371
        %v478 = vunpack.c.l.b16 %v372
        %v479 = vunpack.c.h.b16 %v372
        %v480 = vunpack.c.l.b16 %v373
        %v481 = vunpack.c.h.b16 %v373
        %v482 = vunpack.c.l.b16 %v374
        %v483 = vunpack.c.h.b16 %v374
        %v484 = vunpack.c.l.b16 %v375
        %v485 = vunpack.c.h.b16 %v375
        %v486 = vunpack.c.l.b16 %v376
        %v487 = vunpack.c.h.b16 %v376
        %v488 = vunpack.c.l.b16 %v377
        %v489 = vunpack.c.h.b16 %v377
        %v490 = vunpack.c.l.b16 %v378
        %v491 = vunpack.c.h.b16 %v378
        %v492 = vunpack.c.l.b16 %v379
        %v493 = vunpack.c.h.b16 %v379
        %v494 = vunpack.c.l.b16 %v380
        %v495 = vunpack.c.h.b16 %v380
        %v496 = vunpack.c.l.b16 %v381
        %v497 = vunpack.c.h.b16 %v381
        %v498 = vunpack.c.l.b16 %v382
        %v499 = vunpack.c.h.b16 %v382
        %v500 = vunpack.c.l.b16 %v383
        %v501 = vunpack.c.h.b16 %v383
        %v502 = vpack.c.b16 %v442, %v438
        %v503 = vpack.c.b16 %v443, %v439
        %v504 = vpack.c.b16 %v444, %v440
        %v505 = vpack.c.b16 %v445, %v441
        %v506 = vpack.c.b16 %v450, %v446
        %v507 = vpack.c.b16 %v451, %v447
        %v508 = vpack.c.b16 %v452, %v448
        %v509 = vpack.c.b16 %v453, %v449
        %v510 = vpack.c.b16 %v458, %v454
        %v511 = vpack.c.b16 %v459, %v455
        %v512 = vpack.c.b16 %v460, %v456
        %v513 = vpack.c.b16 %v461, %v457
        %v514 = vpack.c.b16 %v466, %v462
        %v515 = vpack.c.b16 %v467, %v463
        %v516 = vpack.c.b16 %v468, %v464
        %v517 = vpack.c.b16 %v469, %v465
        %v518 = vpack.c.b16 %v474, %v470
        %v519 = vpack.c.b16 %v475, %v471
        %v520 = vpack.c.b16 %v476, %v472
        %v521 = vpack.c.b16 %v477, %v473
        %v522 = vpack.c.b16 %v482, %v478
        %v523 = vpack.c.b16 %v483, %v479
        %v524 = vpack.c.b16 %v484, %v480
        %v525 = vpack.c.b16 %v485, %v481
        %v526 = vpack.c.b16 %v490, %v486
        %v527 = vpack.c.b16 %v491, %v487
        %v528 = vpack.c.b16 %v492, %v488
        %v529 = vpack.c.b16 %v493, %v489
        %v530 = vpack.c.b16 %v498, %v494
        %v531 = vpack.c.b16 %v499, %v495
        %v532 = vpack.c.b16 %v500, %v496
        %v533 = vpack.c.b16 %v501, %v497
        %566 = vmatprep.subr.bf16.mxu0 %v503
        %567 = vmatpush1.bf16.msra.mxu0 %v502
        %568 = vmatprep.subr.bf16.mxu0 %v507
        %569 = vmatpush1.bf16.msra.mxu0 %v506
        %570 = vmatprep.subr.bf16.mxu0 %v511
        %571 = vmatpush1.bf16.msra.mxu0 %v510
        %572 = vmatprep.subr.bf16.mxu0 %v515
        %573 = vmatpush1.bf16.msra.mxu0 %v514
        %574 = vmatprep.subr.bf16.mxu0 %v519
        %575 = vmatpush1.bf16.msra.mxu0 %v518
        %576 = vmatprep.subr.bf16.mxu0 %v523
        %577 = vmatpush1.bf16.msra.mxu0 %v522
        %578 = vmatprep.subr.bf16.mxu0 %v527
        %579 = vmatpush1.bf16.msra.mxu0 %v526
        %580 = vmatprep.subr.bf16.mxu0 %v531
        %581 = vmatpush1.bf16.msra.mxu0 %v530
        %582 = vmatprep.subr.bf16.mxu0 0
        %583 = vmatpush1.bf16.msra.mxu0 0
        %584 = vmatprep.subr.bf16.mxu0 0
        %585 = vmatpush1.bf16.msra.mxu0 0
        %586 = vmatprep.subr.bf16.mxu0 0
        %587 = vmatpush1.bf16.msra.mxu0 0
        %588 = vmatprep.subr.bf16.mxu0 0
        %589 = vmatpush1.bf16.msra.mxu0 0
        %590 = vmatprep.subr.bf16.mxu0 0
        %591 = vmatpush1.bf16.msra.mxu0 0
        %592 = vmatprep.subr.bf16.mxu0 0
        %593 = vmatpush1.bf16.msra.mxu0 0
        %594 = vmatprep.subr.bf16.mxu0 0
        %595 = vmatpush1.bf16.msra.mxu0 0
        %596 = vmatprep.subr.bf16.mxu0 0
        %597 = vmatpush1.bf16.msra.mxu0 0
        %598 = vmatprep.mubr.bf16.mxu0 0
        %599 = vmatmul.mubr.bf16.gmra.mrb[0].mxu0 %v350
        %v600 = vpop.f32.mrb[0].mxu0
        %v601 = vadd.f32 %v389, %v600
        %v602 = vpop.f32.mrb[0].mxu0
        %v603 = vadd.f32 %v393, %v602
        %v604 = vpop.f32.mrb[0].mxu0
        %v605 = vadd.f32 %v389, %v604
        %v606 = vpop.f32.mrb[0].mxu0
        %v607 = vadd.f32 %v393, %v606
        %608 = vmatprep.mubr.bf16.mxu0 0
        %609 = vmatmul.mubr.bf16.gmra.mrb[0].mxu0 %v351
        %v610 = vpop.f32.mrb[0].mxu0
        %v611 = vadd.f32 %v389, %v610
        %v612 = vpop.f32.mrb[0].mxu0
        %v613 = vadd.f32 %v393, %v612
        %v614 = vpop.f32.mrb[0].mxu0
        %v615 = vadd.f32 %v389, %v614
        %v616 = vpop.f32.mrb[0].mxu0
        %v617 = vadd.f32 %v393, %v616
        %618 = vdwg.mxu0
        %619 = vmatprep.subr.bf16.mxu0 %v505
        %620 = vmatpush1.bf16.msra.mxu0 %v504
        %621 = vmatprep.subr.bf16.mxu0 %v509
        %622 = vmatpush1.bf16.msra.mxu0 %v508
        %623 = vmatprep.subr.bf16.mxu0 %v513
        %624 = vmatpush1.bf16.msra.mxu0 %v512
        %625 = vmatprep.subr.bf16.mxu0 %v517
        %626 = vmatpush1.bf16.msra.mxu0 %v516
        %627 = vmatprep.subr.bf16.mxu0 %v521
        %628 = vmatpush1.bf16.msra.mxu0 %v520
        %629 = vmatprep.subr.bf16.mxu0 %v525
        %630 = vmatpush1.bf16.msra.mxu0 %v524
        %631 = vmatprep.subr.bf16.mxu0 %v529
        %632 = vmatpush1.bf16.msra.mxu0 %v528
        %633 = vmatprep.subr.bf16.mxu0 %v533
        %634 = vmatpush1.bf16.msra.mxu0 %v532
        %635 = vmatprep.subr.bf16.mxu0 0
        %636 = vmatpush1.bf16.msra.mxu0 0
        %637 = vmatprep.subr.bf16.mxu0 0
        %638 = vmatpush1.bf16.msra.mxu0 0
        %639 = vmatprep.subr.bf16.mxu0 0
        %640 = vmatpush1.bf16.msra.mxu0 0
        %641 = vmatprep.subr.bf16.mxu0 0
        %642 = vmatpush1.bf16.msra.mxu0 0
        %643 = vmatprep.subr.bf16.mxu0 0
        %644 = vmatpush1.bf16.msra.mxu0 0
        %645 = vmatprep.subr.bf16.mxu0 0
        %646 = vmatpush1.bf16.msra.mxu0 0
        %647 = vmatprep.subr.bf16.mxu0 0
        %648 = vmatpush1.bf16.msra.mxu0 0
        %649 = vmatprep.subr.bf16.mxu0 0
        %650 = vmatpush1.bf16.msra.mxu0 0
        %651 = vmatprep.mubr.bf16.mxu0 0
        %652 = vmatmul.mubr.bf16.gmra.mrb[0].mxu0 %v350
        %v653 = vpop.f32.mrb[0].mxu0
        %v654 = vadd.f32 %v397, %v653
        %v655 = vpop.f32.mrb[0].mxu0
        %v656 = vadd.f32 %v401, %v655
        %v657 = vpop.f32.mrb[0].mxu0
        %v658 = vadd.f32 %v397, %v657
        %v659 = vpop.f32.mrb[0].mxu0
        %v660 = vadd.f32 %v401, %v659
        %661 = vmatprep.mubr.bf16.mxu0 0
        %662 = vmatmul.mubr.bf16.gmra.mrb[0].mxu0 %v351
        %v663 = vpop.f32.mrb[0].mxu0
        %v664 = vadd.f32 %v397, %v663
        %v665 = vpop.f32.mrb[0].mxu0
        %v666 = vadd.f32 %v401, %v665
        %v667 = vpop.f32.mrb[0].mxu0
        %v668 = vadd.f32 %v397, %v667
        %v669 = vpop.f32.mrb[0].mxu0
        %v670 = vadd.f32 %v401, %v669
        %671 = vdwg.mxu0
        %672 = vst [vmem:[#allocation3] sm:$0xff] %v601
        %673 = vst [vmem:[#allocation3 + $0x8] sm:$0xff] %v603
        %674 = vst [vmem:[#allocation3 + $0x10] sm:$0xff] %v654
        %675 = vst [vmem:[#allocation3 + $0x18] sm:$0xff] %v656
        %676 = vst [vmem:[#allocation3 + $0x20] sm:$0xff] %v605
        %677 = vst [vmem:[#allocation3 + $0x28] sm:$0xff] %v607
        %678 = vst [vmem:[#allocation3 + $0x30] sm:$0xff] %v658
        %679 = vst [vmem:[#allocation3 + $0x38] sm:$0xff] %v660
        %680 = vst [vmem:[#allocation3 + $0x40] sm:$0xff] %v611
        %681 = vst [vmem:[#allocation3 + $0x48] sm:$0xff] %v613
        %682 = vst [vmem:[#allocation3 + $0x50] sm:$0xff] %v664
        %683 = vst [vmem:[#allocation3 + $0x58] sm:$0xff] %v666
        %684 = vst [vmem:[#allocation3 + $0x60] sm:$0xff] %v615
        %685 = vst [vmem:[#allocation3 + $0x68] sm:$0xff] %v617
        %686 = vst [vmem:[#allocation3 + $0x70] sm:$0xff] %v668
        %687 = vst [vmem:[#allocation3 + $0x78] sm:$0xff] %v670
        %v688 = vld [vmem:[#allocation4] sm:$0xff]
        %v689 = vld [vmem:[#allocation3] sm:$0xff]
        %v690 = vld [vmem:[#allocation3 + $0x8] sm:$0xff]
        %v691 = vld [vmem:[#allocation3 + $0x10] sm:$0xff]
        %v692 = vld [vmem:[#allocation3 + $0x18] sm:$0xff]
        %v693 = vpack.c.bf16 %v688, %v688
        %v694 = vld [vmem:[#allocation10] sm:$0xff]
        %v695 = vld [vmem:[#allocation10 + $0x8] sm:$0xff]
        %v696 = vld [vmem:[#allocation10 + $0x10] sm:$0xff]
        %v697 = vld [vmem:[#allocation10 + $0x18] sm:$0xff]
        %v698 = vld [vmem:[#allocation10 + $0x20] sm:$0xff]
        %v699 = vld [vmem:[#allocation10 + $0x28] sm:$0xff]
        %v700 = vld [vmem:[#allocation10 + $0x30] sm:$0xff]
        %v701 = vld [vmem:[#allocation10 + $0x38] sm:$0xff]
        %v702 = vld [vmem:[#allocation10 + $0x40] sm:$0xff]
        %v703 = vld [vmem:[#allocation10 + $0x48] sm:$0xff]
        %v704 = vld [vmem:[#allocation10 + $0x50] sm:$0xff]
        %v705 = vld [vmem:[#allocation10 + $0x58] sm:$0xff]
        %v706 = vld [vmem:[#allocation10 + $0x60] sm:$0xff]
        %v707 = vld [vmem:[#allocation10 + $0x68] sm:$0xff]
        %v708 = vld [vmem:[#allocation10 + $0x70] sm:$0xff]
        %v709 = vld [vmem:[#allocation10 + $0x78] sm:$0xff]
        %v710 = vld [vmem:[#allocation10 + $0x80] sm:$0xff]
        %v711 = vld [vmem:[#allocation10 + $0x88] sm:$0xff]
        %v712 = vld [vmem:[#allocation10 + $0x90] sm:$0xff]
        %v713 = vld [vmem:[#allocation10 + $0x98] sm:$0xff]
        %v714 = vld [vmem:[#allocation10 + $0xa0] sm:$0xff]
        %v715 = vld [vmem:[#allocation10 + $0xa8] sm:$0xff]
        %v716 = vld [vmem:[#allocation10 + $0xb0] sm:$0xff]
        %v717 = vld [vmem:[#allocation10 + $0xb8] sm:$0xff]
        %v718 = vld [vmem:[#allocation10 + $0xc0] sm:$0xff]
        %v719 = vld [vmem:[#allocation10 + $0xc8] sm:$0xff]
        %v720 = vld [vmem:[#allocation10 + $0xd0] sm:$0xff]
        %v721 = vld [vmem:[#allocation10 + $0xd8] sm:$0xff]
        %v722 = vld [vmem:[#allocation10 + $0xe0] sm:$0xff]
        %v723 = vld [vmem:[#allocation10 + $0xe8] sm:$0xff]
        %v724 = vld [vmem:[#allocation10 + $0xf0] sm:$0xff]
        %v725 = vld [vmem:[#allocation10 + $0xf8] sm:$0xff]
        %v758 = vunpack.c.l.b16 %v694
        %v759 = vunpack.c.h.b16 %v694
        %v760 = vunpack.c.l.b16 %v695
        %v761 = vunpack.c.h.b16 %v695
        %v762 = vunpack.c.l.b16 %v696
        %v763 = vunpack.c.h.b16 %v696
        %v764 = vunpack.c.l.b16 %v697
        %v765 = vunpack.c.h.b16 %v697
        %v766 = vunpack.c.l.b16 %v698
        %v767 = vunpack.c.h.b16 %v698
        %v768 = vunpack.c.l.b16 %v699
        %v769 = vunpack.c.h.b16 %v699
        %v770 = vunpack.c.l.b16 %v700
        %v771 = vunpack.c.h.b16 %v700
        %v772 = vunpack.c.l.b16 %v701
        %v773 = vunpack.c.h.b16 %v701
        %v774 = vunpack.c.l.b16 %v702
        %v775 = vunpack.c.h.b16 %v702
        %v776 = vunpack.c.l.b16 %v703
        %v777 = vunpack.c.h.b16 %v703
        %v778 = vunpack.c.l.b16 %v704
        %v779 = vunpack.c.h.b16 %v704
        %v780 = vunpack.c.l.b16 %v705
        %v781 = vunpack.c.h.b16 %v705
        %v782 = vunpack.c.l.b16 %v706
        %v783 = vunpack.c.h.b16 %v706
        %v784 = vunpack.c.l.b16 %v707
        %v785 = vunpack.c.h.b16 %v707
        %v786 = vunpack.c.l.b16 %v708
        %v787 = vunpack.c.h.b16 %v708
        %v788 = vunpack.c.l.b16 %v709
        %v789 = vunpack.c.h.b16 %v709
        %v790 = vunpack.c.l.b16 %v710
        %v791 = vunpack.c.h.b16 %v710
        %v792 = vunpack.c.l.b16 %v711
        %v793 = vunpack.c.h.b16 %v711
        %v794 = vunpack.c.l.b16 %v712
        %v795 = vunpack.c.h.b16 %v712
        %v796 = vunpack.c.l.b16 %v713
        %v797 = vunpack.c.h.b16 %v713
        %v798 = vunpack.c.l.b16 %v714
        %v799 = vunpack.c.h.b16 %v714
        %v800 = vunpack.c.l.b16 %v715
        %v801 = vunpack.c.h.b16 %v715
        %v802 = vunpack.c.l.b16 %v716
        %v803 = vunpack.c.h.b16 %v716
        %v804 = vunpack.c.l.b16 %v717
        %v805 = vunpack.c.h.b16 %v717
        %v806 = vunpack.c.l.b16 %v718
        %v807 = vunpack.c.h.b16 %v718
        %v808 = vunpack.c.l.b16 %v719
        %v809 = vunpack.c.h.b16 %v719
        %v810 = vunpack.c.l.b16 %v720
        %v811 = vunpack.c.h.b16 %v720
        %v812 = vunpack.c.l.b16 %v721
        %v813 = vunpack.c.h.b16 %v721
        %v814 = vunpack.c.l.b16 %v722
        %v815 = vunpack.c.h.b16 %v722
        %v816 = vunpack.c.l.b16 %v723
        %v817 = vunpack.c.h.b16 %v723
        %v818 = vunpack.c.l.b16 %v724
        %v819 = vunpack.c.h.b16 %v724
        %v820 = vunpack.c.l.b16 %v725
        %v821 = vunpack.c.h.b16 %v725
        %v822 = vpack.c.b16 %v762, %v758
        %v823 = vpack.c.b16 %v763, %v759
        %v824 = vpack.c.b16 %v764, %v760
        %v825 = vpack.c.b16 %v765, %v761
        %v826 = vpack.c.b16 %v770, %v766
        %v827 = vpack.c.b16 %v771, %v767
        %v828 = vpack.c.b16 %v772, %v768
        %v829 = vpack.c.b16 %v773, %v769
        %v830 = vpack.c.b16 %v778, %v774
        %v831 = vpack.c.b16 %v779, %v775
        %v832 = vpack.c.b16 %v780, %v776
        %v833 = vpack.c.b16 %v781, %v777
        %v834 = vpack.c.b16 %v786, %v782
        %v835 = vpack.c.b16 %v787, %v783
        %v836 = vpack.c.b16 %v788, %v784
        %v837 = vpack.c.b16 %v789, %v785
        %v838 = vpack.c.b16 %v794, %v790
        %v839 = vpack.c.b16 %v795, %v791
        %v840 = vpack.c.b16 %v796, %v792
        %v841 = vpack.c.b16 %v797, %v793
        %v842 = vpack.c.b16 %v802, %v798
        %v843 = vpack.c.b16 %v803, %v799
        %v844 = vpack.c.b16 %v804, %v800
        %v845 = vpack.c.b16 %v805, %v801
        %v846 = vpack.c.b16 %v810, %v806
        %v847 = vpack.c.b16 %v811, %v807
        %v848 = vpack.c.b16 %v812, %v808
        %v849 = vpack.c.b16 %v813, %v809
        %v850 = vpack.c.b16 %v818, %v814
        %v851 = vpack.c.b16 %v819, %v815
        %v852 = vpack.c.b16 %v820, %v816
        %v853 = vpack.c.b16 %v821, %v817
        %886 = vmatprep.subr.bf16.mxu0 %v823
        %887 = vmatpush1.bf16.msra.mxu0 %v822
        %888 = vmatprep.subr.bf16.mxu0 %v827
        %889 = vmatpush1.bf16.msra.mxu0 %v826
        %890 = vmatprep.subr.bf16.mxu0 %v831
        %891 = vmatpush1.bf16.msra.mxu0 %v830
        %892 = vmatprep.subr.bf16.mxu0 %v835
        %893 = vmatpush1.bf16.msra.mxu0 %v834
        %894 = vmatprep.subr.bf16.mxu0 %v839
        %895 = vmatpush1.bf16.msra.mxu0 %v838
        %896 = vmatprep.subr.bf16.mxu0 %v843
        %897 = vmatpush1.bf16.msra.mxu0 %v842
        %898 = vmatprep.subr.bf16.mxu0 %v847
        %899 = vmatpush1.bf16.msra.mxu0 %v846
        %900 = vmatprep.subr.bf16.mxu0 %v851
        %901 = vmatpush1.bf16.msra.mxu0 %v850
        %902 = vmatprep.subr.bf16.mxu0 0
        %903 = vmatpush1.bf16.msra.mxu0 0
        %904 = vmatprep.subr.bf16.mxu0 0
        %905 = vmatpush1.bf16.msra.mxu0 0
        %906 = vmatprep.subr.bf16.mxu0 0
        %907 = vmatpush1.bf16.msra.mxu0 0
        %908 = vmatprep.subr.bf16.mxu0 0
        %909 = vmatpush1.bf16.msra.mxu0 0
        %910 = vmatprep.subr.bf16.mxu0 0
        %911 = vmatpush1.bf16.msra.mxu0 0
        %912 = vmatprep.subr.bf16.mxu0 0
        %913 = vmatpush1.bf16.msra.mxu0 0
        %914 = vmatprep.subr.bf16.mxu0 0
        %915 = vmatpush1.bf16.msra.mxu0 0
        %916 = vmatprep.subr.bf16.mxu0 0
        %917 = vmatpush1.bf16.msra.mxu0 0
        %918 = vmatprep.mubr.bf16.mxu0 0
        %919 = vmatmul.mubr.bf16.gmra.mrb[0].mxu0 %v693
        %v920 = vpop.f32.mrb[0].mxu0
        %v921 = vadd.f32 0.0, %v920
        %v922 = vpop.f32.mrb[0].mxu0
        %v923 = vadd.f32 0.0, %v922
        %v924 = vpop.f32.mrb[0].mxu0
        %v925 = vpop.f32.mrb[0].mxu0
        %926 = vdwg.mxu0
        %927 = vmatprep.subr.bf16.mxu0 %v825
        %928 = vmatpush1.bf16.msra.mxu0 %v824
        %929 = vmatprep.subr.bf16.mxu0 %v829
        %930 = vmatpush1.bf16.msra.mxu0 %v828
        %931 = vmatprep.subr.bf16.mxu0 %v833
        %932 = vmatpush1.bf16.msra.mxu0 %v832
        %933 = vmatprep.subr.bf16.mxu0 %v837
        %934 = vmatpush1.bf16.msra.mxu0 %v836
        %935 = vmatprep.subr.bf16.mxu0 %v841
        %936 = vmatpush1.bf16.msra.mxu0 %v840
        %937 = vmatprep.subr.bf16.mxu0 %v845
        %938 = vmatpush1.bf16.msra.mxu0 %v844
        %939 = vmatprep.subr.bf16.mxu0 %v849
        %940 = vmatpush1.bf16.msra.mxu0 %v848
        %941 = vmatprep.subr.bf16.mxu0 %v853
        %942 = vmatpush1.bf16.msra.mxu0 %v852
        %943 = vmatprep.subr.bf16.mxu0 0
        %944 = vmatpush1.bf16.msra.mxu0 0
        %945 = vmatprep.subr.bf16.mxu0 0
        %946 = vmatpush1.bf16.msra.mxu0 0
        %947 = vmatprep.subr.bf16.mxu0 0
        %948 = vmatpush1.bf16.msra.mxu0 0
        %949 = vmatprep.subr.bf16.mxu0 0
        %950 = vmatpush1.bf16.msra.mxu0 0
        %951 = vmatprep.subr.bf16.mxu0 0
        %952 = vmatpush1.bf16.msra.mxu0 0
        %953 = vmatprep.subr.bf16.mxu0 0
        %954 = vmatpush1.bf16.msra.mxu0 0
        %955 = vmatprep.subr.bf16.mxu0 0
        %956 = vmatpush1.bf16.msra.mxu0 0
        %957 = vmatprep.subr.bf16.mxu0 0
        %958 = vmatpush1.bf16.msra.mxu0 0
        %959 = vmatprep.mubr.bf16.mxu0 0
        %960 = vmatmul.mubr.bf16.gmra.mrb[0].mxu0 %v693
        %v961 = vpop.f32.mrb[0].mxu0
        %v962 = vadd.f32 0.0, %v961
        %v963 = vpop.f32.mrb[0].mxu0
        %v964 = vadd.f32 0.0, %v963
        %v965 = vpop.f32.mrb[0].mxu0
        %v966 = vpop.f32.mrb[0].mxu0
        %967 = vdwg.mxu0
        %v968 = vadd.f32 %v689, %v921
        %v969 = vadd.f32 %v690, %v923
        %v970 = vadd.f32 %v691, %v962
        %v971 = vadd.f32 %v692, %v964
        %v972 = vxor.u32 %v968, 2147483648
        %v973 = vmul.f32 %v972, 1.442695
        %v974 = vpow.pop %v973
        %v975 = vadd.f32 %v974, 1.0
        %v976 = vrcp.pop %v975
        %v977 = vmul.f32 1.0, %v976
        %v978 = vxor.u32 %v969, 2147483648
        %v979 = vmul.f32 %v978, 1.442695
        %v980 = vpow.pop %v979
        %v981 = vadd.f32 %v980, 1.0
        %v982 = vrcp.pop %v981
        %v983 = vmul.f32 1.0, %v982
        %v984 = vtanh.pop %v970
        %v985 = vxor.u32 %v971, 2147483648
        %v986 = vmul.f32 %v985, 1.442695
        %v987 = vpow.pop %v986
        %v988 = vadd.f32 %v987, 1.0
        %v989 = vrcp.pop %v988
        %v990 = vmul.f32 1.0, %v989
        %v991 = vld [vmem:[#allocation5] sm:$0xff]
        %v992 = vmul.f32 %v983, %v991
        %v993 = vmul.f32 %v977, %v984
        %v994 = vadd.f32 %v992, %v993
        %v995 = vtanh.pop %v994
        %v996 = vmul.f32 %v990, %v995
        %997 = vst [vmem:[#allocation5] sm:$0xff] %v994
        %998 = vst [vmem:[#allocation4] sm:$0xff] %v996
        %999 = vst [vmem:[#allocation2] sm:$0xff] %v996
        %v1000 = vld [vmem:[#allocation4] sm:$0xff]
        %s1001 = scalar_lea.vmem [#allocation3], 32
        %v1002 = vld [vmem:[%s1001] sm:$0xff]
        %v1003 = vld [vmem:[%s1001 + $0x8] sm:$0xff]
        %v1004 = vld [vmem:[%s1001 + $0x10] sm:$0xff]
        %v1005 = vld [vmem:[%s1001 + $0x18] sm:$0xff]
        %v1006 = vpack.c.bf16 %v1000, %v1000
        %v1007 = vld [vmem:[#allocation10] sm:$0xff]
        %v1008 = vld [vmem:[#allocation10 + $0x8] sm:$0xff]
        %v1009 = vld [vmem:[#allocation10 + $0x10] sm:$0xff]
        %v1010 = vld [vmem:[#allocation10 + $0x18] sm:$0xff]
        %v1011 = vld [vmem:[#allocation10 + $0x20] sm:$0xff]
        %v1012 = vld [vmem:[#allocation10 + $0x28] sm:$0xff]
        %v1013 = vld [vmem:[#allocation10 + $0x30] sm:$0xff]
        %v1014 = vld [vmem:[#allocation10 + $0x38] sm:$0xff]
        %v1015 = vld [vmem:[#allocation10 + $0x40] sm:$0xff]
        %v1016 = vld [vmem:[#allocation10 + $0x48] sm:$0xff]
        %v1017 = vld [vmem:[#allocation10 + $0x50] sm:$0xff]
        %v1018 = vld [vmem:[#allocation10 + $0x58] sm:$0xff]
        %v1019 = vld [vmem:[#allocation10 + $0x60] sm:$0xff]
        %v1020 = vld [vmem:[#allocation10 + $0x68] sm:$0xff]
        %v1021 = vld [vmem:[#allocation10 + $0x70] sm:$0xff]
        %v1022 = vld [vmem:[#allocation10 + $0x78] sm:$0xff]
        %v1023 = vld [vmem:[#allocation10 + $0x80] sm:$0xff]
        %v1024 = vld [vmem:[#allocation10 + $0x88] sm:$0xff]
        %v1025 = vld [vmem:[#allocation10 + $0x90] sm:$0xff]
        %v1026 = vld [vmem:[#allocation10 + $0x98] sm:$0xff]
        %v1027 = vld [vmem:[#allocation10 + $0xa0] sm:$0xff]
        %v1028 = vld [vmem:[#allocation10 + $0xa8] sm:$0xff]
        %v1029 = vld [vmem:[#allocation10 + $0xb0] sm:$0xff]
        %v1030 = vld [vmem:[#allocation10 + $0xb8] sm:$0xff]
        %v1031 = vld [vmem:[#allocation10 + $0xc0] sm:$0xff]
        %v1032 = vld [vmem:[#allocation10 + $0xc8] sm:$0xff]
        %v1033 = vld [vmem:[#allocation10 + $0xd0] sm:$0xff]
        %v1034 = vld [vmem:[#allocation10 + $0xd8] sm:$0xff]
        %v1035 = vld [vmem:[#allocation10 + $0xe0] sm:$0xff]
        %v1036 = vld [vmem:[#allocation10 + $0xe8] sm:$0xff]
        %v1037 = vld [vmem:[#allocation10 + $0xf0] sm:$0xff]
        %v1038 = vld [vmem:[#allocation10 + $0xf8] sm:$0xff]
        %v1071 = vunpack.c.l.b16 %v1007
        %v1072 = vunpack.c.h.b16 %v1007
        %v1073 = vunpack.c.l.b16 %v1008
        %v1074 = vunpack.c.h.b16 %v1008
        %v1075 = vunpack.c.l.b16 %v1009
        %v1076 = vunpack.c.h.b16 %v1009
        %v1077 = vunpack.c.l.b16 %v1010
        %v1078 = vunpack.c.h.b16 %v1010
        %v1079 = vunpack.c.l.b16 %v1011
        %v1080 = vunpack.c.h.b16 %v1011
        %v1081 = vunpack.c.l.b16 %v1012
        %v1082 = vunpack.c.h.b16 %v1012
        %v1083 = vunpack.c.l.b16 %v1013
        %v1084 = vunpack.c.h.b16 %v1013
        %v1085 = vunpack.c.l.b16 %v1014
        %v1086 = vunpack.c.h.b16 %v1014
        %v1087 = vunpack.c.l.b16 %v1015
        %v1088 = vunpack.c.h.b16 %v1015
        %v1089 = vunpack.c.l.b16 %v1016
        %v1090 = vunpack.c.h.b16 %v1016
        %v1091 = vunpack.c.l.b16 %v1017
        %v1092 = vunpack.c.h.b16 %v1017
        %v1093 = vunpack.c.l.b16 %v1018
        %v1094 = vunpack.c.h.b16 %v1018
        %v1095 = vunpack.c.l.b16 %v1019
        %v1096 = vunpack.c.h.b16 %v1019
        %v1097 = vunpack.c.l.b16 %v1020
        %v1098 = vunpack.c.h.b16 %v1020
        %v1099 = vunpack.c.l.b16 %v1021
        %v1100 = vunpack.c.h.b16 %v1021
        %v1101 = vunpack.c.l.b16 %v1022
        %v1102 = vunpack.c.h.b16 %v1022
        %v1103 = vunpack.c.l.b16 %v1023
        %v1104 = vunpack.c.h.b16 %v1023
        %v1105 = vunpack.c.l.b16 %v1024
        %v1106 = vunpack.c.h.b16 %v1024
        %v1107 = vunpack.c.l.b16 %v1025
        %v1108 = vunpack.c.h.b16 %v1025
        %v1109 = vunpack.c.l.b16 %v1026
        %v1110 = vunpack.c.h.b16 %v1026
        %v1111 = vunpack.c.l.b16 %v1027
        %v1112 = vunpack.c.h.b16 %v1027
        %v1113 = vunpack.c.l.b16 %v1028
        %v1114 = vunpack.c.h.b16 %v1028
        %v1115 = vunpack.c.l.b16 %v1029
        %v1116 = vunpack.c.h.b16 %v1029
        %v1117 = vunpack.c.l.b16 %v1030
        %v1118 = vunpack.c.h.b16 %v1030
        %v1119 = vunpack.c.l.b16 %v1031
        %v1120 = vunpack.c.h.b16 %v1031
        %v1121 = vunpack.c.l.b16 %v1032
        %v1122 = vunpack.c.h.b16 %v1032
        %v1123 = vunpack.c.l.b16 %v1033
        %v1124 = vunpack.c.h.b16 %v1033
        %v1125 = vunpack.c.l.b16 %v1034
        %v1126 = vunpack.c.h.b16 %v1034
        %v1127 = vunpack.c.l.b16 %v1035
        %v1128 = vunpack.c.h.b16 %v1035
        %v1129 = vunpack.c.l.b16 %v1036
        %v1130 = vunpack.c.h.b16 %v1036
        %v1131 = vunpack.c.l.b16 %v1037
        %v1132 = vunpack.c.h.b16 %v1037
        %v1133 = vunpack.c.l.b16 %v1038
        %v1134 = vunpack.c.h.b16 %v1038
        %v1135 = vpack.c.b16 %v1075, %v1071
        %v1136 = vpack.c.b16 %v1076, %v1072
        %v1137 = vpack.c.b16 %v1077, %v1073
        %v1138 = vpack.c.b16 %v1078, %v1074
        %v1139 = vpack.c.b16 %v1083, %v1079
        %v1140 = vpack.c.b16 %v1084, %v1080
        %v1141 = vpack.c.b16 %v1085, %v1081
        %v1142 = vpack.c.b16 %v1086, %v1082
        %v1143 = vpack.c.b16 %v1091, %v1087
        %v1144 = vpack.c.b16 %v1092, %v1088
        %v1145 = vpack.c.b16 %v1093, %v1089
        %v1146 = vpack.c.b16 %v1094, %v1090
        %v1147 = vpack.c.b16 %v1099, %v1095
        %v1148 = vpack.c.b16 %v1100, %v1096
        %v1149 = vpack.c.b16 %v1101, %v1097
        %v1150 = vpack.c.b16 %v1102, %v1098
        %v1151 = vpack.c.b16 %v1107, %v1103
        %v1152 = vpack.c.b16 %v1108, %v1104
        %v1153 = vpack.c.b16 %v1109, %v1105
        %v1154 = vpack.c.b16 %v1110, %v1106
        %v1155 = vpack.c.b16 %v1115, %v1111
        %v1156 = vpack.c.b16 %v1116, %v1112
        %v1157 = vpack.c.b16 %v1117, %v1113
        %v1158 = vpack.c.b16 %v1118, %v1114
        %v1159 = vpack.c.b16 %v1123, %v1119
        %v1160 = vpack.c.b16 %v1124, %v1120
        %v1161 = vpack.c.b16 %v1125, %v1121
        %v1162 = vpack.c.b16 %v1126, %v1122
        %v1163 = vpack.c.b16 %v1131, %v1127
        %v1164 = vpack.c.b16 %v1132, %v1128
        %v1165 = vpack.c.b16 %v1133, %v1129
        %v1166 = vpack.c.b16 %v1134, %v1130
        %1199 = vmatprep.subr.bf16.mxu0 %v1136
        %1200 = vmatpush1.bf16.msra.mxu0 %v1135
        %1201 = vmatprep.subr.bf16.mxu0 %v1140
        %1202 = vmatpush1.bf16.msra.mxu0 %v1139
        %1203 = vmatprep.subr.bf16.mxu0 %v1144
        %1204 = vmatpush1.bf16.msra.mxu0 %v1143
        %1205 = vmatprep.subr.bf16.mxu0 %v1148
        %1206 = vmatpush1.bf16.msra.mxu0 %v1147
        %1207 = vmatprep.subr.bf16.mxu0 %v1152
        %1208 = vmatpush1.bf16.msra.mxu0 %v1151
        %1209 = vmatprep.subr.bf16.mxu0 %v1156
        %1210 = vmatpush1.bf16.msra.mxu0 %v1155
        %1211 = vmatprep.subr.bf16.mxu0 %v1160
        %1212 = vmatpush1.bf16.msra.mxu0 %v1159
        %1213 = vmatprep.subr.bf16.mxu0 %v1164
        %1214 = vmatpush1.bf16.msra.mxu0 %v1163
        %1215 = vmatprep.subr.bf16.mxu0 0
        %1216 = vmatpush1.bf16.msra.mxu0 0
        %1217 = vmatprep.subr.bf16.mxu0 0
        %1218 = vmatpush1.bf16.msra.mxu0 0
        %1219 = vmatprep.subr.bf16.mxu0 0
        %1220 = vmatpush1.bf16.msra.mxu0 0
        %1221 = vmatprep.subr.bf16.mxu0 0
        %1222 = vmatpush1.bf16.msra.mxu0 0
        %1223 = vmatprep.subr.bf16.mxu0 0
        %1224 = vmatpush1.bf16.msra.mxu0 0
        %1225 = vmatprep.subr.bf16.mxu0 0
        %1226 = vmatpush1.bf16.msra.mxu0 0
        %1227 = vmatprep.subr.bf16.mxu0 0
        %1228 = vmatpush1.bf16.msra.mxu0 0
        %1229 = vmatprep.subr.bf16.mxu0 0
        %1230 = vmatpush1.bf16.msra.mxu0 0
        %1231 = vmatprep.mubr.bf16.mxu0 0
        %1232 = vmatmul.mubr.bf16.gmra.mrb[0].mxu0 %v1006
        %v1233 = vpop.f32.mrb[0].mxu0
        %v1234 = vadd.f32 0.0, %v1233
        %v1235 = vpop.f32.mrb[0].mxu0
        %v1236 = vadd.f32 0.0, %v1235
        %v1237 = vpop.f32.mrb[0].mxu0
        %v1238 = vpop.f32.mrb[0].mxu0
        %1239 = vdwg.mxu0
        %1240 = vmatprep.subr.bf16.mxu0 %v1138
        %1241 = vmatpush1.bf16.msra.mxu0 %v1137
        %1242 = vmatprep.subr.bf16.mxu0 %v1142
        %1243 = vmatpush1.bf16.msra.mxu0 %v1141
        %1244 = vmatprep.subr.bf16.mxu0 %v1146
        %1245 = vmatpush1.bf16.msra.mxu0 %v1145
        %1246 = vmatprep.subr.bf16.mxu0 %v1150
        %1247 = vmatpush1.bf16.msra.mxu0 %v1149
        %1248 = vmatprep.subr.bf16.mxu0 %v1154
        %1249 = vmatpush1.bf16.msra.mxu0 %v1153
        %1250 = vmatprep.subr.bf16.mxu0 %v1158
        %1251 = vmatpush1.bf16.msra.mxu0 %v1157
        %1252 = vmatprep.subr.bf16.mxu0 %v1162
        %1253 = vmatpush1.bf16.msra.mxu0 %v1161
        %1254 = vmatprep.subr.bf16.mxu0 %v1166
        %1255 = vmatpush1.bf16.msra.mxu0 %v1165
        %1256 = vmatprep.subr.bf16.mxu0 0
        %1257 = vmatpush1.bf16.msra.mxu0 0
        %1258 = vmatprep.subr.bf16.mxu0 0
        %1259 = vmatpush1.bf16.msra.mxu0 0
        %1260 = vmatprep.subr.bf16.mxu0 0
        %1261 = vmatpush1.bf16.msra.mxu0 0
        %1262 = vmatprep.subr.bf16.mxu0 0
        %1263 = vmatpush1.bf16.msra.mxu0 0
        %1264 = vmatprep.subr.bf16.mxu0 0
        %1265 = vmatpush1.bf16.msra.mxu0 0
        %1266 = vmatprep.subr.bf16.mxu0 0
        %1267 = vmatpush1.bf16.msra.mxu0 0
        %1268 = vmatprep.subr.bf16.mxu0 0
        %1269 = vmatpush1.bf16.msra.mxu0 0
        %1270 = vmatprep.subr.bf16.mxu0 0
        %1271 = vmatpush1.bf16.msra.mxu0 0
        %1272 = vmatprep.mubr.bf16.mxu0 0
        %1273 = vmatmul.mubr.bf16.gmra.mrb[0].mxu0 %v1006
        %v1274 = vpop.f32.mrb[0].mxu0
        %v1275 = vadd.f32 0.0, %v1274
        %v1276 = vpop.f32.mrb[0].mxu0
        %v1277 = vadd.f32 0.0, %v1276
        %v1278 = vpop.f32.mrb[0].mxu0
        %v1279 = vpop.f32.mrb[0].mxu0
        %1280 = vdwg.mxu0
        %v1281 = vadd.f32 %v1002, %v1234
        %v1282 = vadd.f32 %v1003, %v1236
        %v1283 = vadd.f32 %v1004, %v1275
        %v1284 = vadd.f32 %v1005, %v1277
        %v1285 = vxor.u32 %v1281, 2147483648
        %v1286 = vmul.f32 %v1285, 1.442695
        %v1287 = vpow.pop %v1286
        %v1288 = vadd.f32 %v1287, 1.0
        %v1289 = vrcp.pop %v1288
        %v1290 = vmul.f32 1.0, %v1289
        %v1291 = vxor.u32 %v1282, 2147483648
        %v1292 = vmul.f32 %v1291, 1.442695
        %v1293 = vpow.pop %v1292
        %v1294 = vadd.f32 %v1293, 1.0
        %v1295 = vrcp.pop %v1294
        %v1296 = vmul.f32 1.0, %v1295
        %v1297 = vtanh.pop %v1283
        %v1298 = vxor.u32 %v1284, 2147483648
        %v1299 = vmul.f32 %v1298, 1.442695
        %v1300 = vpow.pop %v1299
        %v1301 = vadd.f32 %v1300, 1.0
        %v1302 = vrcp.pop %v1301
        %v1303 = vmul.f32 1.0, %v1302
        %v1304 = vld [vmem:[#allocation5] sm:$0xff]
        %v1305 = vmul.f32 %v1296, %v1304
        %v1306 = vmul.f32 %v1290, %v1297
        %v1307 = vadd.f32 %v1305, %v1306
        %v1308 = vtanh.pop %v1307
        %v1309 = vmul.f32 %v1303, %v1308
        %1310 = vst [vmem:[#allocation5] sm:$0xff] %v1307
        %1311 = vst [vmem:[#allocation4] sm:$0xff] %v1309
        %s1312 = scalar_lea.vmem [#allocation2], 8
        %1313 = vst [vmem:[%s1312] sm:$0xff] %v1309
        %v1314 = vld [vmem:[#allocation4] sm:$0xff]
        %s1315 = scalar_lea.vmem [#allocation3], 64
        %v1316 = vld [vmem:[%s1315] sm:$0xff]
        %v1317 = vld [vmem:[%s1315 + $0x8] sm:$0xff]
        %v1318 = vld [vmem:[%s1315 + $0x10] sm:$0xff]
        %v1319 = vld [vmem:[%s1315 + $0x18] sm:$0xff]
        %v1320 = vpack.c.bf16 %v1314, %v1314
        %v1321 = vld [vmem:[#allocation10] sm:$0xff]
        %v1322 = vld [vmem:[#allocation10 + $0x8] sm:$0xff]
        %v1323 = vld [vmem:[#allocation10 + $0x10] sm:$0xff]
        %v1324 = vld [vmem:[#allocation10 + $0x18] sm:$0xff]
        %v1325 = vld [vmem:[#allocation10 + $0x20] sm:$0xff]
        %v1326 = vld [vmem:[#allocation10 + $0x28] sm:$0xff]
        %v1327 = vld [vmem:[#allocation10 + $0x30] sm:$0xff]
        %v1328 = vld [vmem:[#allocation10 + $0x38] sm:$0xff]
        %v1329 = vld [vmem:[#allocation10 + $0x40] sm:$0xff]
        %v1330 = vld [vmem:[#allocation10 + $0x48] sm:$0xff]
        %v1331 = vld [vmem:[#allocation10 + $0x50] sm:$0xff]
        %v1332 = vld [vmem:[#allocation10 + $0x58] sm:$0xff]
        %v1333 = vld [vmem:[#allocation10 + $0x60] sm:$0xff]
        %v1334 = vld [vmem:[#allocation10 + $0x68] sm:$0xff]
        %v1335 = vld [vmem:[#allocation10 + $0x70] sm:$0xff]
        %v1336 = vld [vmem:[#allocation10 + $0x78] sm:$0xff]
        %v1337 = vld [vmem:[#allocation10 + $0x80] sm:$0xff]
        %v1338 = vld [vmem:[#allocation10 + $0x88] sm:$0xff]
        %v1339 = vld [vmem:[#allocation10 + $0x90] sm:$0xff]
        %v1340 = vld [vmem:[#allocation10 + $0x98] sm:$0xff]
        %v1341 = vld [vmem:[#allocation10 + $0xa0] sm:$0xff]
        %v1342 = vld [vmem:[#allocation10 + $0xa8] sm:$0xff]
        %v1343 = vld [vmem:[#allocation10 + $0xb0] sm:$0xff]
        %v1344 = vld [vmem:[#allocation10 + $0xb8] sm:$0xff]
        %v1345 = vld [vmem:[#allocation10 + $0xc0] sm:$0xff]
        %v1346 = vld [vmem:[#allocation10 + $0xc8] sm:$0xff]
        %v1347 = vld [vmem:[#allocation10 + $0xd0] sm:$0xff]
        %v1348 = vld [vmem:[#allocation10 + $0xd8] sm:$0xff]
        %v1349 = vld [vmem:[#allocation10 + $0xe0] sm:$0xff]
        %v1350 = vld [vmem:[#allocation10 + $0xe8] sm:$0xff]
        %v1351 = vld [vmem:[#allocation10 + $0xf0] sm:$0xff]
        %v1352 = vld [vmem:[#allocation10 + $0xf8] sm:$0xff]
        %v1385 = vunpack.c.l.b16 %v1321
        %v1386 = vunpack.c.h.b16 %v1321
        %v1387 = vunpack.c.l.b16 %v1322
        %v1388 = vunpack.c.h.b16 %v1322
        %v1389 = vunpack.c.l.b16 %v1323
        %v1390 = vunpack.c.h.b16 %v1323
        %v1391 = vunpack.c.l.b16 %v1324
        %v1392 = vunpack.c.h.b16 %v1324
        %v1393 = vunpack.c.l.b16 %v1325
        %v1394 = vunpack.c.h.b16 %v1325
        %v1395 = vunpack.c.l.b16 %v1326
        %v1396 = vunpack.c.h.b16 %v1326
        %v1397 = vunpack.c.l.b16 %v1327
        %v1398 = vunpack.c.h.b16 %v1327
        %v1399 = vunpack.c.l.b16 %v1328
        %v1400 = vunpack.c.h.b16 %v1328
        %v1401 = vunpack.c.l.b16 %v1329
        %v1402 = vunpack.c.h.b16 %v1329
        %v1403 = vunpack.c.l.b16 %v1330
        %v1404 = vunpack.c.h.b16 %v1330
        %v1405 = vunpack.c.l.b16 %v1331
        %v1406 = vunpack.c.h.b16 %v1331
        %v1407 = vunpack.c.l.b16 %v1332
        %v1408 = vunpack.c.h.b16 %v1332
        %v1409 = vunpack.c.l.b16 %v1333
        %v1410 = vunpack.c.h.b16 %v1333
        %v1411 = vunpack.c.l.b16 %v1334
        %v1412 = vunpack.c.h.b16 %v1334
        %v1413 = vunpack.c.l.b16 %v1335
        %v1414 = vunpack.c.h.b16 %v1335
        %v1415 = vunpack.c.l.b16 %v1336
        %v1416 = vunpack.c.h.b16 %v1336
        %v1417 = vunpack.c.l.b16 %v1337
        %v1418 = vunpack.c.h.b16 %v1337
        %v1419 = vunpack.c.l.b16 %v1338
        %v1420 = vunpack.c.h.b16 %v1338
        %v1421 = vunpack.c.l.b16 %v1339
        %v1422 = vunpack.c.h.b16 %v1339
        %v1423 = vunpack.c.l.b16 %v1340
        %v1424 = vunpack.c.h.b16 %v1340
        %v1425 = vunpack.c.l.b16 %v1341
        %v1426 = vunpack.c.h.b16 %v1341
        %v1427 = vunpack.c.l.b16 %v1342
        %v1428 = vunpack.c.h.b16 %v1342
        %v1429 = vunpack.c.l.b16 %v1343
        %v1430 = vunpack.c.h.b16 %v1343
        %v1431 = vunpack.c.l.b16 %v1344
        %v1432 = vunpack.c.h.b16 %v1344
        %v1433 = vunpack.c.l.b16 %v1345
        %v1434 = vunpack.c.h.b16 %v1345
        %v1435 = vunpack.c.l.b16 %v1346
        %v1436 = vunpack.c.h.b16 %v1346
        %v1437 = vunpack.c.l.b16 %v1347
        %v1438 = vunpack.c.h.b16 %v1347
        %v1439 = vunpack.c.l.b16 %v1348
        %v1440 = vunpack.c.h.b16 %v1348
        %v1441 = vunpack.c.l.b16 %v1349
        %v1442 = vunpack.c.h.b16 %v1349
        %v1443 = vunpack.c.l.b16 %v1350
        %v1444 = vunpack.c.h.b16 %v1350
        %v1445 = vunpack.c.l.b16 %v1351
        %v1446 = vunpack.c.h.b16 %v1351
        %v1447 = vunpack.c.l.b16 %v1352
        %v1448 = vunpack.c.h.b16 %v1352
        %v1449 = vpack.c.b16 %v1389, %v1385
        %v1450 = vpack.c.b16 %v1390, %v1386
        %v1451 = vpack.c.b16 %v1391, %v1387
        %v1452 = vpack.c.b16 %v1392, %v1388
        %v1453 = vpack.c.b16 %v1397, %v1393
        %v1454 = vpack.c.b16 %v1398, %v1394
        %v1455 = vpack.c.b16 %v1399, %v1395
        %v1456 = vpack.c.b16 %v1400, %v1396
        %v1457 = vpack.c.b16 %v1405, %v1401
        %v1458 = vpack.c.b16 %v1406, %v1402
        %v1459 = vpack.c.b16 %v1407, %v1403
        %v1460 = vpack.c.b16 %v1408, %v1404
        %v1461 = vpack.c.b16 %v1413, %v1409
        %v1462 = vpack.c.b16 %v1414, %v1410
        %v1463 = vpack.c.b16 %v1415, %v1411
        %v1464 = vpack.c.b16 %v1416, %v1412
        %v1465 = vpack.c.b16 %v1421, %v1417
        %v1466 = vpack.c.b16 %v1422, %v1418
        %v1467 = vpack.c.b16 %v1423, %v1419
        %v1468 = vpack.c.b16 %v1424, %v1420
        %v1469 = vpack.c.b16 %v1429, %v1425
        %v1470 = vpack.c.b16 %v1430, %v1426
        %v1471 = vpack.c.b16 %v1431, %v1427
        %v1472 = vpack.c.b16 %v1432, %v1428
        %v1473 = vpack.c.b16 %v1437, %v1433
        %v1474 = vpack.c.b16 %v1438, %v1434
        %v1475 = vpack.c.b16 %v1439, %v1435
        %v1476 = vpack.c.b16 %v1440, %v1436
        %v1477 = vpack.c.b16 %v1445, %v1441
        %v1478 = vpack.c.b16 %v1446, %v1442
        %v1479 = vpack.c.b16 %v1447, %v1443
        %v1480 = vpack.c.b16 %v1448, %v1444
        %1513 = vmatprep.subr.bf16.mxu0 %v1450
        %1514 = vmatpush1.bf16.msra.mxu0 %v1449
        %1515 = vmatprep.subr.bf16.mxu0 %v1454
        %1516 = vmatpush1.bf16.msra.mxu0 %v1453
        %1517 = vmatprep.subr.bf16.mxu0 %v1458
        %1518 = vmatpush1.bf16.msra.mxu0 %v1457
        %1519 = vmatprep.subr.bf16.mxu0 %v1462
        %1520 = vmatpush1.bf16.msra.mxu0 %v1461
        %1521 = vmatprep.subr.bf16.mxu0 %v1466
        %1522 = vmatpush1.bf16.msra.mxu0 %v1465
        %1523 = vmatprep.subr.bf16.mxu0 %v1470
        %1524 = vmatpush1.bf16.msra.mxu0 %v1469
        %1525 = vmatprep.subr.bf16.mxu0 %v1474
        %1526 = vmatpush1.bf16.msra.mxu0 %v1473
        %1527 = vmatprep.subr.bf16.mxu0 %v1478
        %1528 = vmatpush1.bf16.msra.mxu0 %v1477
        %1529 = vmatprep.subr.bf16.mxu0 0
        %1530 = vmatpush1.bf16.msra.mxu0 0
        %1531 = vmatprep.subr.bf16.mxu0 0
        %1532 = vmatpush1.bf16.msra.mxu0 0
        %1533 = vmatprep.subr.bf16.mxu0 0
        %1534 = vmatpush1.bf16.msra.mxu0 0
        %1535 = vmatprep.subr.bf16.mxu0 0
        %1536 = vmatpush1.bf16.msra.mxu0 0
        %1537 = vmatprep.subr.bf16.mxu0 0
        %1538 = vmatpush1.bf16.msra.mxu0 0
        %1539 = vmatprep.subr.bf16.mxu0 0
        %1540 = vmatpush1.bf16.msra.mxu0 0
        %1541 = vmatprep.subr.bf16.mxu0 0
        %1542 = vmatpush1.bf16.msra.mxu0 0
        %1543 = vmatprep.subr.bf16.mxu0 0
        %1544 = vmatpush1.bf16.msra.mxu0 0
        %1545 = vmatprep.mubr.bf16.mxu0 0
        %1546 = vmatmul.mubr.bf16.gmra.mrb[0].mxu0 %v1320
        %v1547 = vpop.f32.mrb[0].mxu0
        %v1548 = vadd.f32 0.0, %v1547
        %v1549 = vpop.f32.mrb[0].mxu0
        %v1550 = vadd.f32 0.0, %v1549
        %v1551 = vpop.f32.mrb[0].mxu0
        %v1552 = vpop.f32.mrb[0].mxu0
        %1553 = vdwg.mxu0
        %1554 = vmatprep.subr.bf16.mxu0 %v1452
        %1555 = vmatpush1.bf16.msra.mxu0 %v1451
        %1556 = vmatprep.subr.bf16.mxu0 %v1456
        %1557 = vmatpush1.bf16.msra.mxu0 %v1455
        %1558 = vmatprep.subr.bf16.mxu0 %v1460
        %1559 = vmatpush1.bf16.msra.mxu0 %v1459
        %1560 = vmatprep.subr.bf16.mxu0 %v1464
        %1561 = vmatpush1.bf16.msra.mxu0 %v1463
        %1562 = vmatprep.subr.bf16.mxu0 %v1468
        %1563 = vmatpush1.bf16.msra.mxu0 %v1467
        %1564 = vmatprep.subr.bf16.mxu0 %v1472
        %1565 = vmatpush1.bf16.msra.mxu0 %v1471
        %1566 = vmatprep.subr.bf16.mxu0 %v1476
        %1567 = vmatpush1.bf16.msra.mxu0 %v1475
        %1568 = vmatprep.subr.bf16.mxu0 %v1480
        %1569 = vmatpush1.bf16.msra.mxu0 %v1479
        %1570 = vmatprep.subr.bf16.mxu0 0
        %1571 = vmatpush1.bf16.msra.mxu0 0
        %1572 = vmatprep.subr.bf16.mxu0 0
        %1573 = vmatpush1.bf16.msra.mxu0 0
        %1574 = vmatprep.subr.bf16.mxu0 0
        %1575 = vmatpush1.bf16.msra.mxu0 0
        %1576 = vmatprep.subr.bf16.mxu0 0
        %1577 = vmatpush1.bf16.msra.mxu0 0
        %1578 = vmatprep.subr.bf16.mxu0 0
        %1579 = vmatpush1.bf16.msra.mxu0 0
        %1580 = vmatprep.subr.bf16.mxu0 0
        %1581 = vmatpush1.bf16.msra.mxu0 0
        %1582 = vmatprep.subr.bf16.mxu0 0
        %1583 = vmatpush1.bf16.msra.mxu0 0
        %1584 = vmatprep.subr.bf16.mxu0 0
        %1585 = vmatpush1.bf16.msra.mxu0 0
        %1586 = vmatprep.mubr.bf16.mxu0 0
        %1587 = vmatmul.mubr.bf16.gmra.mrb[0].mxu0 %v1320
        %v1588 = vpop.f32.mrb[0].mxu0
        %v1589 = vadd.f32 0.0, %v1588
        %v1590 = vpop.f32.mrb[0].mxu0
        %v1591 = vadd.f32 0.0, %v1590
        %v1592 = vpop.f32.mrb[0].mxu0
        %v1593 = vpop.f32.mrb[0].mxu0
        %1594 = vdwg.mxu0
        %v1595 = vadd.f32 %v1316, %v1548
        %v1596 = vadd.f32 %v1317, %v1550
        %v1597 = vadd.f32 %v1318, %v1589
        %v1598 = vadd.f32 %v1319, %v1591
        %v1599 = vxor.u32 %v1595, 2147483648
        %v1600 = vmul.f32 %v1599, 1.442695
        %v1601 = vpow.pop %v1600
        %v1602 = vadd.f32 %v1601, 1.0
        %v1603 = vrcp.pop %v1602
        %v1604 = vmul.f32 1.0, %v1603
        %v1605 = vxor.u32 %v1596, 2147483648
        %v1606 = vmul.f32 %v1605, 1.442695
        %v1607 = vpow.pop %v1606
        %v1608 = vadd.f32 %v1607, 1.0
        %v1609 = vrcp.pop %v1608
        %v1610 = vmul.f32 1.0, %v1609
        %v1611 = vtanh.pop %v1597
        %v1612 = vxor.u32 %v1598, 2147483648
        %v1613 = vmul.f32 %v1612, 1.442695
        %v1614 = vpow.pop %v1613
        %v1615 = vadd.f32 %v1614, 1.0
        %v1616 = vrcp.pop %v1615
        %v1617 = vmul.f32 1.0, %v1616
        %v1618 = vld [vmem:[#allocation5] sm:$0xff]
        %v1619 = vmul.f32 %v1610, %v1618
        %v1620 = vmul.f32 %v1604, %v1611
        %v1621 = vadd.f32 %v1619, %v1620
        %v1622 = vtanh.pop %v1621
        %v1623 = vmul.f32 %v1617, %v1622
        %1624 = vst [vmem:[#allocation5] sm:$0xff] %v1621
        %1625 = vst [vmem:[#allocation4] sm:$0xff] %v1623
        %s1626 = scalar_lea.vmem [#allocation2], 16
        %1627 = vst [vmem:[%s1626] sm:$0xff] %v1623
        %v1628 = vld [vmem:[#allocation4] sm:$0xff]
        %s1629 = scalar_lea.vmem [#allocation3], 96
        %v1630 = vld [vmem:[%s1629] sm:$0xff]
        %v1631 = vld [vmem:[%s1629 + $0x8] sm:$0xff]
        %v1632 = vld [vmem:[%s1629 + $0x10] sm:$0xff]
        %v1633 = vld [vmem:[%s1629 + $0x18] sm:$0xff]
        %v1634 = vpack.c.bf16 %v1628, %v1628
        %v1635 = vld [vmem:[#allocation10] sm:$0xff]
        %v1636 = vld [vmem:[#allocation10 + $0x8] sm:$0xff]
        %v1637 = vld [vmem:[#allocation10 + $0x10] sm:$0xff]
        %v1638 = vld [vmem:[#allocation10 + $0x18] sm:$0xff]
        %v1639 = vld [vmem:[#allocation10 + $0x20] sm:$0xff]
        %v1640 = vld [vmem:[#allocation10 + $0x28] sm:$0xff]
        %v1641 = vld [vmem:[#allocation10 + $0x30] sm:$0xff]
        %v1642 = vld [vmem:[#allocation10 + $0x38] sm:$0xff]
        %v1643 = vld [vmem:[#allocation10 + $0x40] sm:$0xff]
        %v1644 = vld [vmem:[#allocation10 + $0x48] sm:$0xff]
        %v1645 = vld [vmem:[#allocation10 + $0x50] sm:$0xff]
        %v1646 = vld [vmem:[#allocation10 + $0x58] sm:$0xff]
        %v1647 = vld [vmem:[#allocation10 + $0x60] sm:$0xff]
        %v1648 = vld [vmem:[#allocation10 + $0x68] sm:$0xff]
        %v1649 = vld [vmem:[#allocation10 + $0x70] sm:$0xff]
        %v1650 = vld [vmem:[#allocation10 + $0x78] sm:$0xff]
        %v1651 = vld [vmem:[#allocation10 + $0x80] sm:$0xff]
        %v1652 = vld [vmem:[#allocation10 + $0x88] sm:$0xff]
        %v1653 = vld [vmem:[#allocation10 + $0x90] sm:$0xff]
        %v1654 = vld [vmem:[#allocation10 + $0x98] sm:$0xff]
        %v1655 = vld [vmem:[#allocation10 + $0xa0] sm:$0xff]
        %v1656 = vld [vmem:[#allocation10 + $0xa8] sm:$0xff]
        %v1657 = vld [vmem:[#allocation10 + $0xb0] sm:$0xff]
        %v1658 = vld [vmem:[#allocation10 + $0xb8] sm:$0xff]
        %v1659 = vld [vmem:[#allocation10 + $0xc0] sm:$0xff]
        %v1660 = vld [vmem:[#allocation10 + $0xc8] sm:$0xff]
        %v1661 = vld [vmem:[#allocation10 + $0xd0] sm:$0xff]
        %v1662 = vld [vmem:[#allocation10 + $0xd8] sm:$0xff]
        %v1663 = vld [vmem:[#allocation10 + $0xe0] sm:$0xff]
        %v1664 = vld [vmem:[#allocation10 + $0xe8] sm:$0xff]
        %v1665 = vld [vmem:[#allocation10 + $0xf0] sm:$0xff]
        %v1666 = vld [vmem:[#allocation10 + $0xf8] sm:$0xff]
        %v1699 = vunpack.c.l.b16 %v1635
        %v1700 = vunpack.c.h.b16 %v1635
        %v1701 = vunpack.c.l.b16 %v1636
        %v1702 = vunpack.c.h.b16 %v1636
        %v1703 = vunpack.c.l.b16 %v1637
        %v1704 = vunpack.c.h.b16 %v1637
        %v1705 = vunpack.c.l.b16 %v1638
        %v1706 = vunpack.c.h.b16 %v1638
        %v1707 = vunpack.c.l.b16 %v1639
        %v1708 = vunpack.c.h.b16 %v1639
        %v1709 = vunpack.c.l.b16 %v1640
        %v1710 = vunpack.c.h.b16 %v1640
        %v1711 = vunpack.c.l.b16 %v1641
        %v1712 = vunpack.c.h.b16 %v1641
        %v1713 = vunpack.c.l.b16 %v1642
        %v1714 = vunpack.c.h.b16 %v1642
        %v1715 = vunpack.c.l.b16 %v1643
        %v1716 = vunpack.c.h.b16 %v1643
        %v1717 = vunpack.c.l.b16 %v1644
        %v1718 = vunpack.c.h.b16 %v1644
        %v1719 = vunpack.c.l.b16 %v1645
        %v1720 = vunpack.c.h.b16 %v1645
        %v1721 = vunpack.c.l.b16 %v1646
        %v1722 = vunpack.c.h.b16 %v1646
        %v1723 = vunpack.c.l.b16 %v1647
        %v1724 = vunpack.c.h.b16 %v1647
        %v1725 = vunpack.c.l.b16 %v1648
        %v1726 = vunpack.c.h.b16 %v1648
        %v1727 = vunpack.c.l.b16 %v1649
        %v1728 = vunpack.c.h.b16 %v1649
        %v1729 = vunpack.c.l.b16 %v1650
        %v1730 = vunpack.c.h.b16 %v1650
        %v1731 = vunpack.c.l.b16 %v1651
        %v1732 = vunpack.c.h.b16 %v1651
        %v1733 = vunpack.c.l.b16 %v1652
        %v1734 = vunpack.c.h.b16 %v1652
        %v1735 = vunpack.c.l.b16 %v1653
        %v1736 = vunpack.c.h.b16 %v1653
        %v1737 = vunpack.c.l.b16 %v1654
        %v1738 = vunpack.c.h.b16 %v1654
        %v1739 = vunpack.c.l.b16 %v1655
        %v1740 = vunpack.c.h.b16 %v1655
        %v1741 = vunpack.c.l.b16 %v1656
        %v1742 = vunpack.c.h.b16 %v1656
        %v1743 = vunpack.c.l.b16 %v1657
        %v1744 = vunpack.c.h.b16 %v1657
        %v1745 = vunpack.c.l.b16 %v1658
        %v1746 = vunpack.c.h.b16 %v1658
        %v1747 = vunpack.c.l.b16 %v1659
        %v1748 = vunpack.c.h.b16 %v1659
        %v1749 = vunpack.c.l.b16 %v1660
        %v1750 = vunpack.c.h.b16 %v1660
        %v1751 = vunpack.c.l.b16 %v1661
        %v1752 = vunpack.c.h.b16 %v1661
        %v1753 = vunpack.c.l.b16 %v1662
        %v1754 = vunpack.c.h.b16 %v1662
        %v1755 = vunpack.c.l.b16 %v1663
        %v1756 = vunpack.c.h.b16 %v1663
        %v1757 = vunpack.c.l.b16 %v1664
        %v1758 = vunpack.c.h.b16 %v1664
        %v1759 = vunpack.c.l.b16 %v1665
        %v1760 = vunpack.c.h.b16 %v1665
        %v1761 = vunpack.c.l.b16 %v1666
        %v1762 = vunpack.c.h.b16 %v1666
        %v1763 = vpack.c.b16 %v1703, %v1699
        %v1764 = vpack.c.b16 %v1704, %v1700
        %v1765 = vpack.c.b16 %v1705, %v1701
        %v1766 = vpack.c.b16 %v1706, %v1702
        %v1767 = vpack.c.b16 %v1711, %v1707
        %v1768 = vpack.c.b16 %v1712, %v1708
        %v1769 = vpack.c.b16 %v1713, %v1709
        %v1770 = vpack.c.b16 %v1714, %v1710
        %v1771 = vpack.c.b16 %v1719, %v1715
        %v1772 = vpack.c.b16 %v1720, %v1716
        %v1773 = vpack.c.b16 %v1721, %v1717
        %v1774 = vpack.c.b16 %v1722, %v1718
        %v1775 = vpack.c.b16 %v1727, %v1723
        %v1776 = vpack.c.b16 %v1728, %v1724
        %v1777 = vpack.c.b16 %v1729, %v1725
        %v1778 = vpack.c.b16 %v1730, %v1726
        %v1779 = vpack.c.b16 %v1735, %v1731
        %v1780 = vpack.c.b16 %v1736, %v1732
        %v1781 = vpack.c.b16 %v1737, %v1733
        %v1782 = vpack.c.b16 %v1738, %v1734
        %v1783 = vpack.c.b16 %v1743, %v1739
        %v1784 = vpack.c.b16 %v1744, %v1740
        %v1785 = vpack.c.b16 %v1745, %v1741
        %v1786 = vpack.c.b16 %v1746, %v1742
        %v1787 = vpack.c.b16 %v1751, %v1747
        %v1788 = vpack.c.b16 %v1752, %v1748
        %v1789 = vpack.c.b16 %v1753, %v1749
        %v1790 = vpack.c.b16 %v1754, %v1750
        %v1791 = vpack.c.b16 %v1759, %v1755
        %v1792 = vpack.c.b16 %v1760, %v1756
        %v1793 = vpack.c.b16 %v1761, %v1757
        %v1794 = vpack.c.b16 %v1762, %v1758
        %1827 = vmatprep.subr.bf16.mxu0 %v1764
        %1828 = vmatpush1.bf16.msra.mxu0 %v1763
        %1829 = vmatprep.subr.bf16.mxu0 %v1768
        %1830 = vmatpush1.bf16.msra.mxu0 %v1767
        %1831 = vmatprep.subr.bf16.mxu0 %v1772
        %1832 = vmatpush1.bf16.msra.mxu0 %v1771
        %1833 = vmatprep.subr.bf16.mxu0 %v1776
        %1834 = vmatpush1.bf16.msra.mxu0 %v1775
        %1835 = vmatprep.subr.bf16.mxu0 %v1780
        %1836 = vmatpush1.bf16.msra.mxu0 %v1779
        %1837 = vmatprep.subr.bf16.mxu0 %v1784
        %1838 = vmatpush1.bf16.msra.mxu0 %v1783
        %1839 = vmatprep.subr.bf16.mxu0 %v1788
        %1840 = vmatpush1.bf16.msra.mxu0 %v1787
        %1841 = vmatprep.subr.bf16.mxu0 %v1792
        %1842 = vmatpush1.bf16.msra.mxu0 %v1791
        %1843 = vmatprep.subr.bf16.mxu0 0
        %1844 = vmatpush1.bf16.msra.mxu0 0
        %1845 = vmatprep.subr.bf16.mxu0 0
        %1846 = vmatpush1.bf16.msra.mxu0 0
        %1847 = vmatprep.subr.bf16.mxu0 0
        %1848 = vmatpush1.bf16.msra.mxu0 0
        %1849 = vmatprep.subr.bf16.mxu0 0
        %1850 = vmatpush1.bf16.msra.mxu0 0
        %1851 = vmatprep.subr.bf16.mxu0 0
        %1852 = vmatpush1.bf16.msra.mxu0 0
        %1853 = vmatprep.subr.bf16.mxu0 0
        %1854 = vmatpush1.bf16.msra.mxu0 0
        %1855 = vmatprep.subr.bf16.mxu0 0
        %1856 = vmatpush1.bf16.msra.mxu0 0
        %1857 = vmatprep.subr.bf16.mxu0 0
        %1858 = vmatpush1.bf16.msra.mxu0 0
        %1859 = vmatprep.mubr.bf16.mxu0 0
        %1860 = vmatmul.mubr.bf16.gmra.mrb[0].mxu0 %v1634
        %v1861 = vpop.f32.mrb[0].mxu0
        %v1862 = vadd.f32 0.0, %v1861
        %v1863 = vpop.f32.mrb[0].mxu0
        %v1864 = vadd.f32 0.0, %v1863
        %v1865 = vpop.f32.mrb[0].mxu0
        %v1866 = vpop.f32.mrb[0].mxu0
        %1867 = vdwg.mxu0
        %1868 = vmatprep.subr.bf16.mxu0 %v1766
        %1869 = vmatpush1.bf16.msra.mxu0 %v1765
        %1870 = vmatprep.subr.bf16.mxu0 %v1770
        %1871 = vmatpush1.bf16.msra.mxu0 %v1769
        %1872 = vmatprep.subr.bf16.mxu0 %v1774
        %1873 = vmatpush1.bf16.msra.mxu0 %v1773
        %1874 = vmatprep.subr.bf16.mxu0 %v1778
        %1875 = vmatpush1.bf16.msra.mxu0 %v1777
        %1876 = vmatprep.subr.bf16.mxu0 %v1782
        %1877 = vmatpush1.bf16.msra.mxu0 %v1781
        %1878 = vmatprep.subr.bf16.mxu0 %v1786
        %1879 = vmatpush1.bf16.msra.mxu0 %v1785
        %1880 = vmatprep.subr.bf16.mxu0 %v1790
        %1881 = vmatpush1.bf16.msra.mxu0 %v1789
        %1882 = vmatprep.subr.bf16.mxu0 %v1794
        %1883 = vmatpush1.bf16.msra.mxu0 %v1793
        %1884 = vmatprep.subr.bf16.mxu0 0
        %1885 = vmatpush1.bf16.msra.mxu0 0
        %1886 = vmatprep.subr.bf16.mxu0 0
        %1887 = vmatpush1.bf16.msra.mxu0 0
        %1888 = vmatprep.subr.bf16.mxu0 0
        %1889 = vmatpush1.bf16.msra.mxu0 0
        %1890 = vmatprep.subr.bf16.mxu0 0
        %1891 = vmatpush1.bf16.msra.mxu0 0
        %1892 = vmatprep.subr.bf16.mxu0 0
        %1893 = vmatpush1.bf16.msra.mxu0 0
        %1894 = vmatprep.subr.bf16.mxu0 0
        %1895 = vmatpush1.bf16.msra.mxu0 0
        %1896 = vmatprep.subr.bf16.mxu0 0
        %1897 = vmatpush1.bf16.msra.mxu0 0
        %1898 = vmatprep.subr.bf16.mxu0 0
        %1899 = vmatpush1.bf16.msra.mxu0 0
        %1900 = vmatprep.mubr.bf16.mxu0 0
        %1901 = vmatmul.mubr.bf16.gmra.mrb[0].mxu0 %v1634
        %v1902 = vpop.f32.mrb[0].mxu0
        %v1903 = vadd.f32 0.0, %v1902
        %v1904 = vpop.f32.mrb[0].mxu0
        %v1905 = vadd.f32 0.0, %v1904
        %v1906 = vpop.f32.mrb[0].mxu0
        %v1907 = vpop.f32.mrb[0].mxu0
        %1908 = vdwg.mxu0
        %v1909 = vadd.f32 %v1630, %v1862
        %v1910 = vadd.f32 %v1631, %v1864
        %v1911 = vadd.f32 %v1632, %v1903
        %v1912 = vadd.f32 %v1633, %v1905
        %v1913 = vxor.u32 %v1909, 2147483648
        %v1914 = vmul.f32 %v1913, 1.442695
        %v1915 = vpow.pop %v1914
        %v1916 = vadd.f32 %v1915, 1.0
        %v1917 = vrcp.pop %v1916
        %v1918 = vmul.f32 1.0, %v1917
        %v1919 = vxor.u32 %v1910, 2147483648
        %v1920 = vmul.f32 %v1919, 1.442695
        %v1921 = vpow.pop %v1920
        %v1922 = vadd.f32 %v1921, 1.0
        %v1923 = vrcp.pop %v1922
        %v1924 = vmul.f32 1.0, %v1923
        %v1925 = vtanh.pop %v1911
        %v1926 = vxor.u32 %v1912, 2147483648
        %v1927 = vmul.f32 %v1926, 1.442695
        %v1928 = vpow.pop %v1927
        %v1929 = vadd.f32 %v1928, 1.0
        %v1930 = vrcp.pop %v1929
        %v1931 = vmul.f32 1.0, %v1930
        %v1932 = vld [vmem:[#allocation5] sm:$0xff]
        %v1933 = vmul.f32 %v1924, %v1932
        %v1934 = vmul.f32 %v1918, %v1925
        %v1935 = vadd.f32 %v1933, %v1934
        %v1936 = vtanh.pop %v1935
        %v1937 = vmul.f32 %v1931, %v1936
        %1938 = vst [vmem:[#allocation5] sm:$0xff] %v1935
        %1939 = vst [vmem:[#allocation4] sm:$0xff] %v1937
        %s1940 = scalar_lea.vmem [#allocation2], 24
        %1941 = vst [vmem:[%s1940] sm:$0xff] %v1937
        %v1942 = vld [vmem:[#allocation2] sm:$0xff]
        %v1943 = vld [vmem:[#allocation2 + $0x8] sm:$0xff]
        %v1944 = vld [vmem:[#allocation2 + $0x10] sm:$0xff]
        %v1945 = vld [vmem:[#allocation2 + $0x18] sm:$0xff]
        %v1946 = vpack.c.bf16 %v1943, %v1942
        %v1947 = vpack.c.bf16 %v1945, %v1944
        %v1948 = vld [vmem:[#allocation8] sm:$0xff]
        %v1949 = vld [vmem:[#allocation8 + $0x8] sm:$0xff]
        %v1950 = vld [vmem:[#allocation8 + $0x10] sm:$0xff]
        %v1951 = vld [vmem:[#allocation8 + $0x18] sm:$0xff]
        %v1952 = vld [vmem:[#allocation8 + $0x20] sm:$0xff]
        %v1953 = vld [vmem:[#allocation8 + $0x28] sm:$0xff]
        %v1954 = vld [vmem:[#allocation8 + $0x30] sm:$0xff]
        %v1955 = vld [vmem:[#allocation8 + $0x38] sm:$0xff]
        %v1956 = vld [vmem:[#allocation8 + $0x40] sm:$0xff]
        %v1957 = vld [vmem:[#allocation8 + $0x48] sm:$0xff]
        %v1958 = vld [vmem:[#allocation8 + $0x50] sm:$0xff]
        %v1959 = vld [vmem:[#allocation8 + $0x58] sm:$0xff]
        %v1960 = vld [vmem:[#allocation8 + $0x60] sm:$0xff]
        %v1961 = vld [vmem:[#allocation8 + $0x68] sm:$0xff]
        %v1962 = vld [vmem:[#allocation8 + $0x70] sm:$0xff]
        %v1963 = vld [vmem:[#allocation8 + $0x78] sm:$0xff]
        %v1964 = vld [vmem:[#allocation8 + $0x80] sm:$0xff]
        %v1965 = vld [vmem:[#allocation8 + $0x88] sm:$0xff]
        %v1966 = vld [vmem:[#allocation8 + $0x90] sm:$0xff]
        %v1967 = vld [vmem:[#allocation8 + $0x98] sm:$0xff]
        %v1968 = vld [vmem:[#allocation8 + $0xa0] sm:$0xff]
        %v1969 = vld [vmem:[#allocation8 + $0xa8] sm:$0xff]
        %v1970 = vld [vmem:[#allocation8 + $0xb0] sm:$0xff]
        %v1971 = vld [vmem:[#allocation8 + $0xb8] sm:$0xff]
        %v1972 = vld [vmem:[#allocation8 + $0xc0] sm:$0xff]
        %v1973 = vld [vmem:[#allocation8 + $0xc8] sm:$0xff]
        %v1974 = vld [vmem:[#allocation8 + $0xd0] sm:$0xff]
        %v1975 = vld [vmem:[#allocation8 + $0xd8] sm:$0xff]
        %v1976 = vld [vmem:[#allocation8 + $0xe0] sm:$0xff]
        %v1977 = vld [vmem:[#allocation8 + $0xe8] sm:$0xff]
        %v1978 = vld [vmem:[#allocation8 + $0xf0] sm:$0xff]
        %v1979 = vld [vmem:[#allocation8 + $0xf8] sm:$0xff]
        %v1980 = vld [vmem:[%s4] sm:$0xf]
        %v1982 = vlaneseq
        %v1983 = vshrl.u32 %v1982, 7
        %v1984 = vsub.s32 0, %v1983
        %v1985 = vrot.slane %v1980, %v1984
        %v1986 = vlaneseq
        %v1987 = vshrl.u32 %v1986, 7
        %v1988 = vsub.s32 1, %v1987
        %v1989 = vrot.slane %v1980, %v1988
        %v1990 = vlaneseq
        %v1991 = vshrl.u32 %v1990, 7
        %v1992 = vsub.s32 2, %v1991
        %v1993 = vrot.slane %v1980, %v1992
        %v1994 = vlaneseq
        %v1995 = vshrl.u32 %v1994, 7
        %v1996 = vsub.s32 3, %v1995
        %v1997 = vrot.slane %v1980, %v1996
        %v2034 = vunpack.c.l.b16 %v1948
        %v2035 = vunpack.c.h.b16 %v1948
        %v2036 = vunpack.c.l.b16 %v1949
        %v2037 = vunpack.c.h.b16 %v1949
        %v2038 = vunpack.c.l.b16 %v1950
        %v2039 = vunpack.c.h.b16 %v1950
        %v2040 = vunpack.c.l.b16 %v1951
        %v2041 = vunpack.c.h.b16 %v1951
        %v2042 = vunpack.c.l.b16 %v1952
        %v2043 = vunpack.c.h.b16 %v1952
        %v2044 = vunpack.c.l.b16 %v1953
        %v2045 = vunpack.c.h.b16 %v1953
        %v2046 = vunpack.c.l.b16 %v1954
        %v2047 = vunpack.c.h.b16 %v1954
        %v2048 = vunpack.c.l.b16 %v1955
        %v2049 = vunpack.c.h.b16 %v1955
        %v2050 = vunpack.c.l.b16 %v1956
        %v2051 = vunpack.c.h.b16 %v1956
        %v2052 = vunpack.c.l.b16 %v1957
        %v2053 = vunpack.c.h.b16 %v1957
        %v2054 = vunpack.c.l.b16 %v1958
        %v2055 = vunpack.c.h.b16 %v1958
        %v2056 = vunpack.c.l.b16 %v1959
        %v2057 = vunpack.c.h.b16 %v1959
        %v2058 = vunpack.c.l.b16 %v1960
        %v2059 = vunpack.c.h.b16 %v1960
        %v2060 = vunpack.c.l.b16 %v1961
        %v2061 = vunpack.c.h.b16 %v1961
        %v2062 = vunpack.c.l.b16 %v1962
        %v2063 = vunpack.c.h.b16 %v1962
        %v2064 = vunpack.c.l.b16 %v1963
        %v2065 = vunpack.c.h.b16 %v1963
        %v2066 = vunpack.c.l.b16 %v1964
        %v2067 = vunpack.c.h.b16 %v1964
        %v2068 = vunpack.c.l.b16 %v1965
        %v2069 = vunpack.c.h.b16 %v1965
        %v2070 = vunpack.c.l.b16 %v1966
        %v2071 = vunpack.c.h.b16 %v1966
        %v2072 = vunpack.c.l.b16 %v1967
        %v2073 = vunpack.c.h.b16 %v1967
        %v2074 = vunpack.c.l.b16 %v1968
        %v2075 = vunpack.c.h.b16 %v1968
        %v2076 = vunpack.c.l.b16 %v1969
        %v2077 = vunpack.c.h.b16 %v1969
        %v2078 = vunpack.c.l.b16 %v1970
        %v2079 = vunpack.c.h.b16 %v1970
        %v2080 = vunpack.c.l.b16 %v1971
        %v2081 = vunpack.c.h.b16 %v1971
        %v2082 = vunpack.c.l.b16 %v1972
        %v2083 = vunpack.c.h.b16 %v1972
        %v2084 = vunpack.c.l.b16 %v1973
        %v2085 = vunpack.c.h.b16 %v1973
        %v2086 = vunpack.c.l.b16 %v1974
        %v2087 = vunpack.c.h.b16 %v1974
        %v2088 = vunpack.c.l.b16 %v1975
        %v2089 = vunpack.c.h.b16 %v1975
        %v2090 = vunpack.c.l.b16 %v1976
        %v2091 = vunpack.c.h.b16 %v1976
        %v2092 = vunpack.c.l.b16 %v1977
        %v2093 = vunpack.c.h.b16 %v1977
        %v2094 = vunpack.c.l.b16 %v1978
        %v2095 = vunpack.c.h.b16 %v1978
        %v2096 = vunpack.c.l.b16 %v1979
        %v2097 = vunpack.c.h.b16 %v1979
        %v2098 = vpack.c.b16 %v2038, %v2034
        %v2099 = vpack.c.b16 %v2039, %v2035
        %v2100 = vpack.c.b16 %v2040, %v2036
        %v2101 = vpack.c.b16 %v2041, %v2037
        %v2102 = vpack.c.b16 %v2046, %v2042
        %v2103 = vpack.c.b16 %v2047, %v2043
        %v2104 = vpack.c.b16 %v2048, %v2044
        %v2105 = vpack.c.b16 %v2049, %v2045
        %v2106 = vpack.c.b16 %v2054, %v2050
        %v2107 = vpack.c.b16 %v2055, %v2051
        %v2108 = vpack.c.b16 %v2056, %v2052
        %v2109 = vpack.c.b16 %v2057, %v2053
        %v2110 = vpack.c.b16 %v2062, %v2058
        %v2111 = vpack.c.b16 %v2063, %v2059
        %v2112 = vpack.c.b16 %v2064, %v2060
        %v2113 = vpack.c.b16 %v2065, %v2061
        %v2114 = vpack.c.b16 %v2070, %v2066
        %v2115 = vpack.c.b16 %v2071, %v2067
        %v2116 = vpack.c.b16 %v2072, %v2068
        %v2117 = vpack.c.b16 %v2073, %v2069
        %v2118 = vpack.c.b16 %v2078, %v2074
        %v2119 = vpack.c.b16 %v2079, %v2075
        %v2120 = vpack.c.b16 %v2080, %v2076
        %v2121 = vpack.c.b16 %v2081, %v2077
        %v2122 = vpack.c.b16 %v2086, %v2082
        %v2123 = vpack.c.b16 %v2087, %v2083
        %v2124 = vpack.c.b16 %v2088, %v2084
        %v2125 = vpack.c.b16 %v2089, %v2085
        %v2126 = vpack.c.b16 %v2094, %v2090
        %v2127 = vpack.c.b16 %v2095, %v2091
        %v2128 = vpack.c.b16 %v2096, %v2092
        %v2129 = vpack.c.b16 %v2097, %v2093
        %2162 = vmatprep.subr.bf16.mxu0 %v2099
        %2163 = vmatpush1.bf16.msra.mxu0 %v2098
        %2164 = vmatprep.subr.bf16.mxu0 %v2103
        %2165 = vmatpush1.bf16.msra.mxu0 %v2102
        %2166 = vmatprep.subr.bf16.mxu0 %v2107
        %2167 = vmatpush1.bf16.msra.mxu0 %v2106
        %2168 = vmatprep.subr.bf16.mxu0 %v2111
        %2169 = vmatpush1.bf16.msra.mxu0 %v2110
        %2170 = vmatprep.subr.bf16.mxu0 %v2115
        %2171 = vmatpush1.bf16.msra.mxu0 %v2114
        %2172 = vmatprep.subr.bf16.mxu0 %v2119
        %2173 = vmatpush1.bf16.msra.mxu0 %v2118
        %2174 = vmatprep.subr.bf16.mxu0 %v2123
        %2175 = vmatpush1.bf16.msra.mxu0 %v2122
        %2176 = vmatprep.subr.bf16.mxu0 %v2127
        %2177 = vmatpush1.bf16.msra.mxu0 %v2126
        %2178 = vmatprep.subr.bf16.mxu0 0
        %2179 = vmatpush1.bf16.msra.mxu0 0
        %2180 = vmatprep.subr.bf16.mxu0 0
        %2181 = vmatpush1.bf16.msra.mxu0 0
        %2182 = vmatprep.subr.bf16.mxu0 0
        %2183 = vmatpush1.bf16.msra.mxu0 0
        %2184 = vmatprep.subr.bf16.mxu0 0
        %2185 = vmatpush1.bf16.msra.mxu0 0
        %2186 = vmatprep.subr.bf16.mxu0 0
        %2187 = vmatpush1.bf16.msra.mxu0 0
        %2188 = vmatprep.subr.bf16.mxu0 0
        %2189 = vmatpush1.bf16.msra.mxu0 0
        %2190 = vmatprep.subr.bf16.mxu0 0
        %2191 = vmatpush1.bf16.msra.mxu0 0
        %2192 = vmatprep.subr.bf16.mxu0 0
        %2193 = vmatpush1.bf16.msra.mxu0 0
        %2194 = vmatprep.mubr.bf16.mxu0 0
        %2195 = vmatmul.mubr.bf16.gmra.mrb[0].mxu0 %v1946
        %v2196 = vpop.f32.mrb[0].mxu0
        %v2197 = vadd.f32 %v1985, %v2196
        %v2198 = vpop.f32.mrb[0].mxu0
        %v2199 = vadd.f32 %v1989, %v2198
        %v2200 = vpop.f32.mrb[0].mxu0
        %v2201 = vadd.f32 %v1985, %v2200
        %v2202 = vpop.f32.mrb[0].mxu0
        %v2203 = vadd.f32 %v1989, %v2202
        %2204 = vmatprep.mubr.bf16.mxu0 0
        %2205 = vmatmul.mubr.bf16.gmra.mrb[0].mxu0 %v1947
        %v2206 = vpop.f32.mrb[0].mxu0
        %v2207 = vadd.f32 %v1985, %v2206
        %v2208 = vpop.f32.mrb[0].mxu0
        %v2209 = vadd.f32 %v1989, %v2208
        %v2210 = vpop.f32.mrb[0].mxu0
        %v2211 = vadd.f32 %v1985, %v2210
        %v2212 = vpop.f32.mrb[0].mxu0
        %v2213 = vadd.f32 %v1989, %v2212
        %2214 = vdwg.mxu0
        %2215 = vmatprep.subr.bf16.mxu0 %v2101
        %2216 = vmatpush1.bf16.msra.mxu0 %v2100
        %2217 = vmatprep.subr.bf16.mxu0 %v2105
        %2218 = vmatpush1.bf16.msra.mxu0 %v2104
        %2219 = vmatprep.subr.bf16.mxu0 %v2109
        %2220 = vmatpush1.bf16.msra.mxu0 %v2108
        %2221 = vmatprep.subr.bf16.mxu0 %v2113
        %2222 = vmatpush1.bf16.msra.mxu0 %v2112
        %2223 = vmatprep.subr.bf16.mxu0 %v2117
        %2224 = vmatpush1.bf16.msra.mxu0 %v2116
        %2225 = vmatprep.subr.bf16.mxu0 %v2121
        %2226 = vmatpush1.bf16.msra.mxu0 %v2120
        %2227 = vmatprep.subr.bf16.mxu0 %v2125
        %2228 = vmatpush1.bf16.msra.mxu0 %v2124
        %2229 = vmatprep.subr.bf16.mxu0 %v2129
        %2230 = vmatpush1.bf16.msra.mxu0 %v2128
        %2231 = vmatprep.subr.bf16.mxu0 0
        %2232 = vmatpush1.bf16.msra.mxu0 0
        %2233 = vmatprep.subr.bf16.mxu0 0
        %2234 = vmatpush1.bf16.msra.mxu0 0
        %2235 = vmatprep.subr.bf16.mxu0 0
        %2236 = vmatpush1.bf16.msra.mxu0 0
        %2237 = vmatprep.subr.bf16.mxu0 0
        %2238 = vmatpush1.bf16.msra.mxu0 0
        %2239 = vmatprep.subr.bf16.mxu0 0
        %2240 = vmatpush1.bf16.msra.mxu0 0
        %2241 = vmatprep.subr.bf16.mxu0 0
        %2242 = vmatpush1.bf16.msra.mxu0 0
        %2243 = vmatprep.subr.bf16.mxu0 0
        %2244 = vmatpush1.bf16.msra.mxu0 0
        %2245 = vmatprep.subr.bf16.mxu0 0
        %2246 = vmatpush1.bf16.msra.mxu0 0
        %2247 = vmatprep.mubr.bf16.mxu0 0
        %2248 = vmatmul.mubr.bf16.gmra.mrb[0].mxu0 %v1946
        %v2249 = vpop.f32.mrb[0].mxu0
        %v2250 = vadd.f32 %v1993, %v2249
        %v2251 = vpop.f32.mrb[0].mxu0
        %v2252 = vadd.f32 %v1997, %v2251
        %v2253 = vpop.f32.mrb[0].mxu0
        %v2254 = vadd.f32 %v1993, %v2253
        %v2255 = vpop.f32.mrb[0].mxu0
        %v2256 = vadd.f32 %v1997, %v2255
        %2257 = vmatprep.mubr.bf16.mxu0 0
        %2258 = vmatmul.mubr.bf16.gmra.mrb[0].mxu0 %v1947
        %v2259 = vpop.f32.mrb[0].mxu0
        %v2260 = vadd.f32 %v1993, %v2259
        %v2261 = vpop.f32.mrb[0].mxu0
        %v2262 = vadd.f32 %v1997, %v2261
        %v2263 = vpop.f32.mrb[0].mxu0
        %v2264 = vadd.f32 %v1993, %v2263
        %v2265 = vpop.f32.mrb[0].mxu0
        %v2266 = vadd.f32 %v1997, %v2265
        %2267 = vdwg.mxu0
        %2268 = vst [vmem:[#allocation3] sm:$0xff] %v2197
        %2269 = vst [vmem:[#allocation3 + $0x8] sm:$0xff] %v2199
        %2270 = vst [vmem:[#allocation3 + $0x10] sm:$0xff] %v2250
        %2271 = vst [vmem:[#allocation3 + $0x18] sm:$0xff] %v2252
        %2272 = vst [vmem:[#allocation3 + $0x20] sm:$0xff] %v2201
        %2273 = vst [vmem:[#allocation3 + $0x28] sm:$0xff] %v2203
        %2274 = vst [vmem:[#allocation3 + $0x30] sm:$0xff] %v2254
        %2275 = vst [vmem:[#allocation3 + $0x38] sm:$0xff] %v2256
        %2276 = vst [vmem:[#allocation3 + $0x40] sm:$0xff] %v2207
        %2277 = vst [vmem:[#allocation3 + $0x48] sm:$0xff] %v2209
        %2278 = vst [vmem:[#allocation3 + $0x50] sm:$0xff] %v2260
        %2279 = vst [vmem:[#allocation3 + $0x58] sm:$0xff] %v2262
        %2280 = vst [vmem:[#allocation3 + $0x60] sm:$0xff] %v2211
        %2281 = vst [vmem:[#allocation3 + $0x68] sm:$0xff] %v2213
        %2282 = vst [vmem:[#allocation3 + $0x70] sm:$0xff] %v2264
        %2283 = vst [vmem:[#allocation3 + $0x78] sm:$0xff] %v2266
        %s2284 = scalar_lea.vmem [#allocation4], 8
        %v2285 = vld [vmem:[%s2284] sm:$0xff]
        %v2286 = vld [vmem:[#allocation3] sm:$0xff]
        %v2287 = vld [vmem:[#allocation3 + $0x8] sm:$0xff]
        %v2288 = vld [vmem:[#allocation3 + $0x10] sm:$0xff]
        %v2289 = vld [vmem:[#allocation3 + $0x18] sm:$0xff]
        %v2290 = vpack.c.bf16 %v2285, %v2285
        %s2291 = scalar_lea.vmem [#allocation10], 256
        %v2292 = vld [vmem:[%s2291] sm:$0xff]
        %v2293 = vld [vmem:[%s2291 + $0x8] sm:$0xff]
        %v2294 = vld [vmem:[%s2291 + $0x10] sm:$0xff]
        %v2295 = vld [vmem:[%s2291 + $0x18] sm:$0xff]
        %v2296 = vld [vmem:[%s2291 + $0x20] sm:$0xff]
        %v2297 = vld [vmem:[%s2291 + $0x28] sm:$0xff]
        %v2298 = vld [vmem:[%s2291 + $0x30] sm:$0xff]
        %v2299 = vld [vmem:[%s2291 + $0x38] sm:$0xff]
        %v2300 = vld [vmem:[%s2291 + $0x40] sm:$0xff]
        %v2301 = vld [vmem:[%s2291 + $0x48] sm:$0xff]
        %v2302 = vld [vmem:[%s2291 + $0x50] sm:$0xff]
        %v2303 = vld [vmem:[%s2291 + $0x58] sm:$0xff]
        %v2304 = vld [vmem:[%s2291 + $0x60] sm:$0xff]
        %v2305 = vld [vmem:[%s2291 + $0x68] sm:$0xff]
        %v2306 = vld [vmem:[%s2291 + $0x70] sm:$0xff]
        %v2307 = vld [vmem:[%s2291 + $0x78] sm:$0xff]
        %v2308 = vld [vmem:[%s2291 + $0x80] sm:$0xff]
        %v2309 = vld [vmem:[%s2291 + $0x88] sm:$0xff]
        %v2310 = vld [vmem:[%s2291 + $0x90] sm:$0xff]
        %v2311 = vld [vmem:[%s2291 + $0x98] sm:$0xff]
        %v2312 = vld [vmem:[%s2291 + $0xa0] sm:$0xff]
        %v2313 = vld [vmem:[%s2291 + $0xa8] sm:$0xff]
        %v2314 = vld [vmem:[%s2291 + $0xb0] sm:$0xff]
        %v2315 = vld [vmem:[%s2291 + $0xb8] sm:$0xff]
        %v2316 = vld [vmem:[%s2291 + $0xc0] sm:$0xff]
        %v2317 = vld [vmem:[%s2291 + $0xc8] sm:$0xff]
        %v2318 = vld [vmem:[%s2291 + $0xd0] sm:$0xff]
        %v2319 = vld [vmem:[%s2291 + $0xd8] sm:$0xff]
        %v2320 = vld [vmem:[%s2291 + $0xe0] sm:$0xff]
        %v2321 = vld [vmem:[%s2291 + $0xe8] sm:$0xff]
        %v2322 = vld [vmem:[%s2291 + $0xf0] sm:$0xff]
        %v2323 = vld [vmem:[%s2291 + $0xf8] sm:$0xff]
        %v2356 = vunpack.c.l.b16 %v2292
        %v2357 = vunpack.c.h.b16 %v2292
        %v2358 = vunpack.c.l.b16 %v2293
        %v2359 = vunpack.c.h.b16 %v2293
        %v2360 = vunpack.c.l.b16 %v2294
        %v2361 = vunpack.c.h.b16 %v2294
        %v2362 = vunpack.c.l.b16 %v2295
        %v2363 = vunpack.c.h.b16 %v2295
        %v2364 = vunpack.c.l.b16 %v2296
        %v2365 = vunpack.c.h.b16 %v2296
        %v2366 = vunpack.c.l.b16 %v2297
        %v2367 = vunpack.c.h.b16 %v2297
        %v2368 = vunpack.c.l.b16 %v2298
        %v2369 = vunpack.c.h.b16 %v2298
        %v2370 = vunpack.c.l.b16 %v2299
        %v2371 = vunpack.c.h.b16 %v2299
        %v2372 = vunpack.c.l.b16 %v2300
        %v2373 = vunpack.c.h.b16 %v2300
        %v2374 = vunpack.c.l.b16 %v2301
        %v2375 = vunpack.c.h.b16 %v2301
        %v2376 = vunpack.c.l.b16 %v2302
        %v2377 = vunpack.c.h.b16 %v2302
        %v2378 = vunpack.c.l.b16 %v2303
        %v2379 = vunpack.c.h.b16 %v2303
        %v2380 = vunpack.c.l.b16 %v2304
        %v2381 = vunpack.c.h.b16 %v2304
        %v2382 = vunpack.c.l.b16 %v2305
        %v2383 = vunpack.c.h.b16 %v2305
        %v2384 = vunpack.c.l.b16 %v2306
        %v2385 = vunpack.c.h.b16 %v2306
        %v2386 = vunpack.c.l.b16 %v2307
        %v2387 = vunpack.c.h.b16 %v2307
        %v2388 = vunpack.c.l.b16 %v2308
        %v2389 = vunpack.c.h.b16 %v2308
        %v2390 = vunpack.c.l.b16 %v2309
        %v2391 = vunpack.c.h.b16 %v2309
        %v2392 = vunpack.c.l.b16 %v2310
        %v2393 = vunpack.c.h.b16 %v2310
        %v2394 = vunpack.c.l.b16 %v2311
        %v2395 = vunpack.c.h.b16 %v2311
        %v2396 = vunpack.c.l.b16 %v2312
        %v2397 = vunpack.c.h.b16 %v2312
        %v2398 = vunpack.c.l.b16 %v2313
        %v2399 = vunpack.c.h.b16 %v2313
        %v2400 = vunpack.c.l.b16 %v2314
        %v2401 = vunpack.c.h.b16 %v2314
        %v2402 = vunpack.c.l.b16 %v2315
        %v2403 = vunpack.c.h.b16 %v2315
        %v2404 = vunpack.c.l.b16 %v2316
        %v2405 = vunpack.c.h.b16 %v2316
        %v2406 = vunpack.c.l.b16 %v2317
        %v2407 = vunpack.c.h.b16 %v2317
        %v2408 = vunpack.c.l.b16 %v2318
        %v2409 = vunpack.c.h.b16 %v2318
        %v2410 = vunpack.c.l.b16 %v2319
        %v2411 = vunpack.c.h.b16 %v2319
        %v2412 = vunpack.c.l.b16 %v2320
        %v2413 = vunpack.c.h.b16 %v2320
        %v2414 = vunpack.c.l.b16 %v2321
        %v2415 = vunpack.c.h.b16 %v2321
        %v2416 = vunpack.c.l.b16 %v2322
        %v2417 = vunpack.c.h.b16 %v2322
        %v2418 = vunpack.c.l.b16 %v2323
        %v2419 = vunpack.c.h.b16 %v2323
        %v2420 = vpack.c.b16 %v2360, %v2356
        %v2421 = vpack.c.b16 %v2361, %v2357
        %v2422 = vpack.c.b16 %v2362, %v2358
        %v2423 = vpack.c.b16 %v2363, %v2359
        %v2424 = vpack.c.b16 %v2368, %v2364
        %v2425 = vpack.c.b16 %v2369, %v2365
        %v2426 = vpack.c.b16 %v2370, %v2366
        %v2427 = vpack.c.b16 %v2371, %v2367
        %v2428 = vpack.c.b16 %v2376, %v2372
        %v2429 = vpack.c.b16 %v2377, %v2373
        %v2430 = vpack.c.b16 %v2378, %v2374
        %v2431 = vpack.c.b16 %v2379, %v2375
        %v2432 = vpack.c.b16 %v2384, %v2380
        %v2433 = vpack.c.b16 %v2385, %v2381
        %v2434 = vpack.c.b16 %v2386, %v2382
        %v2435 = vpack.c.b16 %v2387, %v2383
        %v2436 = vpack.c.b16 %v2392, %v2388
        %v2437 = vpack.c.b16 %v2393, %v2389
        %v2438 = vpack.c.b16 %v2394, %v2390
        %v2439 = vpack.c.b16 %v2395, %v2391
        %v2440 = vpack.c.b16 %v2400, %v2396
        %v2441 = vpack.c.b16 %v2401, %v2397
        %v2442 = vpack.c.b16 %v2402, %v2398
        %v2443 = vpack.c.b16 %v2403, %v2399
        %v2444 = vpack.c.b16 %v2408, %v2404
        %v2445 = vpack.c.b16 %v2409, %v2405
        %v2446 = vpack.c.b16 %v2410, %v2406
        %v2447 = vpack.c.b16 %v2411, %v2407
        %v2448 = vpack.c.b16 %v2416, %v2412
        %v2449 = vpack.c.b16 %v2417, %v2413
        %v2450 = vpack.c.b16 %v2418, %v2414
        %v2451 = vpack.c.b16 %v2419, %v2415
        %2484 = vmatprep.subr.bf16.mxu0 %v2421
        %2485 = vmatpush1.bf16.msra.mxu0 %v2420
        %2486 = vmatprep.subr.bf16.mxu0 %v2425
        %2487 = vmatpush1.bf16.msra.mxu0 %v2424
        %2488 = vmatprep.subr.bf16.mxu0 %v2429
        %2489 = vmatpush1.bf16.msra.mxu0 %v2428
        %2490 = vmatprep.subr.bf16.mxu0 %v2433
        %2491 = vmatpush1.bf16.msra.mxu0 %v2432
        %2492 = vmatprep.subr.bf16.mxu0 %v2437
        %2493 = vmatpush1.bf16.msra.mxu0 %v2436
        %2494 = vmatprep.subr.bf16.mxu0 %v2441
        %2495 = vmatpush1.bf16.msra.mxu0 %v2440
        %2496 = vmatprep.subr.bf16.mxu0 %v2445
        %2497 = vmatpush1.bf16.msra.mxu0 %v2444
        %2498 = vmatprep.subr.bf16.mxu0 %v2449
        %2499 = vmatpush1.bf16.msra.mxu0 %v2448
        %2500 = vmatprep.subr.bf16.mxu0 0
        %2501 = vmatpush1.bf16.msra.mxu0 0
        %2502 = vmatprep.subr.bf16.mxu0 0
        %2503 = vmatpush1.bf16.msra.mxu0 0
        %2504 = vmatprep.subr.bf16.mxu0 0
        %2505 = vmatpush1.bf16.msra.mxu0 0
        %2506 = vmatprep.subr.bf16.mxu0 0
        %2507 = vmatpush1.bf16.msra.mxu0 0
        %2508 = vmatprep.subr.bf16.mxu0 0
        %2509 = vmatpush1.bf16.msra.mxu0 0
        %2510 = vmatprep.subr.bf16.mxu0 0
        %2511 = vmatpush1.bf16.msra.mxu0 0
        %2512 = vmatprep.subr.bf16.mxu0 0
        %2513 = vmatpush1.bf16.msra.mxu0 0
        %2514 = vmatprep.subr.bf16.mxu0 0
        %2515 = vmatpush1.bf16.msra.mxu0 0
        %2516 = vmatprep.mubr.bf16.mxu0 0
        %2517 = vmatmul.mubr.bf16.gmra.mrb[0].mxu0 %v2290
        %v2518 = vpop.f32.mrb[0].mxu0
        %v2519 = vadd.f32 0.0, %v2518
        %v2520 = vpop.f32.mrb[0].mxu0
        %v2521 = vadd.f32 0.0, %v2520
        %v2522 = vpop.f32.mrb[0].mxu0
        %v2523 = vpop.f32.mrb[0].mxu0
        %2524 = vdwg.mxu0
        %2525 = vmatprep.subr.bf16.mxu0 %v2423
        %2526 = vmatpush1.bf16.msra.mxu0 %v2422
        %2527 = vmatprep.subr.bf16.mxu0 %v2427
        %2528 = vmatpush1.bf16.msra.mxu0 %v2426
        %2529 = vmatprep.subr.bf16.mxu0 %v2431
        %2530 = vmatpush1.bf16.msra.mxu0 %v2430
        %2531 = vmatprep.subr.bf16.mxu0 %v2435
        %2532 = vmatpush1.bf16.msra.mxu0 %v2434
        %2533 = vmatprep.subr.bf16.mxu0 %v2439
        %2534 = vmatpush1.bf16.msra.mxu0 %v2438
        %2535 = vmatprep.subr.bf16.mxu0 %v2443
        %2536 = vmatpush1.bf16.msra.mxu0 %v2442
        %2537 = vmatprep.subr.bf16.mxu0 %v2447
        %2538 = vmatpush1.bf16.msra.mxu0 %v2446
        %2539 = vmatprep.subr.bf16.mxu0 %v2451
        %2540 = vmatpush1.bf16.msra.mxu0 %v2450
        %2541 = vmatprep.subr.bf16.mxu0 0
        %2542 = vmatpush1.bf16.msra.mxu0 0
        %2543 = vmatprep.subr.bf16.mxu0 0
        %2544 = vmatpush1.bf16.msra.mxu0 0
        %2545 = vmatprep.subr.bf16.mxu0 0
        %2546 = vmatpush1.bf16.msra.mxu0 0
        %2547 = vmatprep.subr.bf16.mxu0 0
        %2548 = vmatpush1.bf16.msra.mxu0 0
        %2549 = vmatprep.subr.bf16.mxu0 0
        %2550 = vmatpush1.bf16.msra.mxu0 0
        %2551 = vmatprep.subr.bf16.mxu0 0
        %2552 = vmatpush1.bf16.msra.mxu0 0
        %2553 = vmatprep.subr.bf16.mxu0 0
        %2554 = vmatpush1.bf16.msra.mxu0 0
        %2555 = vmatprep.subr.bf16.mxu0 0
        %2556 = vmatpush1.bf16.msra.mxu0 0
        %2557 = vmatprep.mubr.bf16.mxu0 0
        %2558 = vmatmul.mubr.bf16.gmra.mrb[0].mxu0 %v2290
        %v2559 = vpop.f32.mrb[0].mxu0
        %v2560 = vadd.f32 0.0, %v2559
        %v2561 = vpop.f32.mrb[0].mxu0
        %v2562 = vadd.f32 0.0, %v2561
        %v2563 = vpop.f32.mrb[0].mxu0
        %v2564 = vpop.f32.mrb[0].mxu0
        %2565 = vdwg.mxu0
        %v2566 = vadd.f32 %v2286, %v2519
        %v2567 = vadd.f32 %v2287, %v2521
        %v2568 = vadd.f32 %v2288, %v2560
        %v2569 = vadd.f32 %v2289, %v2562
        %v2570 = vxor.u32 %v2566, 2147483648
        %v2571 = vmul.f32 %v2570, 1.442695
        %v2572 = vpow.pop %v2571
        %v2573 = vadd.f32 %v2572, 1.0
        %v2574 = vrcp.pop %v2573
        %v2575 = vmul.f32 1.0, %v2574
        %v2576 = vxor.u32 %v2567, 2147483648
        %v2577 = vmul.f32 %v2576, 1.442695
        %v2578 = vpow.pop %v2577
        %v2579 = vadd.f32 %v2578, 1.0
        %v2580 = vrcp.pop %v2579
        %v2581 = vmul.f32 1.0, %v2580
        %v2582 = vtanh.pop %v2568
        %v2583 = vxor.u32 %v2569, 2147483648
        %v2584 = vmul.f32 %v2583, 1.442695
        %v2585 = vpow.pop %v2584
        %v2586 = vadd.f32 %v2585, 1.0
        %v2587 = vrcp.pop %v2586
        %v2588 = vmul.f32 1.0, %v2587
        %s2589 = scalar_lea.vmem [#allocation5], 8
        %v2590 = vld [vmem:[%s2589] sm:$0xff]
        %v2591 = vmul.f32 %v2581, %v2590
        %v2592 = vmul.f32 %v2575, %v2582
        %v2593 = vadd.f32 %v2591, %v2592
        %v2594 = vtanh.pop %v2593
        %v2595 = vmul.f32 %v2588, %v2594
        %2596 = vst [vmem:[%s2589] sm:$0xff] %v2593
        %2597 = vst [vmem:[%s2284] sm:$0xff] %v2595
        %v2598 = vld [vmem:[%s2284] sm:$0xff]
        %v2599 = vld [vmem:[%s1001] sm:$0xff]
        %v2600 = vld [vmem:[%s1001 + $0x8] sm:$0xff]
        %v2601 = vld [vmem:[%s1001 + $0x10] sm:$0xff]
        %v2602 = vld [vmem:[%s1001 + $0x18] sm:$0xff]
        %v2603 = vpack.c.bf16 %v2598, %v2598
        %v2604 = vld [vmem:[%s2291] sm:$0xff]
        %v2605 = vld [vmem:[%s2291 + $0x8] sm:$0xff]
        %v2606 = vld [vmem:[%s2291 + $0x10] sm:$0xff]
        %v2607 = vld [vmem:[%s2291 + $0x18] sm:$0xff]
        %v2608 = vld [vmem:[%s2291 + $0x20] sm:$0xff]
        %v2609 = vld [vmem:[%s2291 + $0x28] sm:$0xff]
        %v2610 = vld [vmem:[%s2291 + $0x30] sm:$0xff]
        %v2611 = vld [vmem:[%s2291 + $0x38] sm:$0xff]
        %v2612 = vld [vmem:[%s2291 + $0x40] sm:$0xff]
        %v2613 = vld [vmem:[%s2291 + $0x48] sm:$0xff]
        %v2614 = vld [vmem:[%s2291 + $0x50] sm:$0xff]
        %v2615 = vld [vmem:[%s2291 + $0x58] sm:$0xff]
        %v2616 = vld [vmem:[%s2291 + $0x60] sm:$0xff]
        %v2617 = vld [vmem:[%s2291 + $0x68] sm:$0xff]
        %v2618 = vld [vmem:[%s2291 + $0x70] sm:$0xff]
        %v2619 = vld [vmem:[%s2291 + $0x78] sm:$0xff]
        %v2620 = vld [vmem:[%s2291 + $0x80] sm:$0xff]
        %v2621 = vld [vmem:[%s2291 + $0x88] sm:$0xff]
        %v2622 = vld [vmem:[%s2291 + $0x90] sm:$0xff]
        %v2623 = vld [vmem:[%s2291 + $0x98] sm:$0xff]
        %v2624 = vld [vmem:[%s2291 + $0xa0] sm:$0xff]
        %v2625 = vld [vmem:[%s2291 + $0xa8] sm:$0xff]
        %v2626 = vld [vmem:[%s2291 + $0xb0] sm:$0xff]
        %v2627 = vld [vmem:[%s2291 + $0xb8] sm:$0xff]
        %v2628 = vld [vmem:[%s2291 + $0xc0] sm:$0xff]
        %v2629 = vld [vmem:[%s2291 + $0xc8] sm:$0xff]
        %v2630 = vld [vmem:[%s2291 + $0xd0] sm:$0xff]
        %v2631 = vld [vmem:[%s2291 + $0xd8] sm:$0xff]
        %v2632 = vld [vmem:[%s2291 + $0xe0] sm:$0xff]
        %v2633 = vld [vmem:[%s2291 + $0xe8] sm:$0xff]
        %v2634 = vld [vmem:[%s2291 + $0xf0] sm:$0xff]
        %v2635 = vld [vmem:[%s2291 + $0xf8] sm:$0xff]
        %v2668 = vunpack.c.l.b16 %v2604
        %v2669 = vunpack.c.h.b16 %v2604
        %v2670 = vunpack.c.l.b16 %v2605
        %v2671 = vunpack.c.h.b16 %v2605
        %v2672 = vunpack.c.l.b16 %v2606
        %v2673 = vunpack.c.h.b16 %v2606
        %v2674 = vunpack.c.l.b16 %v2607
        %v2675 = vunpack.c.h.b16 %v2607
        %v2676 = vunpack.c.l.b16 %v2608
        %v2677 = vunpack.c.h.b16 %v2608
        %v2678 = vunpack.c.l.b16 %v2609
        %v2679 = vunpack.c.h.b16 %v2609
        %v2680 = vunpack.c.l.b16 %v2610
        %v2681 = vunpack.c.h.b16 %v2610
        %v2682 = vunpack.c.l.b16 %v2611
        %v2683 = vunpack.c.h.b16 %v2611
        %v2684 = vunpack.c.l.b16 %v2612
        %v2685 = vunpack.c.h.b16 %v2612
        %v2686 = vunpack.c.l.b16 %v2613
        %v2687 = vunpack.c.h.b16 %v2613
        %v2688 = vunpack.c.l.b16 %v2614
        %v2689 = vunpack.c.h.b16 %v2614
        %v2690 = vunpack.c.l.b16 %v2615
        %v2691 = vunpack.c.h.b16 %v2615
        %v2692 = vunpack.c.l.b16 %v2616
        %v2693 = vunpack.c.h.b16 %v2616
        %v2694 = vunpack.c.l.b16 %v2617
        %v2695 = vunpack.c.h.b16 %v2617
        %v2696 = vunpack.c.l.b16 %v2618
        %v2697 = vunpack.c.h.b16 %v2618
        %v2698 = vunpack.c.l.b16 %v2619
        %v2699 = vunpack.c.h.b16 %v2619
        %v2700 = vunpack.c.l.b16 %v2620
        %v2701 = vunpack.c.h.b16 %v2620
        %v2702 = vunpack.c.l.b16 %v2621
        %v2703 = vunpack.c.h.b16 %v2621
        %v2704 = vunpack.c.l.b16 %v2622
        %v2705 = vunpack.c.h.b16 %v2622
        %v2706 = vunpack.c.l.b16 %v2623
        %v2707 = vunpack.c.h.b16 %v2623
        %v2708 = vunpack.c.l.b16 %v2624
        %v2709 = vunpack.c.h.b16 %v2624
        %v2710 = vunpack.c.l.b16 %v2625
        %v2711 = vunpack.c.h.b16 %v2625
        %v2712 = vunpack.c.l.b16 %v2626
        %v2713 = vunpack.c.h.b16 %v2626
        %v2714 = vunpack.c.l.b16 %v2627
        %v2715 = vunpack.c.h.b16 %v2627
        %v2716 = vunpack.c.l.b16 %v2628
        %v2717 = vunpack.c.h.b16 %v2628
        %v2718 = vunpack.c.l.b16 %v2629
        %v2719 = vunpack.c.h.b16 %v2629
        %v2720 = vunpack.c.l.b16 %v2630
        %v2721 = vunpack.c.h.b16 %v2630
        %v2722 = vunpack.c.l.b16 %v2631
        %v2723 = vunpack.c.h.b16 %v2631
        %v2724 = vunpack.c.l.b16 %v2632
        %v2725 = vunpack.c.h.b16 %v2632
        %v2726 = vunpack.c.l.b16 %v2633
        %v2727 = vunpack.c.h.b16 %v2633
        %v2728 = vunpack.c.l.b16 %v2634
        %v2729 = vunpack.c.h.b16 %v2634
        %v2730 = vunpack.c.l.b16 %v2635
        %v2731 = vunpack.c.h.b16 %v2635
        %v2732 = vpack.c.b16 %v2672, %v2668
        %v2733 = vpack.c.b16 %v2673, %v2669
        %v2734 = vpack.c.b16 %v2674, %v2670
        %v2735 = vpack.c.b16 %v2675, %v2671
        %v2736 = vpack.c.b16 %v2680, %v2676
        %v2737 = vpack.c.b16 %v2681, %v2677
        %v2738 = vpack.c.b16 %v2682, %v2678
        %v2739 = vpack.c.b16 %v2683, %v2679
        %v2740 = vpack.c.b16 %v2688, %v2684
        %v2741 = vpack.c.b16 %v2689, %v2685
        %v2742 = vpack.c.b16 %v2690, %v2686
        %v2743 = vpack.c.b16 %v2691, %v2687
        %v2744 = vpack.c.b16 %v2696, %v2692
        %v2745 = vpack.c.b16 %v2697, %v2693
        %v2746 = vpack.c.b16 %v2698, %v2694
        %v2747 = vpack.c.b16 %v2699, %v2695
        %v2748 = vpack.c.b16 %v2704, %v2700
        %v2749 = vpack.c.b16 %v2705, %v2701
        %v2750 = vpack.c.b16 %v2706, %v2702
        %v2751 = vpack.c.b16 %v2707, %v2703
        %v2752 = vpack.c.b16 %v2712, %v2708
        %v2753 = vpack.c.b16 %v2713, %v2709
        %v2754 = vpack.c.b16 %v2714, %v2710
        %v2755 = vpack.c.b16 %v2715, %v2711
        %v2756 = vpack.c.b16 %v2720, %v2716
        %v2757 = vpack.c.b16 %v2721, %v2717
        %v2758 = vpack.c.b16 %v2722, %v2718
        %v2759 = vpack.c.b16 %v2723, %v2719
        %v2760 = vpack.c.b16 %v2728, %v2724
        %v2761 = vpack.c.b16 %v2729, %v2725
        %v2762 = vpack.c.b16 %v2730, %v2726
        %v2763 = vpack.c.b16 %v2731, %v2727
        %2796 = vmatprep.subr.bf16.mxu0 %v2733
        %2797 = vmatpush1.bf16.msra.mxu0 %v2732
        %2798 = vmatprep.subr.bf16.mxu0 %v2737
        %2799 = vmatpush1.bf16.msra.mxu0 %v2736
        %2800 = vmatprep.subr.bf16.mxu0 %v2741
        %2801 = vmatpush1.bf16.msra.mxu0 %v2740
        %2802 = vmatprep.subr.bf16.mxu0 %v2745
        %2803 = vmatpush1.bf16.msra.mxu0 %v2744
        %2804 = vmatprep.subr.bf16.mxu0 %v2749
        %2805 = vmatpush1.bf16.msra.mxu0 %v2748
        %2806 = vmatprep.subr.bf16.mxu0 %v2753
        %2807 = vmatpush1.bf16.msra.mxu0 %v2752
        %2808 = vmatprep.subr.bf16.mxu0 %v2757
        %2809 = vmatpush1.bf16.msra.mxu0 %v2756
        %2810 = vmatprep.subr.bf16.mxu0 %v2761
        %2811 = vmatpush1.bf16.msra.mxu0 %v2760
        %2812 = vmatprep.subr.bf16.mxu0 0
        %2813 = vmatpush1.bf16.msra.mxu0 0
        %2814 = vmatprep.subr.bf16.mxu0 0
        %2815 = vmatpush1.bf16.msra.mxu0 0
        %2816 = vmatprep.subr.bf16.mxu0 0
        %2817 = vmatpush1.bf16.msra.mxu0 0
        %2818 = vmatprep.subr.bf16.mxu0 0
        %2819 = vmatpush1.bf16.msra.mxu0 0
        %2820 = vmatprep.subr.bf16.mxu0 0
        %2821 = vmatpush1.bf16.msra.mxu0 0
        %2822 = vmatprep.subr.bf16.mxu0 0
        %2823 = vmatpush1.bf16.msra.mxu0 0
        %2824 = vmatprep.subr.bf16.mxu0 0
        %2825 = vmatpush1.bf16.msra.mxu0 0
        %2826 = vmatprep.subr.bf16.mxu0 0
        %2827 = vmatpush1.bf16.msra.mxu0 0
        %2828 = vmatprep.mubr.bf16.mxu0 0
        %2829 = vmatmul.mubr.bf16.gmra.mrb[0].mxu0 %v2603
        %v2830 = vpop.f32.mrb[0].mxu0
        %v2831 = vadd.f32 0.0, %v2830
        %v2832 = vpop.f32.mrb[0].mxu0
        %v2833 = vadd.f32 0.0, %v2832
        %v2834 = vpop.f32.mrb[0].mxu0
        %v2835 = vpop.f32.mrb[0].mxu0
        %2836 = vdwg.mxu0
        %2837 = vmatprep.subr.bf16.mxu0 %v2735
        %2838 = vmatpush1.bf16.msra.mxu0 %v2734
        %2839 = vmatprep.subr.bf16.mxu0 %v2739
        %2840 = vmatpush1.bf16.msra.mxu0 %v2738
        %2841 = vmatprep.subr.bf16.mxu0 %v2743
        %2842 = vmatpush1.bf16.msra.mxu0 %v2742
        %2843 = vmatprep.subr.bf16.mxu0 %v2747
        %2844 = vmatpush1.bf16.msra.mxu0 %v2746
        %2845 = vmatprep.subr.bf16.mxu0 %v2751
        %2846 = vmatpush1.bf16.msra.mxu0 %v2750
        %2847 = vmatprep.subr.bf16.mxu0 %v2755
        %2848 = vmatpush1.bf16.msra.mxu0 %v2754
        %2849 = vmatprep.subr.bf16.mxu0 %v2759
        %2850 = vmatpush1.bf16.msra.mxu0 %v2758
        %2851 = vmatprep.subr.bf16.mxu0 %v2763
        %2852 = vmatpush1.bf16.msra.mxu0 %v2762
        %2853 = vmatprep.subr.bf16.mxu0 0
        %2854 = vmatpush1.bf16.msra.mxu0 0
        %2855 = vmatprep.subr.bf16.mxu0 0
        %2856 = vmatpush1.bf16.msra.mxu0 0
        %2857 = vmatprep.subr.bf16.mxu0 0
        %2858 = vmatpush1.bf16.msra.mxu0 0
        %2859 = vmatprep.subr.bf16.mxu0 0
        %2860 = vmatpush1.bf16.msra.mxu0 0
        %2861 = vmatprep.subr.bf16.mxu0 0
        %2862 = vmatpush1.bf16.msra.mxu0 0
        %2863 = vmatprep.subr.bf16.mxu0 0
        %2864 = vmatpush1.bf16.msra.mxu0 0
        %2865 = vmatprep.subr.bf16.mxu0 0
        %2866 = vmatpush1.bf16.msra.mxu0 0
        %2867 = vmatprep.subr.bf16.mxu0 0
        %2868 = vmatpush1.bf16.msra.mxu0 0
        %2869 = vmatprep.mubr.bf16.mxu0 0
        %2870 = vmatmul.mubr.bf16.gmra.mrb[0].mxu0 %v2603
        %v2871 = vpop.f32.mrb[0].mxu0
        %v2872 = vadd.f32 0.0, %v2871
        %v2873 = vpop.f32.mrb[0].mxu0
        %v2874 = vadd.f32 0.0, %v2873
        %v2875 = vpop.f32.mrb[0].mxu0
        %v2876 = vpop.f32.mrb[0].mxu0
        %2877 = vdwg.mxu0
        %v2878 = vadd.f32 %v2599, %v2831
        %v2879 = vadd.f32 %v2600, %v2833
        %v2880 = vadd.f32 %v2601, %v2872
        %v2881 = vadd.f32 %v2602, %v2874
        %v2882 = vxor.u32 %v2878, 2147483648
        %v2883 = vmul.f32 %v2882, 1.442695
        %v2884 = vpow.pop %v2883
        %v2885 = vadd.f32 %v2884, 1.0
        %v2886 = vrcp.pop %v2885
        %v2887 = vmul.f32 1.0, %v2886
        %v2888 = vxor.u32 %v2879, 2147483648
        %v2889 = vmul.f32 %v2888, 1.442695
        %v2890 = vpow.pop %v2889
        %v2891 = vadd.f32 %v2890, 1.0
        %v2892 = vrcp.pop %v2891
        %v2893 = vmul.f32 1.0, %v2892
        %v2894 = vtanh.pop %v2880
        %v2895 = vxor.u32 %v2881, 2147483648
        %v2896 = vmul.f32 %v2895, 1.442695
        %v2897 = vpow.pop %v2896
        %v2898 = vadd.f32 %v2897, 1.0
        %v2899 = vrcp.pop %v2898
        %v2900 = vmul.f32 1.0, %v2899
        %v2901 = vld [vmem:[%s2589] sm:$0xff]
        %v2902 = vmul.f32 %v2893, %v2901
        %v2903 = vmul.f32 %v2887, %v2894
        %v2904 = vadd.f32 %v2902, %v2903
        %v2905 = vtanh.pop %v2904
        %v2906 = vmul.f32 %v2900, %v2905
        %2907 = vst [vmem:[%s2589] sm:$0xff] %v2904
        %2908 = vst [vmem:[%s2284] sm:$0xff] %v2906
        %v2909 = vld [vmem:[%s2284] sm:$0xff]
        %v2910 = vld [vmem:[%s1315] sm:$0xff]
        %v2911 = vld [vmem:[%s1315 + $0x8] sm:$0xff]
        %v2912 = vld [vmem:[%s1315 + $0x10] sm:$0xff]
        %v2913 = vld [vmem:[%s1315 + $0x18] sm:$0xff]
        %v2914 = vpack.c.bf16 %v2909, %v2909
        %v2915 = vld [vmem:[%s2291] sm:$0xff]
        %v2916 = vld [vmem:[%s2291 + $0x8] sm:$0xff]
        %v2917 = vld [vmem:[%s2291 + $0x10] sm:$0xff]
        %v2918 = vld [vmem:[%s2291 + $0x18] sm:$0xff]
        %v2919 = vld [vmem:[%s2291 + $0x20] sm:$0xff]
        %v2920 = vld [vmem:[%s2291 + $0x28] sm:$0xff]
        %v2921 = vld [vmem:[%s2291 + $0x30] sm:$0xff]
        %v2922 = vld [vmem:[%s2291 + $0x38] sm:$0xff]
        %v2923 = vld [vmem:[%s2291 + $0x40] sm:$0xff]
        %v2924 = vld [vmem:[%s2291 + $0x48] sm:$0xff]
        %v2925 = vld [vmem:[%s2291 + $0x50] sm:$0xff]
        %v2926 = vld [vmem:[%s2291 + $0x58] sm:$0xff]
        %v2927 = vld [vmem:[%s2291 + $0x60] sm:$0xff]
        %v2928 = vld [vmem:[%s2291 + $0x68] sm:$0xff]
        %v2929 = vld [vmem:[%s2291 + $0x70] sm:$0xff]
        %v2930 = vld [vmem:[%s2291 + $0x78] sm:$0xff]
        %v2931 = vld [vmem:[%s2291 + $0x80] sm:$0xff]
        %v2932 = vld [vmem:[%s2291 + $0x88] sm:$0xff]
        %v2933 = vld [vmem:[%s2291 + $0x90] sm:$0xff]
        %v2934 = vld [vmem:[%s2291 + $0x98] sm:$0xff]
        %v2935 = vld [vmem:[%s2291 + $0xa0] sm:$0xff]
        %v2936 = vld [vmem:[%s2291 + $0xa8] sm:$0xff]
        %v2937 = vld [vmem:[%s2291 + $0xb0] sm:$0xff]
        %v2938 = vld [vmem:[%s2291 + $0xb8] sm:$0xff]
        %v2939 = vld [vmem:[%s2291 + $0xc0] sm:$0xff]
        %v2940 = vld [vmem:[%s2291 + $0xc8] sm:$0xff]
        %v2941 = vld [vmem:[%s2291 + $0xd0] sm:$0xff]
        %v2942 = vld [vmem:[%s2291 + $0xd8] sm:$0xff]
        %v2943 = vld [vmem:[%s2291 + $0xe0] sm:$0xff]
        %v2944 = vld [vmem:[%s2291 + $0xe8] sm:$0xff]
        %v2945 = vld [vmem:[%s2291 + $0xf0] sm:$0xff]
        %v2946 = vld [vmem:[%s2291 + $0xf8] sm:$0xff]
        %v2979 = vunpack.c.l.b16 %v2915
        %v2980 = vunpack.c.h.b16 %v2915
        %v2981 = vunpack.c.l.b16 %v2916
        %v2982 = vunpack.c.h.b16 %v2916
        %v2983 = vunpack.c.l.b16 %v2917
        %v2984 = vunpack.c.h.b16 %v2917
        %v2985 = vunpack.c.l.b16 %v2918
        %v2986 = vunpack.c.h.b16 %v2918
        %v2987 = vunpack.c.l.b16 %v2919
        %v2988 = vunpack.c.h.b16 %v2919
        %v2989 = vunpack.c.l.b16 %v2920
        %v2990 = vunpack.c.h.b16 %v2920
        %v2991 = vunpack.c.l.b16 %v2921
        %v2992 = vunpack.c.h.b16 %v2921
        %v2993 = vunpack.c.l.b16 %v2922
        %v2994 = vunpack.c.h.b16 %v2922
        %v2995 = vunpack.c.l.b16 %v2923
        %v2996 = vunpack.c.h.b16 %v2923
        %v2997 = vunpack.c.l.b16 %v2924
        %v2998 = vunpack.c.h.b16 %v2924
        %v2999 = vunpack.c.l.b16 %v2925
        %v3000 = vunpack.c.h.b16 %v2925
        %v3001 = vunpack.c.l.b16 %v2926
        %v3002 = vunpack.c.h.b16 %v2926
        %v3003 = vunpack.c.l.b16 %v2927
        %v3004 = vunpack.c.h.b16 %v2927
        %v3005 = vunpack.c.l.b16 %v2928
        %v3006 = vunpack.c.h.b16 %v2928
        %v3007 = vunpack.c.l.b16 %v2929
        %v3008 = vunpack.c.h.b16 %v2929
        %v3009 = vunpack.c.l.b16 %v2930
        %v3010 = vunpack.c.h.b16 %v2930
        %v3011 = vunpack.c.l.b16 %v2931
        %v3012 = vunpack.c.h.b16 %v2931
        %v3013 = vunpack.c.l.b16 %v2932
        %v3014 = vunpack.c.h.b16 %v2932
        %v3015 = vunpack.c.l.b16 %v2933
        %v3016 = vunpack.c.h.b16 %v2933
        %v3017 = vunpack.c.l.b16 %v2934
        %v3018 = vunpack.c.h.b16 %v2934
        %v3019 = vunpack.c.l.b16 %v2935
        %v3020 = vunpack.c.h.b16 %v2935
        %v3021 = vunpack.c.l.b16 %v2936
        %v3022 = vunpack.c.h.b16 %v2936
        %v3023 = vunpack.c.l.b16 %v2937
        %v3024 = vunpack.c.h.b16 %v2937
        %v3025 = vunpack.c.l.b16 %v2938
        %v3026 = vunpack.c.h.b16 %v2938
        %v3027 = vunpack.c.l.b16 %v2939
        %v3028 = vunpack.c.h.b16 %v2939
        %v3029 = vunpack.c.l.b16 %v2940
        %v3030 = vunpack.c.h.b16 %v2940
        %v3031 = vunpack.c.l.b16 %v2941
        %v3032 = vunpack.c.h.b16 %v2941
        %v3033 = vunpack.c.l.b16 %v2942
        %v3034 = vunpack.c.h.b16 %v2942
        %v3035 = vunpack.c.l.b16 %v2943
        %v3036 = vunpack.c.h.b16 %v2943
        %v3037 = vunpack.c.l.b16 %v2944
        %v3038 = vunpack.c.h.b16 %v2944
        %v3039 = vunpack.c.l.b16 %v2945
        %v3040 = vunpack.c.h.b16 %v2945
        %v3041 = vunpack.c.l.b16 %v2946
        %v3042 = vunpack.c.h.b16 %v2946
        %v3043 = vpack.c.b16 %v2983, %v2979
        %v3044 = vpack.c.b16 %v2984, %v2980
        %v3045 = vpack.c.b16 %v2985, %v2981
        %v3046 = vpack.c.b16 %v2986, %v2982
        %v3047 = vpack.c.b16 %v2991, %v2987
        %v3048 = vpack.c.b16 %v2992, %v2988
        %v3049 = vpack.c.b16 %v2993, %v2989
        %v3050 = vpack.c.b16 %v2994, %v2990
        %v3051 = vpack.c.b16 %v2999, %v2995
        %v3052 = vpack.c.b16 %v3000, %v2996
        %v3053 = vpack.c.b16 %v3001, %v2997
        %v3054 = vpack.c.b16 %v3002, %v2998
        %v3055 = vpack.c.b16 %v3007, %v3003
        %v3056 = vpack.c.b16 %v3008, %v3004
        %v3057 = vpack.c.b16 %v3009, %v3005
        %v3058 = vpack.c.b16 %v3010, %v3006
        %v3059 = vpack.c.b16 %v3015, %v3011
        %v3060 = vpack.c.b16 %v3016, %v3012
        %v3061 = vpack.c.b16 %v3017, %v3013
        %v3062 = vpack.c.b16 %v3018, %v3014
        %v3063 = vpack.c.b16 %v3023, %v3019
        %v3064 = vpack.c.b16 %v3024, %v3020
        %v3065 = vpack.c.b16 %v3025, %v3021
        %v3066 = vpack.c.b16 %v3026, %v3022
        %v3067 = vpack.c.b16 %v3031, %v3027
        %v3068 = vpack.c.b16 %v3032, %v3028
        %v3069 = vpack.c.b16 %v3033, %v3029
        %v3070 = vpack.c.b16 %v3034, %v3030
        %v3071 = vpack.c.b16 %v3039, %v3035
        %v3072 = vpack.c.b16 %v3040, %v3036
        %v3073 = vpack.c.b16 %v3041, %v3037
        %v3074 = vpack.c.b16 %v3042, %v3038
        %3107 = vmatprep.subr.bf16.mxu0 %v3044
        %3108 = vmatpush1.bf16.msra.mxu0 %v3043
        %3109 = vmatprep.subr.bf16.mxu0 %v3048
        %3110 = vmatpush1.bf16.msra.mxu0 %v3047
        %3111 = vmatprep.subr.bf16.mxu0 %v3052
        %3112 = vmatpush1.bf16.msra.mxu0 %v3051
        %3113 = vmatprep.subr.bf16.mxu0 %v3056
        %3114 = vmatpush1.bf16.msra.mxu0 %v3055
        %3115 = vmatprep.subr.bf16.mxu0 %v3060
        %3116 = vmatpush1.bf16.msra.mxu0 %v3059
        %3117 = vmatprep.subr.bf16.mxu0 %v3064
        %3118 = vmatpush1.bf16.msra.mxu0 %v3063
        %3119 = vmatprep.subr.bf16.mxu0 %v3068
        %3120 = vmatpush1.bf16.msra.mxu0 %v3067
        %3121 = vmatprep.subr.bf16.mxu0 %v3072
        %3122 = vmatpush1.bf16.msra.mxu0 %v3071
        %3123 = vmatprep.subr.bf16.mxu0 0
        %3124 = vmatpush1.bf16.msra.mxu0 0
        %3125 = vmatprep.subr.bf16.mxu0 0
        %3126 = vmatpush1.bf16.msra.mxu0 0
        %3127 = vmatprep.subr.bf16.mxu0 0
        %3128 = vmatpush1.bf16.msra.mxu0 0
        %3129 = vmatprep.subr.bf16.mxu0 0
        %3130 = vmatpush1.bf16.msra.mxu0 0
        %3131 = vmatprep.subr.bf16.mxu0 0
        %3132 = vmatpush1.bf16.msra.mxu0 0
        %3133 = vmatprep.subr.bf16.mxu0 0
        %3134 = vmatpush1.bf16.msra.mxu0 0
        %3135 = vmatprep.subr.bf16.mxu0 0
        %3136 = vmatpush1.bf16.msra.mxu0 0
        %3137 = vmatprep.subr.bf16.mxu0 0
        %3138 = vmatpush1.bf16.msra.mxu0 0
        %3139 = vmatprep.mubr.bf16.mxu0 0
        %3140 = vmatmul.mubr.bf16.gmra.mrb[0].mxu0 %v2914
        %v3141 = vpop.f32.mrb[0].mxu0
        %v3142 = vadd.f32 0.0, %v3141
        %v3143 = vpop.f32.mrb[0].mxu0
        %v3144 = vadd.f32 0.0, %v3143
        %v3145 = vpop.f32.mrb[0].mxu0
        %v3146 = vpop.f32.mrb[0].mxu0
        %3147 = vdwg.mxu0
        %3148 = vmatprep.subr.bf16.mxu0 %v3046
        %3149 = vmatpush1.bf16.msra.mxu0 %v3045
        %3150 = vmatprep.subr.bf16.mxu0 %v3050
        %3151 = vmatpush1.bf16.msra.mxu0 %v3049
        %3152 = vmatprep.subr.bf16.mxu0 %v3054
        %3153 = vmatpush1.bf16.msra.mxu0 %v3053
        %3154 = vmatprep.subr.bf16.mxu0 %v3058
        %3155 = vmatpush1.bf16.msra.mxu0 %v3057
        %3156 = vmatprep.subr.bf16.mxu0 %v3062
        %3157 = vmatpush1.bf16.msra.mxu0 %v3061
        %3158 = vmatprep.subr.bf16.mxu0 %v3066
        %3159 = vmatpush1.bf16.msra.mxu0 %v3065
        %3160 = vmatprep.subr.bf16.mxu0 %v3070
        %3161 = vmatpush1.bf16.msra.mxu0 %v3069
        %3162 = vmatprep.subr.bf16.mxu0 %v3074
        %3163 = vmatpush1.bf16.msra.mxu0 %v3073
        %3164 = vmatprep.subr.bf16.mxu0 0
        %3165 = vmatpush1.bf16.msra.mxu0 0
        %3166 = vmatprep.subr.bf16.mxu0 0
        %3167 = vmatpush1.bf16.msra.mxu0 0
        %3168 = vmatprep.subr.bf16.mxu0 0
        %3169 = vmatpush1.bf16.msra.mxu0 0
        %3170 = vmatprep.subr.bf16.mxu0 0
        %3171 = vmatpush1.bf16.msra.mxu0 0
        %3172 = vmatprep.subr.bf16.mxu0 0
        %3173 = vmatpush1.bf16.msra.mxu0 0
        %3174 = vmatprep.subr.bf16.mxu0 0
        %3175 = vmatpush1.bf16.msra.mxu0 0
        %3176 = vmatprep.subr.bf16.mxu0 0
        %3177 = vmatpush1.bf16.msra.mxu0 0
        %3178 = vmatprep.subr.bf16.mxu0 0
        %3179 = vmatpush1.bf16.msra.mxu0 0
        %3180 = vmatprep.mubr.bf16.mxu0 0
        %3181 = vmatmul.mubr.bf16.gmra.mrb[0].mxu0 %v2914
        %v3182 = vpop.f32.mrb[0].mxu0
        %v3183 = vadd.f32 0.0, %v3182
        %v3184 = vpop.f32.mrb[0].mxu0
        %v3185 = vadd.f32 0.0, %v3184
        %v3186 = vpop.f32.mrb[0].mxu0
        %v3187 = vpop.f32.mrb[0].mxu0
        %3188 = vdwg.mxu0
        %v3189 = vadd.f32 %v2910, %v3142
        %v3190 = vadd.f32 %v2911, %v3144
        %v3191 = vadd.f32 %v2912, %v3183
        %v3192 = vadd.f32 %v2913, %v3185
        %v3193 = vxor.u32 %v3189, 2147483648
        %v3194 = vmul.f32 %v3193, 1.442695
        %v3195 = vpow.pop %v3194
        %v3196 = vadd.f32 %v3195, 1.0
        %v3197 = vrcp.pop %v3196
        %v3198 = vmul.f32 1.0, %v3197
        %v3199 = vxor.u32 %v3190, 2147483648
        %v3200 = vmul.f32 %v3199, 1.442695
        %v3201 = vpow.pop %v3200
        %v3202 = vadd.f32 %v3201, 1.0
        %v3203 = vrcp.pop %v3202
        %v3204 = vmul.f32 1.0, %v3203
        %v3205 = vtanh.pop %v3191
        %v3206 = vxor.u32 %v3192, 2147483648
        %v3207 = vmul.f32 %v3206, 1.442695
        %v3208 = vpow.pop %v3207
        %v3209 = vadd.f32 %v3208, 1.0
        %v3210 = vrcp.pop %v3209
        %v3211 = vmul.f32 1.0, %v3210
        %v3212 = vld [vmem:[%s2589] sm:$0xff]
        %v3213 = vmul.f32 %v3204, %v3212
        %v3214 = vmul.f32 %v3198, %v3205
        %v3215 = vadd.f32 %v3213, %v3214
        %v3216 = vtanh.pop %v3215
        %v3217 = vmul.f32 %v3211, %v3216
        %3218 = vst [vmem:[%s2589] sm:$0xff] %v3215
        %3219 = vst [vmem:[%s2284] sm:$0xff] %v3217
        %v3220 = vld [vmem:[%s2284] sm:$0xff]
        %v3221 = vld [vmem:[%s1629] sm:$0xff]
        %v3222 = vld [vmem:[%s1629 + $0x8] sm:$0xff]
        %v3223 = vld [vmem:[%s1629 + $0x10] sm:$0xff]
        %v3224 = vld [vmem:[%s1629 + $0x18] sm:$0xff]
        %v3225 = vpack.c.bf16 %v3220, %v3220
        %v3226 = vld [vmem:[%s2291] sm:$0xff]
        %v3227 = vld [vmem:[%s2291 + $0x8] sm:$0xff]
        %v3228 = vld [vmem:[%s2291 + $0x10] sm:$0xff]
        %v3229 = vld [vmem:[%s2291 + $0x18] sm:$0xff]
        %v3230 = vld [vmem:[%s2291 + $0x20] sm:$0xff]
        %v3231 = vld [vmem:[%s2291 + $0x28] sm:$0xff]
        %v3232 = vld [vmem:[%s2291 + $0x30] sm:$0xff]
        %v3233 = vld [vmem:[%s2291 + $0x38] sm:$0xff]
        %v3234 = vld [vmem:[%s2291 + $0x40] sm:$0xff]
        %v3235 = vld [vmem:[%s2291 + $0x48] sm:$0xff]
        %v3236 = vld [vmem:[%s2291 + $0x50] sm:$0xff]
        %v3237 = vld [vmem:[%s2291 + $0x58] sm:$0xff]
        %v3238 = vld [vmem:[%s2291 + $0x60] sm:$0xff]
        %v3239 = vld [vmem:[%s2291 + $0x68] sm:$0xff]
        %v3240 = vld [vmem:[%s2291 + $0x70] sm:$0xff]
        %v3241 = vld [vmem:[%s2291 + $0x78] sm:$0xff]
        %v3242 = vld [vmem:[%s2291 + $0x80] sm:$0xff]
        %v3243 = vld [vmem:[%s2291 + $0x88] sm:$0xff]
        %v3244 = vld [vmem:[%s2291 + $0x90] sm:$0xff]
        %v3245 = vld [vmem:[%s2291 + $0x98] sm:$0xff]
        %v3246 = vld [vmem:[%s2291 + $0xa0] sm:$0xff]
        %v3247 = vld [vmem:[%s2291 + $0xa8] sm:$0xff]
        %v3248 = vld [vmem:[%s2291 + $0xb0] sm:$0xff]
        %v3249 = vld [vmem:[%s2291 + $0xb8] sm:$0xff]
        %v3250 = vld [vmem:[%s2291 + $0xc0] sm:$0xff]
        %v3251 = vld [vmem:[%s2291 + $0xc8] sm:$0xff]
        %v3252 = vld [vmem:[%s2291 + $0xd0] sm:$0xff]
        %v3253 = vld [vmem:[%s2291 + $0xd8] sm:$0xff]
        %v3254 = vld [vmem:[%s2291 + $0xe0] sm:$0xff]
        %v3255 = vld [vmem:[%s2291 + $0xe8] sm:$0xff]
        %v3256 = vld [vmem:[%s2291 + $0xf0] sm:$0xff]
        %v3257 = vld [vmem:[%s2291 + $0xf8] sm:$0xff]
        %v3290 = vunpack.c.l.b16 %v3226
        %v3291 = vunpack.c.h.b16 %v3226
        %v3292 = vunpack.c.l.b16 %v3227
        %v3293 = vunpack.c.h.b16 %v3227
        %v3294 = vunpack.c.l.b16 %v3228
        %v3295 = vunpack.c.h.b16 %v3228
        %v3296 = vunpack.c.l.b16 %v3229
        %v3297 = vunpack.c.h.b16 %v3229
        %v3298 = vunpack.c.l.b16 %v3230
        %v3299 = vunpack.c.h.b16 %v3230
        %v3300 = vunpack.c.l.b16 %v3231
        %v3301 = vunpack.c.h.b16 %v3231
        %v3302 = vunpack.c.l.b16 %v3232
        %v3303 = vunpack.c.h.b16 %v3232
        %v3304 = vunpack.c.l.b16 %v3233
        %v3305 = vunpack.c.h.b16 %v3233
        %v3306 = vunpack.c.l.b16 %v3234
        %v3307 = vunpack.c.h.b16 %v3234
        %v3308 = vunpack.c.l.b16 %v3235
        %v3309 = vunpack.c.h.b16 %v3235
        %v3310 = vunpack.c.l.b16 %v3236
        %v3311 = vunpack.c.h.b16 %v3236
        %v3312 = vunpack.c.l.b16 %v3237
        %v3313 = vunpack.c.h.b16 %v3237
        %v3314 = vunpack.c.l.b16 %v3238
        %v3315 = vunpack.c.h.b16 %v3238
        %v3316 = vunpack.c.l.b16 %v3239
        %v3317 = vunpack.c.h.b16 %v3239
        %v3318 = vunpack.c.l.b16 %v3240
        %v3319 = vunpack.c.h.b16 %v3240
        %v3320 = vunpack.c.l.b16 %v3241
        %v3321 = vunpack.c.h.b16 %v3241
        %v3322 = vunpack.c.l.b16 %v3242
        %v3323 = vunpack.c.h.b16 %v3242
        %v3324 = vunpack.c.l.b16 %v3243
        %v3325 = vunpack.c.h.b16 %v3243
        %v3326 = vunpack.c.l.b16 %v3244
        %v3327 = vunpack.c.h.b16 %v3244
        %v3328 = vunpack.c.l.b16 %v3245
        %v3329 = vunpack.c.h.b16 %v3245
        %v3330 = vunpack.c.l.b16 %v3246
        %v3331 = vunpack.c.h.b16 %v3246
        %v3332 = vunpack.c.l.b16 %v3247
        %v3333 = vunpack.c.h.b16 %v3247
        %v3334 = vunpack.c.l.b16 %v3248
        %v3335 = vunpack.c.h.b16 %v3248
        %v3336 = vunpack.c.l.b16 %v3249
        %v3337 = vunpack.c.h.b16 %v3249
        %v3338 = vunpack.c.l.b16 %v3250
        %v3339 = vunpack.c.h.b16 %v3250
        %v3340 = vunpack.c.l.b16 %v3251
        %v3341 = vunpack.c.h.b16 %v3251
        %v3342 = vunpack.c.l.b16 %v3252
        %v3343 = vunpack.c.h.b16 %v3252
        %v3344 = vunpack.c.l.b16 %v3253
        %v3345 = vunpack.c.h.b16 %v3253
        %v3346 = vunpack.c.l.b16 %v3254
        %v3347 = vunpack.c.h.b16 %v3254
        %v3348 = vunpack.c.l.b16 %v3255
        %v3349 = vunpack.c.h.b16 %v3255
        %v3350 = vunpack.c.l.b16 %v3256
        %v3351 = vunpack.c.h.b16 %v3256
        %v3352 = vunpack.c.l.b16 %v3257
        %v3353 = vunpack.c.h.b16 %v3257
        %v3354 = vpack.c.b16 %v3294, %v3290
        %v3355 = vpack.c.b16 %v3295, %v3291
        %v3356 = vpack.c.b16 %v3296, %v3292
        %v3357 = vpack.c.b16 %v3297, %v3293
        %v3358 = vpack.c.b16 %v3302, %v3298
        %v3359 = vpack.c.b16 %v3303, %v3299
        %v3360 = vpack.c.b16 %v3304, %v3300
        %v3361 = vpack.c.b16 %v3305, %v3301
        %v3362 = vpack.c.b16 %v3310, %v3306
        %v3363 = vpack.c.b16 %v3311, %v3307
        %v3364 = vpack.c.b16 %v3312, %v3308
        %v3365 = vpack.c.b16 %v3313, %v3309
        %v3366 = vpack.c.b16 %v3318, %v3314
        %v3367 = vpack.c.b16 %v3319, %v3315
        %v3368 = vpack.c.b16 %v3320, %v3316
        %v3369 = vpack.c.b16 %v3321, %v3317
        %v3370 = vpack.c.b16 %v3326, %v3322
        %v3371 = vpack.c.b16 %v3327, %v3323
        %v3372 = vpack.c.b16 %v3328, %v3324
        %v3373 = vpack.c.b16 %v3329, %v3325
        %v3374 = vpack.c.b16 %v3334, %v3330
        %v3375 = vpack.c.b16 %v3335, %v3331
        %v3376 = vpack.c.b16 %v3336, %v3332
        %v3377 = vpack.c.b16 %v3337, %v3333
        %v3378 = vpack.c.b16 %v3342, %v3338
        %v3379 = vpack.c.b16 %v3343, %v3339
        %v3380 = vpack.c.b16 %v3344, %v3340
        %v3381 = vpack.c.b16 %v3345, %v3341
        %v3382 = vpack.c.b16 %v3350, %v3346
        %v3383 = vpack.c.b16 %v3351, %v3347
        %v3384 = vpack.c.b16 %v3352, %v3348
        %v3385 = vpack.c.b16 %v3353, %v3349
        %3418 = vmatprep.subr.bf16.mxu0 %v3355
        %3419 = vmatpush1.bf16.msra.mxu0 %v3354
        %3420 = vmatprep.subr.bf16.mxu0 %v3359
        %3421 = vmatpush1.bf16.msra.mxu0 %v3358
        %3422 = vmatprep.subr.bf16.mxu0 %v3363
        %3423 = vmatpush1.bf16.msra.mxu0 %v3362
        %3424 = vmatprep.subr.bf16.mxu0 %v3367
        %3425 = vmatpush1.bf16.msra.mxu0 %v3366
        %3426 = vmatprep.subr.bf16.mxu0 %v3371
        %3427 = vmatpush1.bf16.msra.mxu0 %v3370
        %3428 = vmatprep.subr.bf16.mxu0 %v3375
        %3429 = vmatpush1.bf16.msra.mxu0 %v3374
        %3430 = vmatprep.subr.bf16.mxu0 %v3379
        %3431 = vmatpush1.bf16.msra.mxu0 %v3378
        %3432 = vmatprep.subr.bf16.mxu0 %v3383
        %3433 = vmatpush1.bf16.msra.mxu0 %v3382
        %3434 = vmatprep.subr.bf16.mxu0 0
        %3435 = vmatpush1.bf16.msra.mxu0 0
        %3436 = vmatprep.subr.bf16.mxu0 0
        %3437 = vmatpush1.bf16.msra.mxu0 0
        %3438 = vmatprep.subr.bf16.mxu0 0
        %3439 = vmatpush1.bf16.msra.mxu0 0
        %3440 = vmatprep.subr.bf16.mxu0 0
        %3441 = vmatpush1.bf16.msra.mxu0 0
        %3442 = vmatprep.subr.bf16.mxu0 0
        %3443 = vmatpush1.bf16.msra.mxu0 0
        %3444 = vmatprep.subr.bf16.mxu0 0
        %3445 = vmatpush1.bf16.msra.mxu0 0
        %3446 = vmatprep.subr.bf16.mxu0 0
        %3447 = vmatpush1.bf16.msra.mxu0 0
        %3448 = vmatprep.subr.bf16.mxu0 0
        %3449 = vmatpush1.bf16.msra.mxu0 0
        %3450 = vmatprep.mubr.bf16.mxu0 0
        %3451 = vmatmul.mubr.bf16.gmra.mrb[0].mxu0 %v3225
        %v3452 = vpop.f32.mrb[0].mxu0
        %v3453 = vadd.f32 0.0, %v3452
        %v3454 = vpop.f32.mrb[0].mxu0
        %v3455 = vadd.f32 0.0, %v3454
        %v3456 = vpop.f32.mrb[0].mxu0
        %v3457 = vpop.f32.mrb[0].mxu0
        %3458 = vdwg.mxu0
        %3459 = vmatprep.subr.bf16.mxu0 %v3357
        %3460 = vmatpush1.bf16.msra.mxu0 %v3356
        %3461 = vmatprep.subr.bf16.mxu0 %v3361
        %3462 = vmatpush1.bf16.msra.mxu0 %v3360
        %3463 = vmatprep.subr.bf16.mxu0 %v3365
        %3464 = vmatpush1.bf16.msra.mxu0 %v3364
        %3465 = vmatprep.subr.bf16.mxu0 %v3369
        %3466 = vmatpush1.bf16.msra.mxu0 %v3368
        %3467 = vmatprep.subr.bf16.mxu0 %v3373
        %3468 = vmatpush1.bf16.msra.mxu0 %v3372
        %3469 = vmatprep.subr.bf16.mxu0 %v3377
        %3470 = vmatpush1.bf16.msra.mxu0 %v3376
        %3471 = vmatprep.subr.bf16.mxu0 %v3381
        %3472 = vmatpush1.bf16.msra.mxu0 %v3380
        %3473 = vmatprep.subr.bf16.mxu0 %v3385
        %3474 = vmatpush1.bf16.msra.mxu0 %v3384
        %3475 = vmatprep.subr.bf16.mxu0 0
        %3476 = vmatpush1.bf16.msra.mxu0 0
        %3477 = vmatprep.subr.bf16.mxu0 0
        %3478 = vmatpush1.bf16.msra.mxu0 0
        %3479 = vmatprep.subr.bf16.mxu0 0
        %3480 = vmatpush1.bf16.msra.mxu0 0
        %3481 = vmatprep.subr.bf16.mxu0 0
        %3482 = vmatpush1.bf16.msra.mxu0 0
        %3483 = vmatprep.subr.bf16.mxu0 0
        %3484 = vmatpush1.bf16.msra.mxu0 0
        %3485 = vmatprep.subr.bf16.mxu0 0
        %3486 = vmatpush1.bf16.msra.mxu0 0
        %3487 = vmatprep.subr.bf16.mxu0 0
        %3488 = vmatpush1.bf16.msra.mxu0 0
        %3489 = vmatprep.subr.bf16.mxu0 0
        %3490 = vmatpush1.bf16.msra.mxu0 0
        %3491 = vmatprep.mubr.bf16.mxu0 0
        %3492 = vmatmul.mubr.bf16.gmra.mrb[0].mxu0 %v3225
        %v3493 = vpop.f32.mrb[0].mxu0
        %v3494 = vadd.f32 0.0, %v3493
        %v3495 = vpop.f32.mrb[0].mxu0
        %v3496 = vadd.f32 0.0, %v3495
        %v3497 = vpop.f32.mrb[0].mxu0
        %v3498 = vpop.f32.mrb[0].mxu0
        %3499 = vdwg.mxu0
        %v3500 = vadd.f32 %v3221, %v3453
        %v3501 = vadd.f32 %v3222, %v3455
        %v3502 = vadd.f32 %v3223, %v3494
        %v3503 = vadd.f32 %v3224, %v3496
        %v3504 = vxor.u32 %v3500, 2147483648
        %v3505 = vmul.f32 %v3504, 1.442695
        %v3506 = vpow.pop %v3505
        %v3507 = vadd.f32 %v3506, 1.0
        %v3508 = vrcp.pop %v3507
        %v3509 = vmul.f32 1.0, %v3508
        %v3510 = vxor.u32 %v3501, 2147483648
        %v3511 = vmul.f32 %v3510, 1.442695
        %v3512 = vpow.pop %v3511
        %v3513 = vadd.f32 %v3512, 1.0
        %v3514 = vrcp.pop %v3513
        %v3515 = vmul.f32 1.0, %v3514
        %v3516 = vtanh.pop %v3502
        %v3517 = vxor.u32 %v3503, 2147483648
        %v3518 = vmul.f32 %v3517, 1.442695
        %v3519 = vpow.pop %v3518
        %v3520 = vadd.f32 %v3519, 1.0
        %v3521 = vrcp.pop %v3520
        %v3522 = vmul.f32 1.0, %v3521
        %v3523 = vld [vmem:[%s2589] sm:$0xff]
        %v3524 = vmul.f32 %v3515, %v3523
        %v3525 = vmul.f32 %v3509, %v3516
        %v3526 = vadd.f32 %v3524, %v3525
        %v3527 = vtanh.pop %v3526
        %v3528 = vmul.f32 %v3522, %v3527
        %3529 = vst [vmem:[%s2589] sm:$0xff] %v3526
        %3530 = vst [vmem:[%s2284] sm:$0xff] %v3528
        %p3531 = scmp.eq.s32.totalorder %s21, 1
        // Predicated region
        $region69: #{lstm_forward.1} parent=51 // pred_check
          %p3532 = pneg %p3531
        $region70: #{lstm_forward.1} parent=51 // pred_check_branch
          %3534 = sbr.rel (%p3532) target = $region72
        $region71: #{lstm_forward.1} parent=51 // pred_region
          %v3535 = vld [vmem:[%s2284] sm:$0xff]
          %v3536 = vpack.c.bf16 %v3535, %v3535
          %v3537 = vld [vmem:[%s6] sm:$0xf]
          %v3538 = vld [vmem:[%s6 + $0x4] sm:$0xf]
          %v3539 = vld [vmem:[%s6 + $0x8] sm:$0xf]
          %v3540 = vld [vmem:[%s6 + $0xc] sm:$0xf]
          %v3541 = vld [vmem:[%s6 + $0x10] sm:$0xf]
          %v3542 = vld [vmem:[%s6 + $0x14] sm:$0xf]
          %v3543 = vld [vmem:[%s6 + $0x18] sm:$0xf]
          %v3544 = vld [vmem:[%s6 + $0x1c] sm:$0xf]
          %v3545 = vld [vmem:[%s6 + $0x20] sm:$0xf]
          %v3546 = vld [vmem:[%s6 + $0x24] sm:$0xf]
          %v3547 = vld [vmem:[%s6 + $0x28] sm:$0xf]
          %v3548 = vld [vmem:[%s6 + $0x2c] sm:$0xf]
          %v3549 = vld [vmem:[%s6 + $0x30] sm:$0xf]
          %v3550 = vld [vmem:[%s6 + $0x34] sm:$0xf]
          %v3551 = vld [vmem:[%s6 + $0x38] sm:$0xf]
          %v3552 = vld [vmem:[%s6 + $0x3c] sm:$0xf]
          %v3553 = vld [vmem:[%s7] sm:$0x1]
          %v3555 = vlaneseq
          %v3556 = vshrl.u32 %v3555, 7
          %v3557 = vsub.s32 0, %v3556
          %v3558 = vrot.slane %v3553, %v3557
          %v3576 = vunpack.c.l.b16 %v3537
          %v3577 = vunpack.c.l.b16 %v3538
          %v3578 = vunpack.c.l.b16 %v3539
          %v3579 = vunpack.c.l.b16 %v3540
          %v3580 = vunpack.c.l.b16 %v3541
          %v3581 = vunpack.c.l.b16 %v3542
          %v3582 = vunpack.c.l.b16 %v3543
          %v3583 = vunpack.c.l.b16 %v3544
          %v3584 = vunpack.c.l.b16 %v3545
          %v3585 = vunpack.c.l.b16 %v3546
          %v3586 = vunpack.c.l.b16 %v3547
          %v3587 = vunpack.c.l.b16 %v3548
          %v3588 = vunpack.c.l.b16 %v3549
          %v3589 = vunpack.c.l.b16 %v3550
          %v3590 = vunpack.c.l.b16 %v3551
          %v3591 = vunpack.c.l.b16 %v3552
          %v3592 = vpack.c.b16 %v3577, %v3576
          %v3593 = vpack.c.b16 %v3579, %v3578
          %v3594 = vpack.c.b16 %v3581, %v3580
          %v3595 = vpack.c.b16 %v3583, %v3582
          %v3596 = vpack.c.b16 %v3585, %v3584
          %v3597 = vpack.c.b16 %v3587, %v3586
          %v3598 = vpack.c.b16 %v3589, %v3588
          %v3599 = vpack.c.b16 %v3591, %v3590
          %3608 = vmatprep.subr.bf16.mxu0 0
          %3609 = vmatpush1.bf16.msra.mxu0 %v3592
          %3610 = vmatprep.subr.bf16.mxu0 0
          %3611 = vmatpush1.bf16.msra.mxu0 %v3593
          %3612 = vmatprep.subr.bf16.mxu0 0
          %3613 = vmatpush1.bf16.msra.mxu0 %v3594
          %3614 = vmatprep.subr.bf16.mxu0 0
          %3615 = vmatpush1.bf16.msra.mxu0 %v3595
          %3616 = vmatprep.subr.bf16.mxu0 0
          %3617 = vmatpush1.bf16.msra.mxu0 %v3596
          %3618 = vmatprep.subr.bf16.mxu0 0
          %3619 = vmatpush1.bf16.msra.mxu0 %v3597
          %3620 = vmatprep.subr.bf16.mxu0 0
          %3621 = vmatpush1.bf16.msra.mxu0 %v3598
          %3622 = vmatprep.subr.bf16.mxu0 0
          %3623 = vmatpush1.bf16.msra.mxu0 %v3599
          %3624 = vmatprep.subr.bf16.mxu0 0
          %3625 = vmatpush1.bf16.msra.mxu0 0
          %3626 = vmatprep.subr.bf16.mxu0 0
          %3627 = vmatpush1.bf16.msra.mxu0 0
          %3628 = vmatprep.subr.bf16.mxu0 0
          %3629 = vmatpush1.bf16.msra.mxu0 0
          %3630 = vmatprep.subr.bf16.mxu0 0
          %3631 = vmatpush1.bf16.msra.mxu0 0
          %3632 = vmatprep.subr.bf16.mxu0 0
          %3633 = vmatpush1.bf16.msra.mxu0 0
          %3634 = vmatprep.subr.bf16.mxu0 0
          %3635 = vmatpush1.bf16.msra.mxu0 0
          %3636 = vmatprep.subr.bf16.mxu0 0
          %3637 = vmatpush1.bf16.msra.mxu0 0
          %3638 = vmatprep.subr.bf16.mxu0 0
          %3639 = vmatpush1.bf16.msra.mxu0 0
          %3640 = vmatprep.mubr.bf16.mxu0 0
          %3641 = vmatmul.mubr.bf16.gmra.mrb[0].mxu0 %v3536
          %v3642 = vpop.f32.mrb[0].mxu0
          %v3643 = vadd.f32 %v3558, %v3642
          %v3644 = vpop.f32.mrb[0].mxu0
          %v3645 = vpop.f32.mrb[0].mxu0
          %v3646 = vpop.f32.mrb[0].mxu0
          %3647 = vdwg.mxu0
          %3648 = vst [vmem:[%s8] sm:$0xff] %v3643
        $region72: #{lstm_forward.1} parent=51 // pred_fallthru
          _
        // Predicated region
        $region73: #{lstm_forward.1} parent=51 // pred_check
          %p3649 = pneg %p207
        $region74: #{lstm_forward.1} parent=51 // pred_check_branch
          %3651 = sbr.rel (%p3649) target = $region76
        $region75: #{lstm_forward.1} parent=51 // pred_region
          _
        $region76: #{lstm_forward.1} parent=51 // pred_fallthru
          _
        // Predicated region
        $region77: #{lstm_forward.1} parent=51 // pred_check
          %p3652 = pneg %p207
        $region78: #{lstm_forward.1} parent=51 // pred_check_branch
          %3654 = sbr.rel (%p3652) target = $region80
        $region79: #{lstm_forward.1} parent=51 // pred_region
          _
        $region80: #{lstm_forward.1} parent=51 // pred_fallthru
          _
      $region52: #{lstm_forward.1} parent=5 // pred_fallthru
        _
      %p3655 = scmp.le.s32.totalorder 2, %s16
      // Predicated region
      $region81: #{lstm_forward.1} parent=5 // pred_check
        %p3656 = pneg %p3655
      $region82: #{lstm_forward.1} parent=5 // pred_check_branch
        %3658 = sbr.rel (%p3656) target = $region84
      $region83: #{lstm_forward.1} parent=5 // pred_region
        %s3659 = ssub.s32 %s16, 2
      $region84: #{lstm_forward.1} parent=5 // pred_fallthru
        _
    $region6: #{lstm_forward.1} parent=1 // loop_footer
      %s20 = sadd.s32 1, %s16
    $region7: #{lstm_forward.1} parent=1 // loop_footer_branch
      %15 = sbr.rel target = $region3
    $region8: #{lstm_forward.1} parent=1 // loop_exit
      _
    %3660 = vsyncpa [#allocation7], 1
    %s3661 = scalar_lea.sflag [#allocation7], 1
    %3662 = vsyncpa %s3661, 1
    %3663 = vsyncpa [#allocation9], 1

</llo_original>
